<compile_context>
chip_gen: v5e
topology: v5e:2x2
jax: 0.10.0
libtpu: 0.0.40
codegen_flags: <defaults>
</compile_context>

<pallas_src>
import functools

import numpy as np
import jax
import jax.numpy as jnp
from jax.experimental import pallas as pl
from jax.experimental.pallas import tpu as pltpu

EPS = 1e-5


# --------------------------------------------------------------------------
# Fused SCR kernel: one grid step handles TN spatial positions of one batch.
# Everything inside is (channels, lanes): channels in sublanes, positions in lanes.
# --------------------------------------------------------------------------
def _scr_fused_kernel(x_ref, w1_ref, t1_ref, w2_ref, t2_ref, w3_ref, t3_ref,
                      w4_ref, t4_ref, o_ref, y1_scr, col_scr, *, u, v, ksize, tn):
    k = ksize
    f32, bf16 = jnp.float32, jnp.bfloat16
    uo1, vo1 = u - k + 1, v - k + 1          # conv1 output grid (k x k when u=v=2k-1)
    c1 = y1_scr.shape[0]

    # ---- layer 1: 1x1 conv + folded BN + ReLU as ONE matmul over all uv taps.
    # x_ref is (c0, uv*TN) with lane block p = tap p; single wide epilogue.
    acc1 = jnp.dot(w1_ref[...], x_ref[...], preferred_element_type=f32)   # (c1, uv*TN)
    y1_scr[...] = jnp.maximum(acc1 + t1_ref[...], 0.0).astype(bf16)

    # ---- conv1: (1,k,k) valid conv + BN + ReLU as ONE matmul, K=k*k*c1, N=uo1*vo1*TN.
    # Wide im2col slab built with k*k*uo1 (=27) lane-contiguous copies: for a fixed
    # kernel tap (di,dj) and output row oi, the vo1 needed input taps are consecutive
    # lane blocks of y1, so each copy moves a (c1, vo1*TN) slab.
    for di in range(k):
        for dj in range(k):
            r0 = (di * k + dj) * c1
            for oi in range(uo1):
                p0 = (oi + di) * v + dj                      # first source tap
                col_scr[r0:r0 + c1, oi * vo1 * tn:(oi * vo1 + vo1) * tn] = \
                    y1_scr[:, p0 * tn:(p0 + vo1) * tn]
    acc2 = jnp.dot(w2_ref[...], col_scr[...], preferred_element_type=f32)  # (c2, uo1*vo1*TN)
    y2 = jnp.maximum(acc2 + t2_ref[...], 0.0).astype(bf16)

    # ---- conv2: output grid is 1x1 (u=v=2k-1, so uo1=vo1=k) -> single K=k*k*c2 matmul.
    # Lane block q of y2 is conv1 output position q = oi*vo1+oj, which (vo1==k) is
    # exactly conv2's tap index, matching w3's tap-major/channel-minor rows.
    col2 = jnp.concatenate([y2[:, q * tn:(q + 1) * tn] for q in range(uo1 * vo1)],
                           axis=0)                                         # (k*k*c2, TN)
    acc3 = jnp.dot(w3_ref[...], col2, preferred_element_type=f32)          # (c3, TN)
    y3 = jnp.maximum(acc3 + t3_ref[...], 0.0).astype(bf16)

    # ---- layer 4: 1x1 conv + folded BN (no ReLU), lane-dense f32 store.
    y4 = jnp.dot(w4_ref[...], y3, preferred_element_type=f32) + t4_ref[...]  # (c4, TN)
    o_ref[...] = y4.astype(o_ref.dtype)


def _pick_tile(hw, b, bytes_per_pos, budget=24 << 20, min_parallel=2):
    """Largest 128-multiple divisor of hw whose per-step VMEM footprint fits `budget`.

    Only splits hw further when the batch dimension alone cannot provide
    `min_parallel` grid points (so both v7x TensorCores get work); on single-TC
    chips the extra step is one ~0.35us fixed cost at most.
    """
    cap = max(1, budget // max(1, bytes_per_pos))
    cands = [t for t in range(128, hw + 1, 128) if hw % t == 0 and t <= cap]
    if not cands:
        # No lane-dense divisor available: fall back to the full extent
        # (masked lane stores -- perf cliff, not a correctness issue).
        return hw
    tn = max(cands)
    if b * (hw // tn) < min_parallel:
        split = [t for t in cands if b * (hw // t) >= min_parallel]
        if split:
            tn = max(split)
    return tn


def scr_forward(x, kp, *, ksize=3):
    b, c0, h, w_, u, v = x.shape
    k = ksize
    # The module's trailing view(b, c, h, w) requires two valid (1,k,k) convs to
    # reduce (u, v) -> (1, 1); stride 1, no padding (PyTorch defaults).
    assert u == v == 2 * (k - 1) + 1, "SCR requires u = v = 2*(ksize-1)+1"
    hw, uv = h * w_, u * v
    uo1, vo1 = u - k + 1, v - k + 1
    c1 = kp["w1"].shape[0]
    c2 = kp["w2"].shape[0]
    c3 = kp["w3"].shape[0]
    c4 = kp["w4"].shape[0]

    # Generation-safe per-step VMEM estimate (bytes per lane of TN):
    #   double-buffered x block + double-buffered out block + y1 scratch & f32 temp
    #   + im2col scratch + y2 bf16 & conv1 f32 accumulator.
    bytes_per_pos = (2 * uv * c0 * 2 + 2 * c4 * 4 + uv * c1 * (2 + 4)
                     + uo1 * vo1 * k * k * c1 * 2 + uo1 * vo1 * c2 * (2 + 4))
    tn = _pick_tile(hw, b, bytes_per_pos)
    n_tiles = hw // tn

    # Single layout pass (fused with the bf16 cast under jit):
    # (b,c0,h,w,u,v) -> (b, n_tiles, c0, uv*tn) so each grid step's x block is the
    # ready-to-matmul (c0, uv*TN) operand (taps in lane blocks), DMA'd contiguously.
    xt = x.reshape(b, c0, n_tiles, tn, u, v)
    xt = jnp.transpose(xt, (0, 2, 1, 4, 5, 3)).reshape(b, n_tiles, c0, uv * tn)
    xt = xt.astype(jnp.bfloat16)

    kernel = functools.partial(_scr_fused_kernel, u=u, v=v, ksize=k, tn=tn)

    flops = 2 * b * hw * (uv * c1 * c0 + uo1 * vo1 * (k * k * c1) * c2
                          + (k * k * c2) * c3 + c3 * c4)
    weight_bytes = sum(int(np.prod(kp[n].shape)) * kp[n].dtype.itemsize
                       for n in ("w1", "t1", "w2", "t2", "w3", "t3", "w4", "t4"))
    bytes_accessed = int(b * c0 * uv * hw * 2 + b * c4 * hw * 4 + weight_bytes)

    out = pl.pallas_call(
        kernel,
        out_shape=jax.ShapeDtypeStruct((b, c4, hw), jnp.float32),
        grid=(b, n_tiles),
        in_specs=[
            pl.BlockSpec((None, None, c0, uv * tn), lambda bi, ti: (bi, ti, 0, 0)),
            pl.BlockSpec((c1, c0), lambda bi, ti: (0, 0)),
            pl.BlockSpec((c1, 1), lambda bi, ti: (0, 0)),
            pl.BlockSpec((c2, k * k * c1), lambda bi, ti: (0, 0)),
            pl.BlockSpec((c2, 1), lambda bi, ti: (0, 0)),
            pl.BlockSpec((c3, k * k * c2), lambda bi, ti: (0, 0)),
            pl.BlockSpec((c3, 1), lambda bi, ti: (0, 0)),
            pl.BlockSpec((c4, c3), lambda bi, ti: (0, 0)),
            pl.BlockSpec((c4, 1), lambda bi, ti: (0, 0)),
        ],
        out_specs=pl.BlockSpec((None, c4, tn), lambda bi, ti: (bi, 0, ti)),
        scratch_shapes=[
            pltpu.VMEM((c1, uv * tn), jnp.bfloat16),                  # y1 staging
            pltpu.VMEM((k * k * c1, uo1 * vo1 * tn), jnp.bfloat16),   # conv1 im2col
        ],
        compiler_params=pltpu.CompilerParams(
            dimension_semantics=("parallel", "parallel"),
            vmem_limit_bytes=48 * 1024 * 1024),
        cost_estimate=pl.CostEstimate(flops=flops, transcendentals=0,
                                      bytes_accessed=bytes_accessed),
    )(xt, kp["w1"], kp["t1"], kp["w2"], kp["t2"],
      kp["w3"], kp["t3"], kp["w4"], kp["t4"])

    return out.reshape(b, c4, h, w_)   # NCHW, no transpose needed


# --------------------------------------------------------------------------
# Parameter construction (PyTorch-layout raw params) and kernel-layout prep
# --------------------------------------------------------------------------
def fold_bn(bn):
    gamma, beta, mean, var = bn
    scale = gamma / jnp.sqrt(var + EPS)
    return scale, beta - mean * scale


def make_raw_params(key, planes, ksize):
    c0, c1, c2, c3, c4 = planes
    ks = jax.random.split(key, 20)

    def bn(k0, k1, k2, k3, c):
        gamma = 1.0 + 0.1 * jax.random.normal(k0, (c,), jnp.float32)
        beta = 0.1 * jax.random.normal(k1, (c,), jnp.float32)
        mean = 0.1 * jax.random.normal(k2, (c,), jnp.float32)
        var = jax.random.uniform(k3, (c,), jnp.float32, 0.5, 1.5)
        return (gamma, beta, mean, var)

    return {
        "w_in": 0.1 * jax.random.normal(ks[0], (c1, c0), jnp.float32),
        "bn_in": bn(ks[1], ks[2], ks[3], ks[4], c1),
        "w_c1": 0.1 * jax.random.normal(ks[5], (c2, c1, ksize, ksize), jnp.float32),
        "bn_c1": bn(ks[6], ks[7], ks[8], ks[9], c2),
        "w_c2": 0.1 * jax.random.normal(ks[10], (c3, c2, ksize, ksize), jnp.float32),
        "bn_c2": bn(ks[11], ks[12], ks[13], ks[14], c3),
        "w_out": 0.1 * jax.random.normal(ks[15], (c4, c3), jnp.float32),
        "bn_out": bn(ks[16], ks[17], ks[18], ks[19], c4),
    }


def prep_kernel_params(raw):
    """Fold eval-mode BN scale into weights, flatten conv taps, cast to bf16."""
    s1, t1 = fold_bn(raw["bn_in"])
    s2, t2 = fold_bn(raw["bn_c1"])
    s3, t3 = fold_bn(raw["bn_c2"])
    s4, t4 = fold_bn(raw["bn_out"])

    w1 = (raw["w_in"] * s1[:, None]).astype(jnp.bfloat16)                  # (c1, c0)

    def conv_w(wraw, s):
        cout, cin, kh, kw = wraw.shape
        wf = (wraw * s[:, None, None, None]).astype(jnp.bfloat16)
        # rows of the im2col matrix are (tap-major, channel-minor)
        return jnp.transpose(wf, (0, 2, 3, 1)).reshape(cout, kh * kw * cin)

    w2 = conv_w(raw["w_c1"], s2)                                           # (c2, k*k*c1)
    w3 = conv_w(raw["w_c2"], s3)                                           # (c3, k*k*c2)
    w4 = (raw["w_out"] * s4[:, None]).astype(jnp.bfloat16)                 # (c4, c3)

    return dict(w1=w1, t1=t1.reshape(-1, 1), w2=w2, t2=t2.reshape(-1, 1),
                w3=w3, t3=t3.reshape(-1, 1), w4=w4, t4=t4.reshape(-1, 1))


# --------------------------------------------------------------------------
# Pure-JAX reference (independent per-tap conv math, same bf16/f32 precision)
# --------------------------------------------------------------------------
def scr_reference(x, raw, *, ksize=3):
    f32, bf16 = jnp.float32, jnp.bfloat16
    s1, t1 = fold_bn(raw["bn_in"])
    s2, t2 = fold_bn(raw["bn_c1"])
    s3, t3 = fold_bn(raw["bn_c2"])
    s4, t4 = fold_bn(raw["bn_out"])

    xb = x.astype(bf16)
    w1b = (raw["w_in"] * s1[:, None]).astype(bf16)
    y = jnp.einsum("bchwuv,dc->bdhwuv", xb, w1b, preferred_element_type=f32)
    y = jnp.maximum(y + t1[None, :, None, None, None, None], 0.0).astype(bf16)

    def conv_uv(yin, wraw, scale, shift):
        cout, cin, kh, kw = wraw.shape
        wb = (wraw * scale[:, None, None, None]).astype(bf16)
        uo = yin.shape[4] - kh + 1
        vo = yin.shape[5] - kw + 1
        acc = jnp.zeros(yin.shape[:1] + (cout,) + yin.shape[2:4] + (uo, vo), f32)
        for di in range(kh):
            for dj in range(kw):
                acc = acc + jnp.einsum(
                    "bchwuv,dc->bdhwuv",
                    yin[:, :, :, :, di:di + uo, dj:dj + vo],
                    wb[:, :, di, dj],
                    preferred_element_type=f32)
        return jnp.maximum(acc + shift[None, :, None, None, None, None], 0.0).astype(bf16)

    y = conv_uv(y, raw["w_c1"], s2, t2)
    y = conv_uv(y, raw["w_c2"], s3, t3)
    y = y[:, :, :, :, 0, 0]                     # (u, v) -> (1, 1), view(b, c, h, w)
    w4b = (raw["w_out"] * s4[:, None]).astype(bf16)
    y = jnp.einsum("bchw,dc->bdhw", y, w4b, preferred_element_type=f32)
    return y + t4[None, :, None, None]


if __name__ == "__main__":
    # Small shapes consistent with SCR: (b, c0, h, w, u, v) with u = v = 5 so the
    # two valid 3x3 convs reduce (u, v) -> (1, 1). h*w = 256 gives a lane-dense
    # TN=256 tile (grid = (2, 1): batch alone feeds both v7x TensorCores).
    planes = [32, 16, 16, 16, 32]
    ksize = 3
    b, h, w, u, v = 2, 16, 16, 5, 5

    key = jax.random.PRNGKey(0)
    kx, kparam = jax.random.split(key)
    x = jax.random.normal(kx, (b, planes[0], h, w, u, v), jnp.float32)
    raw = make_raw_params(kparam, planes, ksize)
    kparams = prep_kernel_params(raw)

    fwd = jax.jit(scr_forward, static_argnames=("ksize",))
    ref_fn = jax.jit(scr_reference, static_argnames=("ksize",))

    out = jax.block_until_ready(fwd(x, kparams, ksize=ksize))
    ref = jax.block_until_ready(ref_fn(x, raw, ksize=ksize))

    assert out.shape == (b, planes[4], h, w), out.shape
    np.testing.assert_allclose(np.asarray(out), np.asarray(ref), rtol=2e-3, atol=2e-3)

    print("KERNEL_OK")
</pallas_src>

<mosaic_0001>
module attributes {stable_mosaic.version = 11 : i64} {
  func.func @_scr_fused_kernel(%arg0: i32, %arg1: i32, %arg2: memref<1x1x32x6400xbf16, #tpu.memory_space<vmem>>, %arg3: memref<16x32xbf16, #tpu.memory_space<vmem>>, %arg4: memref<16x1xf32, #tpu.memory_space<vmem>>, %arg5: memref<16x144xbf16, #tpu.memory_space<vmem>>, %arg6: memref<16x1xf32, #tpu.memory_space<vmem>>, %arg7: memref<16x144xbf16, #tpu.memory_space<vmem>>, %arg8: memref<16x1xf32, #tpu.memory_space<vmem>>, %arg9: memref<32x16xbf16, #tpu.memory_space<vmem>>, %arg10: memref<32x1xf32, #tpu.memory_space<vmem>>, %arg11: memref<1x32x256xf32, #tpu.memory_space<vmem>>, %arg12: memref<16x6400xbf16, #tpu.memory_space<vmem>>, %arg13: memref<144x2304xbf16, #tpu.memory_space<vmem>>) attributes {dimension_semantics = [#tpu.dimension_semantics<parallel>, #tpu.dimension_semantics<parallel>], iteration_bounds = array<i64: 2, 1>, scalar_prefetch = 0 : i64, scratch_operands = 2 : i64, tpu.core_type = #tpu.core_type<tc>, window_params = [{transform_indices = @transform_0, window_bounds = array<i64: 1, 1, 32, 6400>}, {pipeline_mode = #tpu.pipeline_mode<synchronous>, transform_indices = @transform_1, window_bounds = array<i64: 16, 32>}, {pipeline_mode = #tpu.pipeline_mode<synchronous>, transform_indices = @transform_2, window_bounds = array<i64: 16, 1>}, {pipeline_mode = #tpu.pipeline_mode<synchronous>, transform_indices = @transform_3, window_bounds = array<i64: 16, 144>}, {pipeline_mode = #tpu.pipeline_mode<synchronous>, transform_indices = @transform_4, window_bounds = array<i64: 16, 1>}, {pipeline_mode = #tpu.pipeline_mode<synchronous>, transform_indices = @transform_5, window_bounds = array<i64: 16, 144>}, {pipeline_mode = #tpu.pipeline_mode<synchronous>, transform_indices = @transform_6, window_bounds = array<i64: 16, 1>}, {pipeline_mode = #tpu.pipeline_mode<synchronous>, transform_indices = @transform_7, window_bounds = array<i64: 32, 16>}, {pipeline_mode = #tpu.pipeline_mode<synchronous>, transform_indices = @transform_8, window_bounds = array<i64: 32, 1>}, {transform_indices = @transform_9, window_bounds = array<i64: 1, 32, 256>}]} {
    %c0 = arith.constant 0 : index
    %c0_0 = arith.constant 0 : index
    %0 = vector.load %arg3[%c0, %c0_0] : memref<16x32xbf16, #tpu.memory_space<vmem>>, vector<16x32xbf16>
    %c0_1 = arith.constant 0 : index
    %c0_2 = arith.constant 0 : index
    %c0_3 = arith.constant 0 : index
    %c0_4 = arith.constant 0 : index
    %1 = vector.load %arg2[%c0_1, %c0_2, %c0_3, %c0_4] : memref<1x1x32x6400xbf16, #tpu.memory_space<vmem>>, vector<1x1x32x6400xbf16>
    %2 = vector.shape_cast %1 : vector<1x1x32x6400xbf16> to vector<32x6400xbf16>
    %cst = arith.constant dense<0.000000e+00> : vector<16x6400xf32>
    %3 = tpu.matmul %0, %2, %cst {dimension_numbers = #tpu.dot_dimension_numbers<[1], [0], [0], [1], [0, 0, 1, 1], [], []>} : vector<16x32xbf16>, vector<32x6400xbf16>, vector<16x6400xf32> -> vector<16x6400xf32>
    %c0_5 = arith.constant 0 : index
    %c0_6 = arith.constant 0 : index
    %4 = vector.load %arg4[%c0_5, %c0_6] : memref<16x1xf32, #tpu.memory_space<vmem>>, vector<16x1xf32>
    %5 = vector.broadcast %4 : vector<16x1xf32> to vector<16x6400xf32>
    %6 = arith.addf %3, %5 : vector<16x6400xf32>
    %cst_7 = arith.constant 0.000000e+00 : f32
    %7 = vector.broadcast %cst_7 : f32 to vector<16x6400xf32>
    %8 = arith.maximumf %6, %7 : vector<16x6400xf32>
    %9 = arith.truncf %8 : vector<16x6400xf32> to vector<16x6400xbf16>
    %c0_8 = arith.constant 0 : index
    %c0_9 = arith.constant 0 : index
    %10 = vector.load %arg12[%c0_8, %c0_9] : memref<16x6400xbf16, #tpu.memory_space<vmem>>, vector<16x6400xbf16>
    tpu.vector_store %arg12[%c0_8, %c0_9], %9 {strides = array<i32>} : memref<16x6400xbf16, #tpu.memory_space<vmem>>, vector<16x6400xbf16>,
    %c0_10 = arith.constant 0 : index
    %c0_11 = arith.constant 0 : index
    %11 = vector.load %arg12[%c0_10, %c0_11] : memref<16x6400xbf16, #tpu.memory_space<vmem>>, vector<16x768xbf16>
    %c0_12 = arith.constant 0 : index
    %c0_13 = arith.constant 0 : index
    %12 = vector.load %arg13[%c0_12, %c0_13] : memref<144x2304xbf16, #tpu.memory_space<vmem>>, vector<16x768xbf16>
    tpu.vector_store %arg13[%c0_12, %c0_13], %11 {strides = array<i32>} : memref<144x2304xbf16, #tpu.memory_space<vmem>>, vector<16x768xbf16>,
    %c0_14 = arith.constant 0 : index
    %c1280 = arith.constant 1280 : index
    %13 = vector.load %arg12[%c0_14, %c1280] : memref<16x6400xbf16, #tpu.memory_space<vmem>>, vector<16x768xbf16>
    %c0_15 = arith.constant 0 : index
    %c768 = arith.constant 768 : index
    %14 = vector.load %arg13[%c0_15, %c768] : memref<144x2304xbf16, #tpu.memory_space<vmem>>, vector<16x768xbf16>
    tpu.vector_store %arg13[%c0_15, %c768], %13 {strides = array<i32>} : memref<144x2304xbf16, #tpu.memory_space<vmem>>, vector<16x768xbf16>,
    %c0_16 = arith.constant 0 : index
    %c2560 = arith.constant 2560 : index
    %15 = vector.load %arg12[%c0_16, %c2560] : memref<16x6400xbf16, #tpu.memory_space<vmem>>, vector<16x768xbf16>
    %c0_17 = arith.constant 0 : index
    %c1536 = arith.constant 1536 : index
    %16 = vector.load %arg13[%c0_17, %c1536] : memref<144x2304xbf16, #tpu.memory_space<vmem>>, vector<16x768xbf16>
    tpu.vector_store %arg13[%c0_17, %c1536], %15 {strides = array<i32>} : memref<144x2304xbf16, #tpu.memory_space<vmem>>, vector<16x768xbf16>,
    %c0_18 = arith.constant 0 : index
    %c256 = arith.constant 256 : index
    %17 = vector.load %arg12[%c0_18, %c256] : memref<16x6400xbf16, #tpu.memory_space<vmem>>, vector<16x768xbf16>
    %c16 = arith.constant 16 : index
    %c0_19 = arith.constant 0 : index
    %18 = vector.load %arg13[%c16, %c0_19] : memref<144x2304xbf16, #tpu.memory_space<vmem>>, vector<16x768xbf16>
    tpu.vector_store %arg13[%c16, %c0_19], %17 {strides = array<i32>} : memref<144x2304xbf16, #tpu.memory_space<vmem>>, vector<16x768xbf16>,
    %c0_20 = arith.constant 0 : index
    %c1536_21 = arith.constant 1536 : index
    %19 = vector.load %arg12[%c0_20, %c1536_21] : memref<16x6400xbf16, #tpu.memory_space<vmem>>, vector<16x768xbf16>
    %c16_22 = arith.constant 16 : index
    %c768_23 = arith.constant 768 : index
    %20 = vector.load %arg13[%c16_22, %c768_23] : memref<144x2304xbf16, #tpu.memory_space<vmem>>, vector<16x768xbf16>
    tpu.vector_store %arg13[%c16_22, %c768_23], %19 {strides = array<i32>} : memref<144x2304xbf16, #tpu.memory_space<vmem>>, vector<16x768xbf16>,
    %c0_24 = arith.constant 0 : index
    %c2816 = arith.constant 2816 : index
    %21 = vector.load %arg12[%c0_24, %c2816] : memref<16x6400xbf16, #tpu.memory_space<vmem>>, vector<16x768xbf16>
    %c16_25 = arith.constant 16 : index
    %c1536_26 = arith.constant 1536 : index
    %22 = vector.load %arg13[%c16_25, %c1536_26] : memref<144x2304xbf16, #tpu.memory_space<vmem>>, vector<16x768xbf16>
    tpu.vector_store %arg13[%c16_25, %c1536_26], %21 {strides = array<i32>} : memref<144x2304xbf16, #tpu.memory_space<vmem>>, vector<16x768xbf16>,
    %c0_27 = arith.constant 0 : index
    %c512 = arith.constant 512 : index
    %23 = vector.load %arg12[%c0_27, %c512] : memref<16x6400xbf16, #tpu.memory_space<vmem>>, vector<16x768xbf16>
    %c32 = arith.constant 32 : index
    %c0_28 = arith.constant 0 : index
    %24 = vector.load %arg13[%c32, %c0_28] : memref<144x2304xbf16, #tpu.memory_space<vmem>>, vector<16x768xbf16>
    tpu.vector_store %arg13[%c32, %c0_28], %23 {strides = array<i32>} : memref<144x2304xbf16, #tpu.memory_space<vmem>>, vector<16x768xbf16>,
    %c0_29 = arith.constant 0 : index
    %c1792 = arith.constant 1792 : index
    %25 = vector.load %arg12[%c0_29, %c1792] : memref<16x6400xbf16, #tpu.memory_space<vmem>>, vector<16x768xbf16>
    %c32_30 = arith.constant 32 : index
    %c768_31 = arith.constant 768 : index
    %26 = vector.load %arg13[%c32_30, %c768_31] : memref<144x2304xbf16, #tpu.memory_space<vmem>>, vector<16x768xbf16>
    tpu.vector_store %arg13[%c32_30, %c768_31], %25 {strides = array<i32>} : memref<144x2304xbf16, #tpu.memory_space<vmem>>, vector<16x768xbf16>,
    %c0_32 = arith.constant 0 : index
    %c3072 = arith.constant 3072 : index
    %27 = vector.load %arg12[%c0_32, %c3072] : memref<16x6400xbf16, #tpu.memory_space<vmem>>, vector<16x768xbf16>
    %c32_33 = arith.constant 32 : index
    %c1536_34 = arith.constant 1536 : index
    %28 = vector.load %arg13[%c32_33, %c1536_34] : memref<144x2304xbf16, #tpu.memory_space<vmem>>, vector<16x768xbf16>
    tpu.vector_store %arg13[%c32_33, %c1536_34], %27 {strides = array<i32>} : memref<144x2304xbf16, #tpu.memory_space<vmem>>, vector<16x768xbf16>,
    %c0_35 = arith.constant 0 : index
    %c1280_36 = arith.constant 1280 : index
    %29 = vector.load %arg12[%c0_35, %c1280_36] : memref<16x6400xbf16, #tpu.memory_space<vmem>>, vector<16x768xbf16>
    %c48 = arith.constant 48 : index
    %c0_37 = arith.constant 0 : index
    %30 = vector.load %arg13[%c48, %c0_37] : memref<144x2304xbf16, #tpu.memory_space<vmem>>, vector<16x768xbf16>
    tpu.vector_store %arg13[%c48, %c0_37], %29 {strides = array<i32>} : memref<144x2304xbf16, #tpu.memory_space<vmem>>, vector<16x768xbf16>,
    %c0_38 = arith.constant 0 : index
    %c2560_39 = arith.constant 2560 : index
    %31 = vector.load %arg12[%c0_38, %c2560_39] : memref<16x6400xbf16, #tpu.memory_space<vmem>>, vector<16x768xbf16>
    %c48_40 = arith.constant 48 : index
    %c768_41 = arith.constant 768 : index
    %32 = vector.load %arg13[%c48_40, %c768_41] : memref<144x2304xbf16, #tpu.memory_space<vmem>>, vector<16x768xbf16>
    tpu.vector_store %arg13[%c48_40, %c768_41], %31 {strides = array<i32>} : memref<144x2304xbf16, #tpu.memory_space<vmem>>, vector<16x768xbf16>,
    %c0_42 = arith.constant 0 : index
    %c3840 = arith.constant 3840 : index
    %33 = vector.load %arg12[%c0_42, %c3840] : memref<16x6400xbf16, #tpu.memory_space<vmem>>, vector<16x768xbf16>
    %c48_43 = arith.constant 48 : index
    %c1536_44 = arith.constant 1536 : index
    %34 = vector.load %arg13[%c48_43, %c1536_44] : memref<144x2304xbf16, #tpu.memory_space<vmem>>, vector<16x768xbf16>
    tpu.vector_store %arg13[%c48_43, %c1536_44], %33 {strides = array<i32>} : memref<144x2304xbf16, #tpu.memory_space<vmem>>, vector<16x768xbf16>,
    %c0_45 = arith.constant 0 : index
    %c1536_46 = arith.constant 1536 : index
    %35 = vector.load %arg12[%c0_45, %c1536_46] : memref<16x6400xbf16, #tpu.memory_space<vmem>>, vector<16x768xbf16>
    %c64 = arith.constant 64 : index
    %c0_47 = arith.constant 0 : index
    %36 = vector.load %arg13[%c64, %c0_47] : memref<144x2304xbf16, #tpu.memory_space<vmem>>, vector<16x768xbf16>
    tpu.vector_store %arg13[%c64, %c0_47], %35 {strides = array<i32>} : memref<144x2304xbf16, #tpu.memory_space<vmem>>, vector<16x768xbf16>,
    %c0_48 = arith.constant 0 : index
    %c2816_49 = arith.constant 2816 : index
    %37 = vector.load %arg12[%c0_48, %c2816_49] : memref<16x6400xbf16, #tpu.memory_space<vmem>>, vector<16x768xbf16>
    %c64_50 = arith.constant 64 : index
    %c768_51 = arith.constant 768 : index
    %38 = vector.load %arg13[%c64_50, %c768_51] : memref<144x2304xbf16, #tpu.memory_space<vmem>>, vector<16x768xbf16>
    tpu.vector_store %arg13[%c64_50, %c768_51], %37 {strides = array<i32>} : memref<144x2304xbf16, #tpu.memory_space<vmem>>, vector<16x768xbf16>,
    %c0_52 = arith.constant 0 : index
    %c4096 = arith.constant 4096 : index
    %39 = vector.load %arg12[%c0_52, %c4096] : memref<16x6400xbf16, #tpu.memory_space<vmem>>, vector<16x768xbf16>
    %c64_53 = arith.constant 64 : index
    %c1536_54 = arith.constant 1536 : index
    %40 = vector.load %arg13[%c64_53, %c1536_54] : memref<144x2304xbf16, #tpu.memory_space<vmem>>, vector<16x768xbf16>
    tpu.vector_store %arg13[%c64_53, %c1536_54], %39 {strides = array<i32>} : memref<144x2304xbf16, #tpu.memory_space<vmem>>, vector<16x768xbf16>,
    %c0_55 = arith.constant 0 : index
    %c1792_56 = arith.constant 1792 : index
    %41 = vector.load %arg12[%c0_55, %c1792_56] : memref<16x6400xbf16, #tpu.memory_space<vmem>>, vector<16x768xbf16>
    %c80 = arith.constant 80 : index
    %c0_57 = arith.constant 0 : index
    %42 = vector.load %arg13[%c80, %c0_57] : memref<144x2304xbf16, #tpu.memory_space<vmem>>, vector<16x768xbf16>
    tpu.vector_store %arg13[%c80, %c0_57], %41 {strides = array<i32>} : memref<144x2304xbf16, #tpu.memory_space<vmem>>, vector<16x768xbf16>,
    %c0_58 = arith.constant 0 : index
    %c3072_59 = arith.constant 3072 : index
    %43 = vector.load %arg12[%c0_58, %c3072_59] : memref<16x6400xbf16, #tpu.memory_space<vmem>>, vector<16x768xbf16>
    %c80_60 = arith.constant 80 : index
    %c768_61 = arith.constant 768 : index
    %44 = vector.load %arg13[%c80_60, %c768_61] : memref<144x2304xbf16, #tpu.memory_space<vmem>>, vector<16x768xbf16>
    tpu.vector_store %arg13[%c80_60, %c768_61], %43 {strides = array<i32>} : memref<144x2304xbf16, #tpu.memory_space<vmem>>, vector<16x768xbf16>,
    %c0_62 = arith.constant 0 : index
    %c4352 = arith.constant 4352 : index
    %45 = vector.load %arg12[%c0_62, %c4352] : memref<16x6400xbf16, #tpu.memory_space<vmem>>, vector<16x768xbf16>
    %c80_63 = arith.constant 80 : index
    %c1536_64 = arith.constant 1536 : index
    %46 = vector.load %arg13[%c80_63, %c1536_64] : memref<144x2304xbf16, #tpu.memory_space<vmem>>, vector<16x768xbf16>
    tpu.vector_store %arg13[%c80_63, %c1536_64], %45 {strides = array<i32>} : memref<144x2304xbf16, #tpu.memory_space<vmem>>, vector<16x768xbf16>,
    %c0_65 = arith.constant 0 : index
    %c2560_66 = arith.constant 2560 : index
    %47 = vector.load %arg12[%c0_65, %c2560_66] : memref<16x6400xbf16, #tpu.memory_space<vmem>>, vector<16x768xbf16>
    %c96 = arith.constant 96 : index
    %c0_67 = arith.constant 0 : index
    %48 = vector.load %arg13[%c96, %c0_67] : memref<144x2304xbf16, #tpu.memory_space<vmem>>, vector<16x768xbf16>
    tpu.vector_store %arg13[%c96, %c0_67], %47 {strides = array<i32>} : memref<144x2304xbf16, #tpu.memory_space<vmem>>, vector<16x768xbf16>,
    %c0_68 = arith.constant 0 : index
    %c3840_69 = arith.constant 3840 : index
    %49 = vector.load %arg12[%c0_68, %c3840_69] : memref<16x6400xbf16, #tpu.memory_space<vmem>>, vector<16x768xbf16>
    %c96_70 = arith.constant 96 : index
    %c768_71 = arith.constant 768 : index
    %50 = vector.load %arg13[%c96_70, %c768_71] : memref<144x2304xbf16, #tpu.memory_space<vmem>>, vector<16x768xbf16>
    tpu.vector_store %arg13[%c96_70, %c768_71], %49 {strides = array<i32>} : memref<144x2304xbf16, #tpu.memory_space<vmem>>, vector<16x768xbf16>,
    %c0_72 = arith.constant 0 : index
    %c5120 = arith.constant 5120 : index
    %51 = vector.load %arg12[%c0_72, %c5120] : memref<16x6400xbf16, #tpu.memory_space<vmem>>, vector<16x768xbf16>
    %c96_73 = arith.constant 96 : index
    %c1536_74 = arith.constant 1536 : index
    %52 = vector.load %arg13[%c96_73, %c1536_74] : memref<144x2304xbf16, #tpu.memory_space<vmem>>, vector<16x768xbf16>
    tpu.vector_store %arg13[%c96_73, %c1536_74], %51 {strides = array<i32>} : memref<144x2304xbf16, #tpu.memory_space<vmem>>, vector<16x768xbf16>,
    %c0_75 = arith.constant 0 : index
    %c2816_76 = arith.constant 2816 : index
    %53 = vector.load %arg12[%c0_75, %c2816_76] : memref<16x6400xbf16, #tpu.memory_space<vmem>>, vector<16x768xbf16>
    %c112 = arith.constant 112 : index
    %c0_77 = arith.constant 0 : index
    %54 = vector.load %arg13[%c112, %c0_77] : memref<144x2304xbf16, #tpu.memory_space<vmem>>, vector<16x768xbf16>
    tpu.vector_store %arg13[%c112, %c0_77], %53 {strides = array<i32>} : memref<144x2304xbf16, #tpu.memory_space<vmem>>, vector<16x768xbf16>,
    %c0_78 = arith.constant 0 : index
    %c4096_79 = arith.constant 4096 : index
    %55 = vector.load %arg12[%c0_78, %c4096_79] : memref<16x6400xbf16, #tpu.memory_space<vmem>>, vector<16x768xbf16>
    %c112_80 = arith.constant 112 : index
    %c768_81 = arith.constant 768 : index
    %56 = vector.load %arg13[%c112_80, %c768_81] : memref<144x2304xbf16, #tpu.memory_space<vmem>>, vector<16x768xbf16>
    tpu.vector_store %arg13[%c112_80, %c768_81], %55 {strides = array<i32>} : memref<144x2304xbf16, #tpu.memory_space<vmem>>, vector<16x768xbf16>,
    %c0_82 = arith.constant 0 : index
    %c5376 = arith.constant 5376 : index
    %57 = vector.load %arg12[%c0_82, %c5376] : memref<16x6400xbf16, #tpu.memory_space<vmem>>, vector<16x768xbf16>
    %c112_83 = arith.constant 112 : index
    %c1536_84 = arith.constant 1536 : index
    %58 = vector.load %arg13[%c112_83, %c1536_84] : memref<144x2304xbf16, #tpu.memory_space<vmem>>, vector<16x768xbf16>
    tpu.vector_store %arg13[%c112_83, %c1536_84], %57 {strides = array<i32>} : memref<144x2304xbf16, #tpu.memory_space<vmem>>, vector<16x768xbf16>,
    %c0_85 = arith.constant 0 : index
    %c3072_86 = arith.constant 3072 : index
    %59 = vector.load %arg12[%c0_85, %c3072_86] : memref<16x6400xbf16, #tpu.memory_space<vmem>>, vector<16x768xbf16>
    %c128 = arith.constant 128 : index
    %c0_87 = arith.constant 0 : index
    %60 = vector.load %arg13[%c128, %c0_87] : memref<144x2304xbf16, #tpu.memory_space<vmem>>, vector<16x768xbf16>
    tpu.vector_store %arg13[%c128, %c0_87], %59 {strides = array<i32>} : memref<144x2304xbf16, #tpu.memory_space<vmem>>, vector<16x768xbf16>,
    %c0_88 = arith.constant 0 : index
    %c4352_89 = arith.constant 4352 : index
    %61 = vector.load %arg12[%c0_88, %c4352_89] : memref<16x6400xbf16, #tpu.memory_space<vmem>>, vector<16x768xbf16>
    %c128_90 = arith.constant 128 : index
    %c768_91 = arith.constant 768 : index
    %62 = vector.load %arg13[%c128_90, %c768_91] : memref<144x2304xbf16, #tpu.memory_space<vmem>>, vector<16x768xbf16>
    tpu.vector_store %arg13[%c128_90, %c768_91], %61 {strides = array<i32>} : memref<144x2304xbf16, #tpu.memory_space<vmem>>, vector<16x768xbf16>,
    %c0_92 = arith.constant 0 : index
    %c5632 = arith.constant 5632 : index
    %63 = vector.load %arg12[%c0_92, %c5632] : memref<16x6400xbf16, #tpu.memory_space<vmem>>, vector<16x768xbf16>
    %c128_93 = arith.constant 128 : index
    %c1536_94 = arith.constant 1536 : index
    %64 = vector.load %arg13[%c128_93, %c1536_94] : memref<144x2304xbf16, #tpu.memory_space<vmem>>, vector<16x768xbf16>
    tpu.vector_store %arg13[%c128_93, %c1536_94], %63 {strides = array<i32>} : memref<144x2304xbf16, #tpu.memory_space<vmem>>, vector<16x768xbf16>,
    %c0_95 = arith.constant 0 : index
    %c0_96 = arith.constant 0 : index
    %65 = vector.load %arg5[%c0_95, %c0_96] : memref<16x144xbf16, #tpu.memory_space<vmem>>, vector<16x144xbf16>
    %c0_97 = arith.constant 0 : index
    %c0_98 = arith.constant 0 : index
    %66 = vector.load %arg13[%c0_97, %c0_98] : memref<144x2304xbf16, #tpu.memory_space<vmem>>, vector<144x2304xbf16>
    %cst_99 = arith.constant dense<0.000000e+00> : vector<16x2304xf32>
    %67 = tpu.matmul %65, %66, %cst_99 {dimension_numbers = #tpu.dot_dimension_numbers<[1], [0], [0], [1], [0, 0, 1, 1], [], []>} : vector<16x144xbf16>, vector<144x2304xbf16>, vector<16x2304xf32> -> vector<16x2304xf32>
    %c0_100 = arith.constant 0 : index
    %c0_101 = arith.constant 0 : index
    %68 = vector.load %arg6[%c0_100, %c0_101] : memref<16x1xf32, #tpu.memory_space<vmem>>, vector<16x1xf32>
    %69 = vector.broadcast %68 : vector<16x1xf32> to vector<16x2304xf32>
    %70 = arith.addf %67, %69 : vector<16x2304xf32>
    %cst_102 = arith.constant 0.000000e+00 : f32
    %71 = vector.broadcast %cst_102 : f32 to vector<16x2304xf32>
    %72 = arith.maximumf %70, %71 : vector<16x2304xf32>
    %73 = arith.truncf %72 : vector<16x2304xf32> to vector<16x2304xbf16>
    %74 = vector.extract_strided_slice %73 {offsets = [0, 0], sizes = [16, 256], strides = [1, 1]} : vector<16x2304xbf16> to vector<16x256xbf16>
    %75 = vector.extract_strided_slice %73 {offsets = [0, 256], sizes = [16, 256], strides = [1, 1]} : vector<16x2304xbf16> to vector<16x256xbf16>
    %76 = vector.extract_strided_slice %73 {offsets = [0, 512], sizes = [16, 256], strides = [1, 1]} : vector<16x2304xbf16> to vector<16x256xbf16>
    %77 = vector.extract_strided_slice %73 {offsets = [0, 768], sizes = [16, 256], strides = [1, 1]} : vector<16x2304xbf16> to vector<16x256xbf16>
    %78 = vector.extract_strided_slice %73 {offsets = [0, 1024], sizes = [16, 256], strides = [1, 1]} : vector<16x2304xbf16> to vector<16x256xbf16>
    %79 = vector.extract_strided_slice %73 {offsets = [0, 1280], sizes = [16, 256], strides = [1, 1]} : vector<16x2304xbf16> to vector<16x256xbf16>
    %80 = vector.extract_strided_slice %73 {offsets = [0, 1536], sizes = [16, 256], strides = [1, 1]} : vector<16x2304xbf16> to vector<16x256xbf16>
    %81 = vector.extract_strided_slice %73 {offsets = [0, 1792], sizes = [16, 256], strides = [1, 1]} : vector<16x2304xbf16> to vector<16x256xbf16>
    %82 = vector.extract_strided_slice %73 {offsets = [0, 2048], sizes = [16, 256], strides = [1, 1]} : vector<16x2304xbf16> to vector<16x256xbf16>
    %83 = tpu.concatenate %74, %75, %76, %77, %78, %79, %80, %81, %82 in 0 : vector<16x256xbf16>, vector<16x256xbf16>, vector<16x256xbf16>, vector<16x256xbf16>, vector<16x256xbf16>, vector<16x256xbf16>, vector<16x256xbf16>, vector<16x256xbf16>, vector<16x256xbf16> -> vector<144x256xbf16>
    %c0_103 = arith.constant 0 : index
    %c0_104 = arith.constant 0 : index
    %84 = vector.load %arg7[%c0_103, %c0_104] : memref<16x144xbf16, #tpu.memory_space<vmem>>, vector<16x144xbf16>
    %cst_105 = arith.constant dense<0.000000e+00> : vector<16x256xf32>
    %85 = tpu.matmul %84, %83, %cst_105 {dimension_numbers = #tpu.dot_dimension_numbers<[1], [0], [0], [1], [0, 0, 1, 1], [], []>} : vector<16x144xbf16>, vector<144x256xbf16>, vector<16x256xf32> -> vector<16x256xf32>
    %c0_106 = arith.constant 0 : index
    %c0_107 = arith.constant 0 : index
    %86 = vector.load %arg8[%c0_106, %c0_107] : memref<16x1xf32, #tpu.memory_space<vmem>>, vector<16x1xf32>
    %87 = vector.broadcast %86 : vector<16x1xf32> to vector<16x256xf32>
    %88 = arith.addf %85, %87 : vector<16x256xf32>
    %cst_108 = arith.constant 0.000000e+00 : f32
    %89 = vector.broadcast %cst_108 : f32 to vector<16x256xf32>
    %90 = arith.maximumf %88, %89 : vector<16x256xf32>
    %91 = arith.truncf %90 : vector<16x256xf32> to vector<16x256xbf16>
    %c0_109 = arith.constant 0 : index
    %c0_110 = arith.constant 0 : index
    %92 = vector.load %arg9[%c0_109, %c0_110] : memref<32x16xbf16, #tpu.memory_space<vmem>>, vector<32x16xbf16>
    %cst_111 = arith.constant dense<0.000000e+00> : vector<32x256xf32>
    %93 = tpu.matmul %92, %91, %cst_111 {dimension_numbers = #tpu.dot_dimension_numbers<[1], [0], [0], [1], [0, 0, 1, 1], [], []>} : vector<32x16xbf16>, vector<16x256xbf16>, vector<32x256xf32> -> vector<32x256xf32>
    %c0_112 = arith.constant 0 : index
    %c0_113 = arith.constant 0 : index
    %94 = vector.load %arg10[%c0_112, %c0_113] : memref<32x1xf32, #tpu.memory_space<vmem>>, vector<32x1xf32>
    %95 = vector.broadcast %94 : vector<32x1xf32> to vector<32x256xf32>
    %96 = arith.addf %93, %95 : vector<32x256xf32>
    %c0_114 = arith.constant 0 : index
    %c0_115 = arith.constant 0 : index
    %c0_116 = arith.constant 0 : index
    %97 = vector.load %arg11[%c0_114, %c0_115, %c0_116] : memref<1x32x256xf32, #tpu.memory_space<vmem>>, vector<1x32x256xf32>
    %98 = vector.shape_cast %97 : vector<1x32x256xf32> to vector<32x256xf32>
    %99 = vector.shape_cast %96 : vector<32x256xf32> to vector<1x32x256xf32>
    tpu.vector_store %arg11[%c0_114, %c0_115, %c0_116], %99 {strides = array<i32>} : memref<1x32x256xf32, #tpu.memory_space<vmem>>, vector<1x32x256xf32>,
    return
  }
  func.func @transform_0(%arg0: i32, %arg1: i32) -> (i32, i32, i32, i32) {
    %c0_i32 = arith.constant 0 : i32
    %c0_i32_0 = arith.constant 0 : i32
    %c0_i32_1 = arith.constant 0 : i32
    return %arg0, %arg1, %c0_i32, %c0_i32_0 : i32, i32, i32, i32
  }
  func.func @transform_1(%arg0: i32, %arg1: i32) -> (i32, i32) {
    %c0_i32 = arith.constant 0 : i32
    %c0_i32_0 = arith.constant 0 : i32
    %c0_i32_1 = arith.constant 0 : i32
    return %c0_i32, %c0_i32_0 : i32, i32
  }
  func.func @transform_2(%arg0: i32, %arg1: i32) -> (i32, i32) {
    %c0_i32 = arith.constant 0 : i32
    %c0_i32_0 = arith.constant 0 : i32
    %c0_i32_1 = arith.constant 0 : i32
    return %c0_i32, %c0_i32_0 : i32, i32
  }
  func.func @transform_3(%arg0: i32, %arg1: i32) -> (i32, i32) {
    %c0_i32 = arith.constant 0 : i32
    %c0_i32_0 = arith.constant 0 : i32
    %c0_i32_1 = arith.constant 0 : i32
    return %c0_i32, %c0_i32_0 : i32, i32
  }
  func.func @transform_4(%arg0: i32, %arg1: i32) -> (i32, i32) {
    %c0_i32 = arith.constant 0 : i32
    %c0_i32_0 = arith.constant 0 : i32
    %c0_i32_1 = arith.constant 0 : i32
    return %c0_i32, %c0_i32_0 : i32, i32
  }
  func.func @transform_5(%arg0: i32, %arg1: i32) -> (i32, i32) {
    %c0_i32 = arith.constant 0 : i32
    %c0_i32_0 = arith.constant 0 : i32
    %c0_i32_1 = arith.constant 0 : i32
    return %c0_i32, %c0_i32_0 : i32, i32
  }
  func.func @transform_6(%arg0: i32, %arg1: i32) -> (i32, i32) {
    %c0_i32 = arith.constant 0 : i32
    %c0_i32_0 = arith.constant 0 : i32
    %c0_i32_1 = arith.constant 0 : i32
    return %c0_i32, %c0_i32_0 : i32, i32
  }
  func.func @transform_7(%arg0: i32, %arg1: i32) -> (i32, i32) {
    %c0_i32 = arith.constant 0 : i32
    %c0_i32_0 = arith.constant 0 : i32
    %c0_i32_1 = arith.constant 0 : i32
    return %c0_i32, %c0_i32_0 : i32, i32
  }
  func.func @transform_8(%arg0: i32, %arg1: i32) -> (i32, i32) {
    %c0_i32 = arith.constant 0 : i32
    %c0_i32_0 = arith.constant 0 : i32
    %c0_i32_1 = arith.constant 0 : i32
    return %c0_i32, %c0_i32_0 : i32, i32
  }
  func.func @transform_9(%arg0: i32, %arg1: i32) -> (i32, i32, i32) {
    %c0_i32 = arith.constant 0 : i32
    %c0_i32_0 = arith.constant 0 : i32
    return %arg0, %c0_i32, %arg1 : i32, i32, i32
  }
}

</mosaic_0001>

<llo_original>
// kernel: scr_forward.1
$region0: #{scr_forward.1}
  #allocation0 [shape = 'u32[]', space=smem, size = 0x4, offset = 0x4, fixed_abs, tag = 'smem constant byte address 0x4 - core index']
  #allocation1 [shape = 'u32[72,128]{1,0:T(1,128)}', space=vmem, size = 0x9000, scoped, tag = 'internal scratch']
  #allocation2 [shape = 'bf16[16,6400]{1,0:T(8,128)(2,1)}', space=vmem, size = 0x32000, scoped, tag = 'scratch operand']
  #allocation3 [shape = 'bf16[144,2304]{1,0:T(8,128)(2,1)}', space=vmem, size = 0xa2000, scoped, tag = 'scratch operand']
  %s0 = inlined_call_operand.vmem [shape: bf16[2,1,32,6400], index: 0, kind: input, shape index: {}]
  %s1 = inlined_call_operand.vmem [shape: bf16[16,32], index: 1, kind: input, shape index: {}]
  %s2 = inlined_call_operand.vmem [shape: f32[16,1], index: 2, kind: input, shape index: {}]
  %s3 = inlined_call_operand.vmem [shape: bf16[16,144], index: 3, kind: input, shape index: {}]
  %s4 = inlined_call_operand.vmem [shape: f32[16,1], index: 4, kind: input, shape index: {}]
  %s5 = inlined_call_operand.vmem [shape: bf16[16,144], index: 5, kind: input, shape index: {}]
  %s6 = inlined_call_operand.vmem [shape: f32[16,1], index: 6, kind: input, shape index: {}]
  %s7 = inlined_call_operand.vmem [shape: bf16[32,16], index: 7, kind: input, shape index: {}]
  %s8 = inlined_call_operand.vmem [shape: f32[32,1], index: 8, kind: input, shape index: {}]
  %s9 = inlined_call_operand.vmem [shape: f32[2,32,256], index: 9, kind: output, shape index: {}]
  %s10 = sld [smem:[#allocation0]]
  $region69: #{scr_forward.1} parent=0
    _
  %s12 = ssub.s32 1, %s10
  %s13 = scalar_select 0, %s12, %s10
  loop: start=0, step=1, limit=4
  $region2: #{scr_forward.1} parent=0 // loop_pre_header
    _
  $region3: #{scr_forward.1} parent=0 // loop_header
    %s15 = sphi 0, %s19
    %p16 = scmp.ge.s32.totalorder %s15, 4
    %s22 = sphi 0, %s34
    %s23 = sphi 0, %s30
    %s24 = sphi 0, %s22
    %s25 = sphi 0, %s23
    %s26 = sphi 0, %s24
    %s27 = sphi 0, %s25
    %s39 = sphi 0, %s41
    %s42 = sphi 0, %s39
    %s43 = sphi 0, %s42
    %s59 = sphi 0, %s43
    %s63 = sphi 0, %s63
    %s65 = sphi 0, %s63
    %s66 = sphi 0, %s65
    %s80 = sphi 0, %s66
    %s84 = sphi 0, %s84
    %s86 = sphi 0, %s84
    %s87 = sphi 0, %s86
    %s101 = sphi 0, %s87
    %s105 = sphi 0, %s105
    %s107 = sphi 0, %s105
    %s108 = sphi 0, %s107
    %s122 = sphi 0, %s108
    %s126 = sphi 0, %s126
    %s128 = sphi 0, %s126
    %s129 = sphi 0, %s128
    %s143 = sphi 0, %s129
    %s147 = sphi 0, %s147
    %s149 = sphi 0, %s147
    %s150 = sphi 0, %s149
    %s164 = sphi 0, %s150
    %s168 = sphi 0, %s168
    %s170 = sphi 0, %s168
    %s171 = sphi 0, %s170
    %s185 = sphi 0, %s171
    %s189 = sphi 0, %s189
    %s191 = sphi 0, %s189
    %s192 = sphi 0, %s191
    %s206 = sphi 0, %s192
    %s210 = sphi 0, %s210
    %s212 = sphi 0, %s210
    %s213 = sphi 0, %s212
    %s227 = sphi 0, %s213
    %s235 = sphi 0, %s237
    %s238 = sphi 0, %s235
    %s239 = sphi 0, %s238
    %s255 = sphi 0, %s239
  $region4: #{scr_forward.1} parent=0 // loop_header_branch
    %18 = sbr.rel (%p16) target = $region8
  $region5: #{scr_forward.1} parent=0 // loop_body
    %s20 = ssub.s32 %s15, 1
    %s21 = ssub.s32 %s15, 2
    %s28 = sadd.s32 1, %s23
    %p29 = scmp.ge.s32.totalorder %s28, 1
    %s30 = scalar_select %p29, 0, %s28
    %s31 = sadd.s32 1, %s22
    %s32 = scalar_select %p29, %s31, %s22
    %p33 = scmp.ge.s32.totalorder %s32, 2
    %s34 = scalar_select %p33, 0, %s32
    %s35 = ssub.s32 %s22, %s34
    %s36 = ssub.s32 %s23, %s30
    %s37 = sor.u32 %s35, %s36
    %p38 = scmp.eq.s32.totalorder %s37, 0
    %s40 = sadd.s32 %s39, 1
    %s41 = scalar_select %p38, %s39, %s40
    %p44 = pneg %p38
    %p45 = scmp.eq.s32.totalorder %s15, 1
    %p46 = por %p44, %p45
    %p47 = scmp.ne.s32.totalorder %s39, %s42
    %p48 = scmp.eq.s32.totalorder %s15, 0
    %p49 = por %p47, %p48
    %p50 = scmp.ne.s32.totalorder %s39, %s42
    %p51 = scmp.eq.s32.totalorder %s20, 1
    %p52 = por %p50, %p51
    %p53 = scmp.ne.s32.totalorder %s42, %s43
    %p54 = scmp.eq.s32.totalorder %s20, 0
    %p55 = por %p53, %p54
    %p56 = scmp.ne.s32.totalorder %s42, %s43
    %p57 = scmp.eq.s32.totalorder %s21, 1
    %p58 = por %p56, %p57
    %p60 = scmp.ne.s32.totalorder %s43, %s59
    %p61 = scmp.eq.s32.totalorder %s21, 0
    %p62 = por %p60, %p61
    %s64 = sadd.s32 %s63, 1
    %p67 = scmp.eq.s32.totalorder %s15, 1
    %p68 = scmp.ne.s32.totalorder %s63, %s65
    %p69 = scmp.eq.s32.totalorder %s15, 0
    %p70 = por %p68, %p69
    %p71 = scmp.ne.s32.totalorder %s63, %s65
    %p72 = scmp.eq.s32.totalorder %s20, 1
    %p73 = por %p71, %p72
    %p74 = scmp.ne.s32.totalorder %s65, %s66
    %p75 = scmp.eq.s32.totalorder %s20, 0
    %p76 = por %p74, %p75
    %p77 = scmp.ne.s32.totalorder %s65, %s66
    %p78 = scmp.eq.s32.totalorder %s21, 1
    %p79 = por %p77, %p78
    %p81 = scmp.ne.s32.totalorder %s66, %s80
    %p82 = scmp.eq.s32.totalorder %s21, 0
    %p83 = por %p81, %p82
    %s85 = sadd.s32 %s84, 1
    %p88 = scmp.eq.s32.totalorder %s15, 1
    %p89 = scmp.ne.s32.totalorder %s84, %s86
    %p90 = scmp.eq.s32.totalorder %s15, 0
    %p91 = por %p89, %p90
    %p92 = scmp.ne.s32.totalorder %s84, %s86
    %p93 = scmp.eq.s32.totalorder %s20, 1
    %p94 = por %p92, %p93
    %p95 = scmp.ne.s32.totalorder %s86, %s87
    %p96 = scmp.eq.s32.totalorder %s20, 0
    %p97 = por %p95, %p96
    %p98 = scmp.ne.s32.totalorder %s86, %s87
    %p99 = scmp.eq.s32.totalorder %s21, 1
    %p100 = por %p98, %p99
    %p102 = scmp.ne.s32.totalorder %s87, %s101
    %p103 = scmp.eq.s32.totalorder %s21, 0
    %p104 = por %p102, %p103
    %s106 = sadd.s32 %s105, 1
    %p109 = scmp.eq.s32.totalorder %s15, 1
    %p110 = scmp.ne.s32.totalorder %s105, %s107
    %p111 = scmp.eq.s32.totalorder %s15, 0
    %p112 = por %p110, %p111
    %p113 = scmp.ne.s32.totalorder %s105, %s107
    %p114 = scmp.eq.s32.totalorder %s20, 1
    %p115 = por %p113, %p114
    %p116 = scmp.ne.s32.totalorder %s107, %s108
    %p117 = scmp.eq.s32.totalorder %s20, 0
    %p118 = por %p116, %p117
    %p119 = scmp.ne.s32.totalorder %s107, %s108
    %p120 = scmp.eq.s32.totalorder %s21, 1
    %p121 = por %p119, %p120
    %p123 = scmp.ne.s32.totalorder %s108, %s122
    %p124 = scmp.eq.s32.totalorder %s21, 0
    %p125 = por %p123, %p124
    %s127 = sadd.s32 %s126, 1
    %p130 = scmp.eq.s32.totalorder %s15, 1
    %p131 = scmp.ne.s32.totalorder %s126, %s128
    %p132 = scmp.eq.s32.totalorder %s15, 0
    %p133 = por %p131, %p132
    %p134 = scmp.ne.s32.totalorder %s126, %s128
    %p135 = scmp.eq.s32.totalorder %s20, 1
    %p136 = por %p134, %p135
    %p137 = scmp.ne.s32.totalorder %s128, %s129
    %p138 = scmp.eq.s32.totalorder %s20, 0
    %p139 = por %p137, %p138
    %p140 = scmp.ne.s32.totalorder %s128, %s129
    %p141 = scmp.eq.s32.totalorder %s21, 1
    %p142 = por %p140, %p141
    %p144 = scmp.ne.s32.totalorder %s129, %s143
    %p145 = scmp.eq.s32.totalorder %s21, 0
    %p146 = por %p144, %p145
    %s148 = sadd.s32 %s147, 1
    %p151 = scmp.eq.s32.totalorder %s15, 1
    %p152 = scmp.ne.s32.totalorder %s147, %s149
    %p153 = scmp.eq.s32.totalorder %s15, 0
    %p154 = por %p152, %p153
    %p155 = scmp.ne.s32.totalorder %s147, %s149
    %p156 = scmp.eq.s32.totalorder %s20, 1
    %p157 = por %p155, %p156
    %p158 = scmp.ne.s32.totalorder %s149, %s150
    %p159 = scmp.eq.s32.totalorder %s20, 0
    %p160 = por %p158, %p159
    %p161 = scmp.ne.s32.totalorder %s149, %s150
    %p162 = scmp.eq.s32.totalorder %s21, 1
    %p163 = por %p161, %p162
    %p165 = scmp.ne.s32.totalorder %s150, %s164
    %p166 = scmp.eq.s32.totalorder %s21, 0
    %p167 = por %p165, %p166
    %s169 = sadd.s32 %s168, 1
    %p172 = scmp.eq.s32.totalorder %s15, 1
    %p173 = scmp.ne.s32.totalorder %s168, %s170
    %p174 = scmp.eq.s32.totalorder %s15, 0
    %p175 = por %p173, %p174
    %p176 = scmp.ne.s32.totalorder %s168, %s170
    %p177 = scmp.eq.s32.totalorder %s20, 1
    %p178 = por %p176, %p177
    %p179 = scmp.ne.s32.totalorder %s170, %s171
    %p180 = scmp.eq.s32.totalorder %s20, 0
    %p181 = por %p179, %p180
    %p182 = scmp.ne.s32.totalorder %s170, %s171
    %p183 = scmp.eq.s32.totalorder %s21, 1
    %p184 = por %p182, %p183
    %p186 = scmp.ne.s32.totalorder %s171, %s185
    %p187 = scmp.eq.s32.totalorder %s21, 0
    %p188 = por %p186, %p187
    %s190 = sadd.s32 %s189, 1
    %p193 = scmp.eq.s32.totalorder %s15, 1
    %p194 = scmp.ne.s32.totalorder %s189, %s191
    %p195 = scmp.eq.s32.totalorder %s15, 0
    %p196 = por %p194, %p195
    %p197 = scmp.ne.s32.totalorder %s189, %s191
    %p198 = scmp.eq.s32.totalorder %s20, 1
    %p199 = por %p197, %p198
    %p200 = scmp.ne.s32.totalorder %s191, %s192
    %p201 = scmp.eq.s32.totalorder %s20, 0
    %p202 = por %p200, %p201
    %p203 = scmp.ne.s32.totalorder %s191, %s192
    %p204 = scmp.eq.s32.totalorder %s21, 1
    %p205 = por %p203, %p204
    %p207 = scmp.ne.s32.totalorder %s192, %s206
    %p208 = scmp.eq.s32.totalorder %s21, 0
    %p209 = por %p207, %p208
    %s211 = sadd.s32 %s210, 1
    %p214 = scmp.eq.s32.totalorder %s15, 1
    %p215 = scmp.ne.s32.totalorder %s210, %s212
    %p216 = scmp.eq.s32.totalorder %s15, 0
    %p217 = por %p215, %p216
    %p218 = scmp.ne.s32.totalorder %s210, %s212
    %p219 = scmp.eq.s32.totalorder %s20, 1
    %p220 = por %p218, %p219
    %p221 = scmp.ne.s32.totalorder %s212, %s213
    %p222 = scmp.eq.s32.totalorder %s20, 0
    %p223 = por %p221, %p222
    %p224 = scmp.ne.s32.totalorder %s212, %s213
    %p225 = scmp.eq.s32.totalorder %s21, 1
    %p226 = por %p224, %p225
    %p228 = scmp.ne.s32.totalorder %s213, %s227
    %p229 = scmp.eq.s32.totalorder %s21, 0
    %p230 = por %p228, %p229
    %s231 = ssub.s32 %s22, %s34
    %s232 = ssub.s32 %s23, %s30
    %s233 = sor.u32 %s231, %s232
    %p234 = scmp.eq.s32.totalorder %s233, 0
    %s236 = sadd.s32 %s235, 1
    %s237 = scalar_select %p234, %s235, %s236
    %p240 = pneg %p234
    %p241 = scmp.eq.s32.totalorder %s15, 1
    %p242 = por %p240, %p241
    %p243 = scmp.ne.s32.totalorder %s235, %s238
    %p244 = scmp.eq.s32.totalorder %s15, 0
    %p245 = por %p243, %p244
    %p246 = scmp.ne.s32.totalorder %s235, %s238
    %p247 = scmp.eq.s32.totalorder %s20, 1
    %p248 = por %p246, %p247
    %p249 = scmp.ne.s32.totalorder %s238, %s239
    %p250 = scmp.eq.s32.totalorder %s20, 0
    %p251 = por %p249, %p250
    %p252 = scmp.ne.s32.totalorder %s238, %s239
    %p253 = scmp.eq.s32.totalorder %s21, 1
    %p254 = por %p252, %p253
    %p256 = scmp.ne.s32.totalorder %s239, %s255
    %p257 = scmp.eq.s32.totalorder %s21, 0
    %p258 = por %p256, %p257
    %p259 = scmp.le.s32.totalorder 1, %s15
    %p260 = scmp.lt.s32.totalorder %s15, 3
    %p261 = pnand %p259, %p260
    %p262 = pneg %p261
    // Predicated region
    $region9: #{scr_forward.1} parent=5 // pred_check
      _
    $region10: #{scr_forward.1} parent=5 // pred_check_branch
      %264 = sbr.rel (%p261) target = $region12
    $region11: #{scr_forward.1} parent=5 // pred_region
      %s265 = ssub.s32 %s15, 1
      // Predicated region
      $region13: #{scr_forward.1} parent=11 // pred_check
        %p266 = pneg %p76
      $region14: #{scr_forward.1} parent=11 // pred_check_branch
        %268 = sbr.rel (%p266) target = $region16
      $region15: #{scr_forward.1} parent=11 // pred_region
        _
      $region16: #{scr_forward.1} parent=11 // pred_fallthru
        _
      // Predicated region
      $region17: #{scr_forward.1} parent=11 // pred_check
        %p269 = pneg %p97
      $region18: #{scr_forward.1} parent=11 // pred_check_branch
        %271 = sbr.rel (%p269) target = $region20
      $region19: #{scr_forward.1} parent=11 // pred_region
        _
      $region20: #{scr_forward.1} parent=11 // pred_fallthru
        _
      // Predicated region
      $region21: #{scr_forward.1} parent=11 // pred_check
        %p272 = pneg %p118
      $region22: #{scr_forward.1} parent=11 // pred_check_branch
        %274 = sbr.rel (%p272) target = $region24
      $region23: #{scr_forward.1} parent=11 // pred_region
        _
      $region24: #{scr_forward.1} parent=11 // pred_fallthru
        _
      // Predicated region
      $region25: #{scr_forward.1} parent=11 // pred_check
        %p275 = pneg %p139
      $region26: #{scr_forward.1} parent=11 // pred_check_branch
        %277 = sbr.rel (%p275) target = $region28
      $region27: #{scr_forward.1} parent=11 // pred_region
        _
      $region28: #{scr_forward.1} parent=11 // pred_fallthru
        _
      // Predicated region
      $region29: #{scr_forward.1} parent=11 // pred_check
        %p278 = pneg %p160
      $region30: #{scr_forward.1} parent=11 // pred_check_branch
        %280 = sbr.rel (%p278) target = $region32
      $region31: #{scr_forward.1} parent=11 // pred_region
        _
      $region32: #{scr_forward.1} parent=11 // pred_fallthru
        _
      // Predicated region
      $region33: #{scr_forward.1} parent=11 // pred_check
        %p281 = pneg %p181
      $region34: #{scr_forward.1} parent=11 // pred_check_branch
        %283 = sbr.rel (%p281) target = $region36
      $region35: #{scr_forward.1} parent=11 // pred_region
        _
      $region36: #{scr_forward.1} parent=11 // pred_fallthru
        _
      // Predicated region
      $region37: #{scr_forward.1} parent=11 // pred_check
        %p284 = pneg %p202
      $region38: #{scr_forward.1} parent=11 // pred_check_branch
        %286 = sbr.rel (%p284) target = $region40
      $region39: #{scr_forward.1} parent=11 // pred_region
        _
      $region40: #{scr_forward.1} parent=11 // pred_fallthru
        _
      // Predicated region
      $region41: #{scr_forward.1} parent=11 // pred_check
        %p287 = pneg %p223
      $region42: #{scr_forward.1} parent=11 // pred_check_branch
        %289 = sbr.rel (%p287) target = $region44
      $region43: #{scr_forward.1} parent=11 // pred_region
        _
      $region44: #{scr_forward.1} parent=11 // pred_fallthru
        _
    $region12: #{scr_forward.1} parent=5 // pred_fallthru
      _
    %p290 = scmp.lt.s32.totalorder %s15, 2
    // Predicated region
    $region45: #{scr_forward.1} parent=5 // pred_check
      %p291 = pneg %p290
    $region46: #{scr_forward.1} parent=5 // pred_check_branch
      %293 = sbr.rel (%p291) target = $region48
    $region47: #{scr_forward.1} parent=5 // pred_region
      // Predicated region
      $region49: #{scr_forward.1} parent=47 // pred_check
        %p294 = pneg %p49
      $region50: #{scr_forward.1} parent=47 // pred_check_branch
        %296 = sbr.rel (%p294) target = $region52
      $region51: #{scr_forward.1} parent=47 // pred_region
        %p297 = scmp.lt.s32.totalorder %s22, 1
        %s298 = scalar_select %p297, %s22, 1
        %p299 = scmp.lt.s32.totalorder %s23, 0
        %s300 = scalar_select %p299, %s23, 0
        %s301 = smul.addr %s300, 200
        %s302 = smul.addr %s298, 200
        %s303 = sadd.s32 %s301, %s302
        %s304 = smul.addr %s303, 4
        %s305 = scalar_lea.vmem %s0, %s304
      $region52: #{scr_forward.1} parent=47 // pred_fallthru
        _
    $region48: #{scr_forward.1} parent=5 // pred_fallthru
      _
    %p306 = scmp.le.s32.totalorder 1, %s15
    %p307 = scmp.lt.s32.totalorder %s15, 3
    %p308 = pnand %p306, %p307
    %p309 = pneg %p308
    // Predicated region
    $region53: #{scr_forward.1} parent=5 // pred_check
      _
    $region54: #{scr_forward.1} parent=5 // pred_check_branch
      %311 = sbr.rel (%p308) target = $region56
    $region55: #{scr_forward.1} parent=5 // pred_region
      %s312 = ssub.s32 %s15, 1
      %p313 = scmp.lt.s32.totalorder %s24, 1
      %s314 = scalar_select %p313, %s24, 1
      %p315 = scmp.lt.s32.totalorder %s25, 0
      %s316 = scalar_select %p315, %s25, 0
      %s317 = smul.addr %s316, 200
      %s318 = smul.addr %s314, 200
      %s319 = sadd.s32 %s317, %s318
      %s320 = smul.addr %s319, 4
      %s321 = scalar_lea.vmem %s0, %s320
      %p322 = pneg %p55
      %p323 = pneg %p52
      %p324 = pneg %p76
      %p325 = pneg %p73
      %p326 = pneg %p97
      %p327 = pneg %p94
      %p328 = pneg %p118
      %p329 = pneg %p115
      %p330 = pneg %p139
      %p331 = pneg %p136
      %p332 = pneg %p160
      %p333 = pneg %p157
      %p334 = pneg %p181
      %p335 = pneg %p178
      %p336 = pneg %p202
      %p337 = pneg %p199
      %p338 = pneg %p223
      %p339 = pneg %p220
      %p340 = pneg %p251
      %p341 = pneg %p248
      %s342 = smul.u32 2, %s25
      %p343 = scmp.lt.s32.totalorder %s24, 1
      %s344 = scalar_select %p343, %s24, 1
      %p345 = scmp.lt.s32.totalorder %s342, 1
      %s346 = scalar_select %p345, %s342, 1
      %s347 = smul.addr %s344, 8
      %s348 = sadd.s32 %s346, %s347
      %s349 = smul.addr %s348, 8
      %s350 = scalar_lea.vmem %s9, %s349
      %p351 = scmp.lt.s32.totalorder %s24, 1
      %s352 = scalar_select %p351, %s24, 1
      %p353 = scmp.lt.s32.totalorder %s25, 0
      %s354 = scalar_select %p353, %s25, 0
      %s355 = smul.addr %s354, 200
      %s356 = smul.addr %s352, 200
      %s357 = sadd.s32 %s355, %s356
      %s358 = smul.addr %s357, 4
      %s359 = scalar_lea.vmem %s0, %s358
      %s360 = smul.u32 2, %s25
      %p361 = scmp.lt.s32.totalorder %s24, 1
      %s362 = scalar_select %p361, %s24, 1
      %p363 = scmp.lt.s32.totalorder %s360, 1
      %s364 = scalar_select %p363, %s360, 1
      %s365 = smul.addr %s362, 8
      %s366 = sadd.s32 %s364, %s365
      %s367 = smul.addr %s366, 8
      %s368 = scalar_lea.vmem %s9, %s367
      %s369 = smul.u32 2, %s25
      %v371 = vld [vmem:[%s1] sm:$0xf]
      %v372 = vld [vmem:[%s1 + $0x4] sm:$0xf]
      %v373 = vld [vmem:[%s359] sm:$0xff]
      %v374 = vld [vmem:[%s359 + $0x8] sm:$0xff]
      %v375 = vld [vmem:[%s359 + $0x10] sm:$0xff]
      %v376 = vld [vmem:[%s359 + $0x18] sm:$0xff]
      %v377 = vld [vmem:[%s359 + $0x20] sm:$0xff]
      %v378 = vld [vmem:[%s359 + $0x28] sm:$0xff]
      %v379 = vld [vmem:[%s359 + $0x30] sm:$0xff]
      %v380 = vld [vmem:[%s359 + $0x38] sm:$0xff]
      %v381 = vld [vmem:[%s359 + $0x40] sm:$0xff]
      %v382 = vld [vmem:[%s359 + $0x48] sm:$0xff]
      %v383 = vld [vmem:[%s359 + $0x50] sm:$0xff]
      %v384 = vld [vmem:[%s359 + $0x58] sm:$0xff]
      %v385 = vld [vmem:[%s359 + $0x60] sm:$0xff]
      %v386 = vld [vmem:[%s359 + $0x68] sm:$0xff]
      %v387 = vld [vmem:[%s359 + $0x70] sm:$0xff]
      %v388 = vld [vmem:[%s359 + $0x78] sm:$0xff]
      %v389 = vld [vmem:[%s359 + $0x80] sm:$0xff]
      %v390 = vld [vmem:[%s359 + $0x88] sm:$0xff]
      %v391 = vld [vmem:[%s359 + $0x90] sm:$0xff]
      %v392 = vld [vmem:[%s359 + $0x98] sm:$0xff]
      %v393 = vld [vmem:[%s359 + $0xa0] sm:$0xff]
      %v394 = vld [vmem:[%s359 + $0xa8] sm:$0xff]
      %v395 = vld [vmem:[%s359 + $0xb0] sm:$0xff]
      %v396 = vld [vmem:[%s359 + $0xb8] sm:$0xff]
      %v397 = vld [vmem:[%s359 + $0xc0] sm:$0xff]
      %v398 = vld [vmem:[%s359 + $0xc8] sm:$0xff]
      %v399 = vld [vmem:[%s359 + $0xd0] sm:$0xff]
      %v400 = vld [vmem:[%s359 + $0xd8] sm:$0xff]
      %v401 = vld [vmem:[%s359 + $0xe0] sm:$0xff]
      %v402 = vld [vmem:[%s359 + $0xe8] sm:$0xff]
      %v403 = vld [vmem:[%s359 + $0xf0] sm:$0xff]
      %v404 = vld [vmem:[%s359 + $0xf8] sm:$0xff]
      %v405 = vld [vmem:[%s359 + $0x100] sm:$0xff]
      %v406 = vld [vmem:[%s359 + $0x108] sm:$0xff]
      %v407 = vld [vmem:[%s359 + $0x110] sm:$0xff]
      %v408 = vld [vmem:[%s359 + $0x118] sm:$0xff]
      %v409 = vld [vmem:[%s359 + $0x120] sm:$0xff]
      %v410 = vld [vmem:[%s359 + $0x128] sm:$0xff]
      %v411 = vld [vmem:[%s359 + $0x130] sm:$0xff]
      %v412 = vld [vmem:[%s359 + $0x138] sm:$0xff]
      %v413 = vld [vmem:[%s359 + $0x140] sm:$0xff]
      %v414 = vld [vmem:[%s359 + $0x148] sm:$0xff]
      %v415 = vld [vmem:[%s359 + $0x150] sm:$0xff]
      %v416 = vld [vmem:[%s359 + $0x158] sm:$0xff]
      %v417 = vld [vmem:[%s359 + $0x160] sm:$0xff]
      %v418 = vld [vmem:[%s359 + $0x168] sm:$0xff]
      %v419 = vld [vmem:[%s359 + $0x170] sm:$0xff]
      %v420 = vld [vmem:[%s359 + $0x178] sm:$0xff]
      %v421 = vld [vmem:[%s359 + $0x180] sm:$0xff]
      %v422 = vld [vmem:[%s359 + $0x188] sm:$0xff]
      %v423 = vld [vmem:[%s359 + $0x190] sm:$0xff]
      %v424 = vld [vmem:[%s359 + $0x198] sm:$0xff]
      %v425 = vld [vmem:[%s359 + $0x1a0] sm:$0xff]
      %v426 = vld [vmem:[%s359 + $0x1a8] sm:$0xff]
      %v427 = vld [vmem:[%s359 + $0x1b0] sm:$0xff]
      %v428 = vld [vmem:[%s359 + $0x1b8] sm:$0xff]
      %v429 = vld [vmem:[%s359 + $0x1c0] sm:$0xff]
      %v430 = vld [vmem:[%s359 + $0x1c8] sm:$0xff]
      %v431 = vld [vmem:[%s359 + $0x1d0] sm:$0xff]
      %v432 = vld [vmem:[%s359 + $0x1d8] sm:$0xff]
      %v433 = vld [vmem:[%s359 + $0x1e0] sm:$0xff]
      %v434 = vld [vmem:[%s359 + $0x1e8] sm:$0xff]
      %v435 = vld [vmem:[%s359 + $0x1f0] sm:$0xff]
      %v436 = vld [vmem:[%s359 + $0x1f8] sm:$0xff]
      %v437 = vld [vmem:[%s359 + $0x200] sm:$0xff]
      %v438 = vld [vmem:[%s359 + $0x208] sm:$0xff]
      %v439 = vld [vmem:[%s359 + $0x210] sm:$0xff]
      %v440 = vld [vmem:[%s359 + $0x218] sm:$0xff]
      %v441 = vld [vmem:[%s359 + $0x220] sm:$0xff]
      %v442 = vld [vmem:[%s359 + $0x228] sm:$0xff]
      %v443 = vld [vmem:[%s359 + $0x230] sm:$0xff]
      %v444 = vld [vmem:[%s359 + $0x238] sm:$0xff]
      %v445 = vld [vmem:[%s359 + $0x240] sm:$0xff]
      %v446 = vld [vmem:[%s359 + $0x248] sm:$0xff]
      %v447 = vld [vmem:[%s359 + $0x250] sm:$0xff]
      %v448 = vld [vmem:[%s359 + $0x258] sm:$0xff]
      %v449 = vld [vmem:[%s359 + $0x260] sm:$0xff]
      %v450 = vld [vmem:[%s359 + $0x268] sm:$0xff]
      %v451 = vld [vmem:[%s359 + $0x270] sm:$0xff]
      %v452 = vld [vmem:[%s359 + $0x278] sm:$0xff]
      %v453 = vld [vmem:[%s359 + $0x280] sm:$0xff]
      %v454 = vld [vmem:[%s359 + $0x288] sm:$0xff]
      %v455 = vld [vmem:[%s359 + $0x290] sm:$0xff]
      %v456 = vld [vmem:[%s359 + $0x298] sm:$0xff]
      %v457 = vld [vmem:[%s359 + $0x2a0] sm:$0xff]
      %v458 = vld [vmem:[%s359 + $0x2a8] sm:$0xff]
      %v459 = vld [vmem:[%s359 + $0x2b0] sm:$0xff]
      %v460 = vld [vmem:[%s359 + $0x2b8] sm:$0xff]
      %v461 = vld [vmem:[%s359 + $0x2c0] sm:$0xff]
      %v462 = vld [vmem:[%s359 + $0x2c8] sm:$0xff]
      %v463 = vld [vmem:[%s359 + $0x2d0] sm:$0xff]
      %v464 = vld [vmem:[%s359 + $0x2d8] sm:$0xff]
      %v465 = vld [vmem:[%s359 + $0x2e0] sm:$0xff]
      %v466 = vld [vmem:[%s359 + $0x2e8] sm:$0xff]
      %v467 = vld [vmem:[%s359 + $0x2f0] sm:$0xff]
      %v468 = vld [vmem:[%s359 + $0x2f8] sm:$0xff]
      %v469 = vld [vmem:[%s359 + $0x300] sm:$0xff]
      %v470 = vld [vmem:[%s359 + $0x308] sm:$0xff]
      %v471 = vld [vmem:[%s359 + $0x310] sm:$0xff]
      %v472 = vld [vmem:[%s359 + $0x318] sm:$0xff]
      %v473 = vld [vmem:[%s2] sm:$0xff]
      %v474 = vld [vmem:[%s2 + $0x8] sm:$0xff]
      %476 = vset.pattern.permute.xlu0 0
      %477 = vperm.xlu0 %476, %v473
      %v478 = vpop.permute.xlu0 %477
      %481 = vset.pattern.permute.xlu0 0
      %482 = vperm.xlu0 %481, %v474
      %v483 = vpop.permute.xlu0 %482
      %v487 = vunpack.c.l.b16 %v371
      %v488 = vunpack.c.l.b16 %v372
      %v489 = vpack.c.b16 %v488, %v487
      %v590 = vunpack.c.l.b16 %v373
      %v591 = vunpack.c.h.b16 %v373
      %v592 = vunpack.c.l.b16 %v374
      %v593 = vunpack.c.h.b16 %v374
      %v594 = vunpack.c.l.b16 %v375
      %v595 = vunpack.c.h.b16 %v375
      %v596 = vunpack.c.l.b16 %v376
      %v597 = vunpack.c.h.b16 %v376
      %v598 = vunpack.c.l.b16 %v377
      %v599 = vunpack.c.h.b16 %v377
      %v600 = vunpack.c.l.b16 %v378
      %v601 = vunpack.c.h.b16 %v378
      %v602 = vunpack.c.l.b16 %v379
      %v603 = vunpack.c.h.b16 %v379
      %v604 = vunpack.c.l.b16 %v380
      %v605 = vunpack.c.h.b16 %v380
      %v606 = vunpack.c.l.b16 %v381
      %v607 = vunpack.c.h.b16 %v381
      %v608 = vunpack.c.l.b16 %v382
      %v609 = vunpack.c.h.b16 %v382
      %v610 = vunpack.c.l.b16 %v383
      %v611 = vunpack.c.h.b16 %v383
      %v612 = vunpack.c.l.b16 %v384
      %v613 = vunpack.c.h.b16 %v384
      %v614 = vunpack.c.l.b16 %v385
      %v615 = vunpack.c.h.b16 %v385
      %v616 = vunpack.c.l.b16 %v386
      %v617 = vunpack.c.h.b16 %v386
      %v618 = vunpack.c.l.b16 %v387
      %v619 = vunpack.c.h.b16 %v387
      %v620 = vunpack.c.l.b16 %v388
      %v621 = vunpack.c.h.b16 %v388
      %v622 = vunpack.c.l.b16 %v389
      %v623 = vunpack.c.h.b16 %v389
      %v624 = vunpack.c.l.b16 %v390
      %v625 = vunpack.c.h.b16 %v390
      %v626 = vunpack.c.l.b16 %v391
      %v627 = vunpack.c.h.b16 %v391
      %v628 = vunpack.c.l.b16 %v392
      %v629 = vunpack.c.h.b16 %v392
      %v630 = vunpack.c.l.b16 %v393
      %v631 = vunpack.c.h.b16 %v393
      %v632 = vunpack.c.l.b16 %v394
      %v633 = vunpack.c.h.b16 %v394
      %v634 = vunpack.c.l.b16 %v395
      %v635 = vunpack.c.h.b16 %v395
      %v636 = vunpack.c.l.b16 %v396
      %v637 = vunpack.c.h.b16 %v396
      %v638 = vunpack.c.l.b16 %v397
      %v639 = vunpack.c.h.b16 %v397
      %v640 = vunpack.c.l.b16 %v398
      %v641 = vunpack.c.h.b16 %v398
      %v642 = vunpack.c.l.b16 %v399
      %v643 = vunpack.c.h.b16 %v399
      %v644 = vunpack.c.l.b16 %v400
      %v645 = vunpack.c.h.b16 %v400
      %v646 = vunpack.c.l.b16 %v401
      %v647 = vunpack.c.h.b16 %v401
      %v648 = vunpack.c.l.b16 %v402
      %v649 = vunpack.c.h.b16 %v402
      %v650 = vunpack.c.l.b16 %v403
      %v651 = vunpack.c.h.b16 %v403
      %v652 = vunpack.c.l.b16 %v404
      %v653 = vunpack.c.h.b16 %v404
      %v654 = vunpack.c.l.b16 %v405
      %v655 = vunpack.c.h.b16 %v405
      %v656 = vunpack.c.l.b16 %v406
      %v657 = vunpack.c.h.b16 %v406
      %v658 = vunpack.c.l.b16 %v407
      %v659 = vunpack.c.h.b16 %v407
      %v660 = vunpack.c.l.b16 %v408
      %v661 = vunpack.c.h.b16 %v408
      %v662 = vunpack.c.l.b16 %v409
      %v663 = vunpack.c.h.b16 %v409
      %v664 = vunpack.c.l.b16 %v410
      %v665 = vunpack.c.h.b16 %v410
      %v666 = vunpack.c.l.b16 %v411
      %v667 = vunpack.c.h.b16 %v411
      %v668 = vunpack.c.l.b16 %v412
      %v669 = vunpack.c.h.b16 %v412
      %v670 = vunpack.c.l.b16 %v413
      %v671 = vunpack.c.h.b16 %v413
      %v672 = vunpack.c.l.b16 %v414
      %v673 = vunpack.c.h.b16 %v414
      %v674 = vunpack.c.l.b16 %v415
      %v675 = vunpack.c.h.b16 %v415
      %v676 = vunpack.c.l.b16 %v416
      %v677 = vunpack.c.h.b16 %v416
      %v678 = vunpack.c.l.b16 %v417
      %v679 = vunpack.c.h.b16 %v417
      %v680 = vunpack.c.l.b16 %v418
      %v681 = vunpack.c.h.b16 %v418
      %v682 = vunpack.c.l.b16 %v419
      %v683 = vunpack.c.h.b16 %v419
      %v684 = vunpack.c.l.b16 %v420
      %v685 = vunpack.c.h.b16 %v420
      %v686 = vunpack.c.l.b16 %v421
      %v687 = vunpack.c.h.b16 %v421
      %v688 = vunpack.c.l.b16 %v422
      %v689 = vunpack.c.h.b16 %v422
      %v690 = vunpack.c.l.b16 %v423
      %v691 = vunpack.c.h.b16 %v423
      %v692 = vunpack.c.l.b16 %v424
      %v693 = vunpack.c.h.b16 %v424
      %v694 = vunpack.c.l.b16 %v425
      %v695 = vunpack.c.h.b16 %v425
      %v696 = vunpack.c.l.b16 %v426
      %v697 = vunpack.c.h.b16 %v426
      %v698 = vunpack.c.l.b16 %v427
      %v699 = vunpack.c.h.b16 %v427
      %v700 = vunpack.c.l.b16 %v428
      %v701 = vunpack.c.h.b16 %v428
      %v702 = vunpack.c.l.b16 %v429
      %v703 = vunpack.c.h.b16 %v429
      %v704 = vunpack.c.l.b16 %v430
      %v705 = vunpack.c.h.b16 %v430
      %v706 = vunpack.c.l.b16 %v431
      %v707 = vunpack.c.h.b16 %v431
      %v708 = vunpack.c.l.b16 %v432
      %v709 = vunpack.c.h.b16 %v432
      %v710 = vunpack.c.l.b16 %v433
      %v711 = vunpack.c.h.b16 %v433
      %v712 = vunpack.c.l.b16 %v434
      %v713 = vunpack.c.h.b16 %v434
      %v714 = vunpack.c.l.b16 %v435
      %v715 = vunpack.c.h.b16 %v435
      %v716 = vunpack.c.l.b16 %v436
      %v717 = vunpack.c.h.b16 %v436
      %v718 = vunpack.c.l.b16 %v437
      %v719 = vunpack.c.h.b16 %v437
      %v720 = vunpack.c.l.b16 %v438
      %v721 = vunpack.c.h.b16 %v438
      %v722 = vunpack.c.l.b16 %v439
      %v723 = vunpack.c.h.b16 %v439
      %v724 = vunpack.c.l.b16 %v440
      %v725 = vunpack.c.h.b16 %v440
      %v726 = vunpack.c.l.b16 %v441
      %v727 = vunpack.c.h.b16 %v441
      %v728 = vunpack.c.l.b16 %v442
      %v729 = vunpack.c.h.b16 %v442
      %v730 = vunpack.c.l.b16 %v443
      %v731 = vunpack.c.h.b16 %v443
      %v732 = vunpack.c.l.b16 %v444
      %v733 = vunpack.c.h.b16 %v444
      %v734 = vunpack.c.l.b16 %v445
      %v735 = vunpack.c.h.b16 %v445
      %v736 = vunpack.c.l.b16 %v446
      %v737 = vunpack.c.h.b16 %v446
      %v738 = vunpack.c.l.b16 %v447
      %v739 = vunpack.c.h.b16 %v447
      %v740 = vunpack.c.l.b16 %v448
      %v741 = vunpack.c.h.b16 %v448
      %v742 = vunpack.c.l.b16 %v449
      %v743 = vunpack.c.h.b16 %v449
      %v744 = vunpack.c.l.b16 %v450
      %v745 = vunpack.c.h.b16 %v450
      %v746 = vunpack.c.l.b16 %v451
      %v747 = vunpack.c.h.b16 %v451
      %v748 = vunpack.c.l.b16 %v452
      %v749 = vunpack.c.h.b16 %v452
      %v750 = vunpack.c.l.b16 %v453
      %v751 = vunpack.c.h.b16 %v453
      %v752 = vunpack.c.l.b16 %v454
      %v753 = vunpack.c.h.b16 %v454
      %v754 = vunpack.c.l.b16 %v455
      %v755 = vunpack.c.h.b16 %v455
      %v756 = vunpack.c.l.b16 %v456
      %v757 = vunpack.c.h.b16 %v456
      %v758 = vunpack.c.l.b16 %v457
      %v759 = vunpack.c.h.b16 %v457
      %v760 = vunpack.c.l.b16 %v458
      %v761 = vunpack.c.h.b16 %v458
      %v762 = vunpack.c.l.b16 %v459
      %v763 = vunpack.c.h.b16 %v459
      %v764 = vunpack.c.l.b16 %v460
      %v765 = vunpack.c.h.b16 %v460
      %v766 = vunpack.c.l.b16 %v461
      %v767 = vunpack.c.h.b16 %v461
      %v768 = vunpack.c.l.b16 %v462
      %v769 = vunpack.c.h.b16 %v462
      %v770 = vunpack.c.l.b16 %v463
      %v771 = vunpack.c.h.b16 %v463
      %v772 = vunpack.c.l.b16 %v464
      %v773 = vunpack.c.h.b16 %v464
      %v774 = vunpack.c.l.b16 %v465
      %v775 = vunpack.c.h.b16 %v465
      %v776 = vunpack.c.l.b16 %v466
      %v777 = vunpack.c.h.b16 %v466
      %v778 = vunpack.c.l.b16 %v467
      %v779 = vunpack.c.h.b16 %v467
      %v780 = vunpack.c.l.b16 %v468
      %v781 = vunpack.c.h.b16 %v468
      %v782 = vunpack.c.l.b16 %v469
      %v783 = vunpack.c.h.b16 %v469
      %v784 = vunpack.c.l.b16 %v470
      %v785 = vunpack.c.h.b16 %v470
      %v786 = vunpack.c.l.b16 %v471
      %v787 = vunpack.c.h.b16 %v471
      %v788 = vunpack.c.l.b16 %v472
      %v789 = vunpack.c.h.b16 %v472
      %v790 = vpack.c.b16 %v640, %v590
      %v791 = vpack.c.b16 %v641, %v591
      %v792 = vpack.c.b16 %v642, %v592
      %v793 = vpack.c.b16 %v643, %v593
      %v794 = vpack.c.b16 %v644, %v594
      %v795 = vpack.c.b16 %v645, %v595
      %v796 = vpack.c.b16 %v646, %v596
      %v797 = vpack.c.b16 %v647, %v597
      %v798 = vpack.c.b16 %v648, %v598
      %v799 = vpack.c.b16 %v649, %v599
      %v800 = vpack.c.b16 %v650, %v600
      %v801 = vpack.c.b16 %v651, %v601
      %v802 = vpack.c.b16 %v652, %v602
      %v803 = vpack.c.b16 %v653, %v603
      %v804 = vpack.c.b16 %v654, %v604
      %v805 = vpack.c.b16 %v655, %v605
      %v806 = vpack.c.b16 %v656, %v606
      %v807 = vpack.c.b16 %v657, %v607
      %v808 = vpack.c.b16 %v658, %v608
      %v809 = vpack.c.b16 %v659, %v609
      %v810 = vpack.c.b16 %v660, %v610
      %v811 = vpack.c.b16 %v661, %v611
      %v812 = vpack.c.b16 %v662, %v612
      %v813 = vpack.c.b16 %v663, %v613
      %v814 = vpack.c.b16 %v664, %v614
      %v815 = vpack.c.b16 %v665, %v615
      %v816 = vpack.c.b16 %v666, %v616
      %v817 = vpack.c.b16 %v667, %v617
      %v818 = vpack.c.b16 %v668, %v618
      %v819 = vpack.c.b16 %v669, %v619
      %v820 = vpack.c.b16 %v670, %v620
      %v821 = vpack.c.b16 %v671, %v621
      %v822 = vpack.c.b16 %v672, %v622
      %v823 = vpack.c.b16 %v673, %v623
      %v824 = vpack.c.b16 %v674, %v624
      %v825 = vpack.c.b16 %v675, %v625
      %v826 = vpack.c.b16 %v676, %v626
      %v827 = vpack.c.b16 %v677, %v627
      %v828 = vpack.c.b16 %v678, %v628
      %v829 = vpack.c.b16 %v679, %v629
      %v830 = vpack.c.b16 %v680, %v630
      %v831 = vpack.c.b16 %v681, %v631
      %v832 = vpack.c.b16 %v682, %v632
      %v833 = vpack.c.b16 %v683, %v633
      %v834 = vpack.c.b16 %v684, %v634
      %v835 = vpack.c.b16 %v685, %v635
      %v836 = vpack.c.b16 %v686, %v636
      %v837 = vpack.c.b16 %v687, %v637
      %v838 = vpack.c.b16 %v688, %v638
      %v839 = vpack.c.b16 %v689, %v639
      %v840 = vpack.c.b16 %v740, %v690
      %v841 = vpack.c.b16 %v741, %v691
      %v842 = vpack.c.b16 %v742, %v692
      %v843 = vpack.c.b16 %v743, %v693
      %v844 = vpack.c.b16 %v744, %v694
      %v845 = vpack.c.b16 %v745, %v695
      %v846 = vpack.c.b16 %v746, %v696
      %v847 = vpack.c.b16 %v747, %v697
      %v848 = vpack.c.b16 %v748, %v698
      %v849 = vpack.c.b16 %v749, %v699
      %v850 = vpack.c.b16 %v750, %v700
      %v851 = vpack.c.b16 %v751, %v701
      %v852 = vpack.c.b16 %v752, %v702
      %v853 = vpack.c.b16 %v753, %v703
      %v854 = vpack.c.b16 %v754, %v704
      %v855 = vpack.c.b16 %v755, %v705
      %v856 = vpack.c.b16 %v756, %v706
      %v857 = vpack.c.b16 %v757, %v707
      %v858 = vpack.c.b16 %v758, %v708
      %v859 = vpack.c.b16 %v759, %v709
      %v860 = vpack.c.b16 %v760, %v710
      %v861 = vpack.c.b16 %v761, %v711
      %v862 = vpack.c.b16 %v762, %v712
      %v863 = vpack.c.b16 %v763, %v713
      %v864 = vpack.c.b16 %v764, %v714
      %v865 = vpack.c.b16 %v765, %v715
      %v866 = vpack.c.b16 %v766, %v716
      %v867 = vpack.c.b16 %v767, %v717
      %v868 = vpack.c.b16 %v768, %v718
      %v869 = vpack.c.b16 %v769, %v719
      %v870 = vpack.c.b16 %v770, %v720
      %v871 = vpack.c.b16 %v771, %v721
      %v872 = vpack.c.b16 %v772, %v722
      %v873 = vpack.c.b16 %v773, %v723
      %v874 = vpack.c.b16 %v774, %v724
      %v875 = vpack.c.b16 %v775, %v725
      %v876 = vpack.c.b16 %v776, %v726
      %v877 = vpack.c.b16 %v777, %v727
      %v878 = vpack.c.b16 %v778, %v728
      %v879 = vpack.c.b16 %v779, %v729
      %v880 = vpack.c.b16 %v780, %v730
      %v881 = vpack.c.b16 %v781, %v731
      %v882 = vpack.c.b16 %v782, %v732
      %v883 = vpack.c.b16 %v783, %v733
      %v884 = vpack.c.b16 %v784, %v734
      %v885 = vpack.c.b16 %v785, %v735
      %v886 = vpack.c.b16 %v786, %v736
      %v887 = vpack.c.b16 %v787, %v737
      %v888 = vpack.c.b16 %v788, %v738
      %v889 = vpack.c.b16 %v789, %v739
      %vm990 = vcmask 261120
      %v992 = vsel %vm990, %v489, 0
      %994 = vmatpush.bf16.msra.mxu0 0
      %995 = vmatpush.bf16.msra.mxu0 0
      %996 = vmatpush.bf16.msra.mxu0 0
      %997 = vmatpush.bf16.msra.mxu0 0
      %998 = vmatpush.bf16.msra.mxu0 0
      %999 = vmatpush.bf16.msra.mxu0 0
      %1000 = vmatpush.bf16.msra.mxu0 %v840
      %1001 = vmatpush.bf16.msra.mxu0 %v790
      %1002 = vmatmul.bf16.gmra.mxu0 %v992
      %v1003 = vpop.f32.mrf.mxu0
      %v1004 = vadd.f32 %v478, %v1003
      %v1005 = vpop.f32.mrf.mxu0
      %v1006 = vadd.f32 %v483, %v1005
      %1007 = vdwg.mxu0
      %1008 = vmatpush.bf16.msra.mxu0 0
      %1009 = vmatpush.bf16.msra.mxu0 0
      %1010 = vmatpush.bf16.msra.mxu0 0
      %1011 = vmatpush.bf16.msra.mxu0 0
      %1012 = vmatpush.bf16.msra.mxu0 0
      %1013 = vmatpush.bf16.msra.mxu0 0
      %1014 = vmatpush.bf16.msra.mxu0 %v841
      %1015 = vmatpush.bf16.msra.mxu0 %v791
      %1016 = vmatmul.bf16.gmra.mxu0 %v992
      %v1017 = vpop.f32.mrf.mxu0
      %v1018 = vadd.f32 %v478, %v1017
      %v1019 = vpop.f32.mrf.mxu0
      %v1020 = vadd.f32 %v483, %v1019
      %1021 = vdwg.mxu0
      %1022 = vmatpush.bf16.msra.mxu0 0
      %1023 = vmatpush.bf16.msra.mxu0 0
      %1024 = vmatpush.bf16.msra.mxu0 0
      %1025 = vmatpush.bf16.msra.mxu0 0
      %1026 = vmatpush.bf16.msra.mxu0 0
      %1027 = vmatpush.bf16.msra.mxu0 0
      %1028 = vmatpush.bf16.msra.mxu0 %v842
      %1029 = vmatpush.bf16.msra.mxu0 %v792
      %1030 = vmatmul.bf16.gmra.mxu0 %v992
      %v1031 = vpop.f32.mrf.mxu0
      %v1032 = vadd.f32 %v478, %v1031
      %v1033 = vpop.f32.mrf.mxu0
      %v1034 = vadd.f32 %v483, %v1033
      %1035 = vdwg.mxu0
      %1036 = vmatpush.bf16.msra.mxu0 0
      %1037 = vmatpush.bf16.msra.mxu0 0
      %1038 = vmatpush.bf16.msra.mxu0 0
      %1039 = vmatpush.bf16.msra.mxu0 0
      %1040 = vmatpush.bf16.msra.mxu0 0
      %1041 = vmatpush.bf16.msra.mxu0 0
      %1042 = vmatpush.bf16.msra.mxu0 %v843
      %1043 = vmatpush.bf16.msra.mxu0 %v793
      %1044 = vmatmul.bf16.gmra.mxu0 %v992
      %v1045 = vpop.f32.mrf.mxu0
      %v1046 = vadd.f32 %v478, %v1045
      %v1047 = vpop.f32.mrf.mxu0
      %v1048 = vadd.f32 %v483, %v1047
      %1049 = vdwg.mxu0
      %1050 = vmatpush.bf16.msra.mxu0 0
      %1051 = vmatpush.bf16.msra.mxu0 0
      %1052 = vmatpush.bf16.msra.mxu0 0
      %1053 = vmatpush.bf16.msra.mxu0 0
      %1054 = vmatpush.bf16.msra.mxu0 0
      %1055 = vmatpush.bf16.msra.mxu0 0
      %1056 = vmatpush.bf16.msra.mxu0 %v844
      %1057 = vmatpush.bf16.msra.mxu0 %v794
      %1058 = vmatmul.bf16.gmra.mxu0 %v992
      %v1059 = vpop.f32.mrf.mxu0
      %v1060 = vadd.f32 %v478, %v1059
      %v1061 = vpop.f32.mrf.mxu0
      %v1062 = vadd.f32 %v483, %v1061
      %1063 = vdwg.mxu0
      %1064 = vmatpush.bf16.msra.mxu0 0
      %1065 = vmatpush.bf16.msra.mxu0 0
      %1066 = vmatpush.bf16.msra.mxu0 0
      %1067 = vmatpush.bf16.msra.mxu0 0
      %1068 = vmatpush.bf16.msra.mxu0 0
      %1069 = vmatpush.bf16.msra.mxu0 0
      %1070 = vmatpush.bf16.msra.mxu0 %v845
      %1071 = vmatpush.bf16.msra.mxu0 %v795
      %1072 = vmatmul.bf16.gmra.mxu0 %v992
      %v1073 = vpop.f32.mrf.mxu0
      %v1074 = vadd.f32 %v478, %v1073
      %v1075 = vpop.f32.mrf.mxu0
      %v1076 = vadd.f32 %v483, %v1075
      %1077 = vdwg.mxu0
      %1078 = vmatpush.bf16.msra.mxu0 0
      %1079 = vmatpush.bf16.msra.mxu0 0
      %1080 = vmatpush.bf16.msra.mxu0 0
      %1081 = vmatpush.bf16.msra.mxu0 0
      %1082 = vmatpush.bf16.msra.mxu0 0
      %1083 = vmatpush.bf16.msra.mxu0 0
      %1084 = vmatpush.bf16.msra.mxu0 %v846
      %1085 = vmatpush.bf16.msra.mxu0 %v796
      %1086 = vmatmul.bf16.gmra.mxu0 %v992
      %v1087 = vpop.f32.mrf.mxu0
      %v1088 = vadd.f32 %v478, %v1087
      %v1089 = vpop.f32.mrf.mxu0
      %v1090 = vadd.f32 %v483, %v1089
      %1091 = vdwg.mxu0
      %1092 = vmatpush.bf16.msra.mxu0 0
      %1093 = vmatpush.bf16.msra.mxu0 0
      %1094 = vmatpush.bf16.msra.mxu0 0
      %1095 = vmatpush.bf16.msra.mxu0 0
      %1096 = vmatpush.bf16.msra.mxu0 0
      %1097 = vmatpush.bf16.msra.mxu0 0
      %1098 = vmatpush.bf16.msra.mxu0 %v847
      %1099 = vmatpush.bf16.msra.mxu0 %v797
      %1100 = vmatmul.bf16.gmra.mxu0 %v992
      %v1101 = vpop.f32.mrf.mxu0
      %v1102 = vadd.f32 %v478, %v1101
      %v1103 = vpop.f32.mrf.mxu0
      %v1104 = vadd.f32 %v483, %v1103
      %1105 = vdwg.mxu0
      %1106 = vmatpush.bf16.msra.mxu0 0
      %1107 = vmatpush.bf16.msra.mxu0 0
      %1108 = vmatpush.bf16.msra.mxu0 0
      %1109 = vmatpush.bf16.msra.mxu0 0
      %1110 = vmatpush.bf16.msra.mxu0 0
      %1111 = vmatpush.bf16.msra.mxu0 0
      %1112 = vmatpush.bf16.msra.mxu0 %v848
      %1113 = vmatpush.bf16.msra.mxu0 %v798
      %1114 = vmatmul.bf16.gmra.mxu0 %v992
      %v1115 = vpop.f32.mrf.mxu0
      %v1116 = vadd.f32 %v478, %v1115
      %v1117 = vpop.f32.mrf.mxu0
      %v1118 = vadd.f32 %v483, %v1117
      %1119 = vdwg.mxu0
      %1120 = vmatpush.bf16.msra.mxu0 0
      %1121 = vmatpush.bf16.msra.mxu0 0
      %1122 = vmatpush.bf16.msra.mxu0 0
      %1123 = vmatpush.bf16.msra.mxu0 0
      %1124 = vmatpush.bf16.msra.mxu0 0
      %1125 = vmatpush.bf16.msra.mxu0 0
      %1126 = vmatpush.bf16.msra.mxu0 %v849
      %1127 = vmatpush.bf16.msra.mxu0 %v799
      %1128 = vmatmul.bf16.gmra.mxu0 %v992
      %v1129 = vpop.f32.mrf.mxu0
      %v1130 = vadd.f32 %v478, %v1129
      %v1131 = vpop.f32.mrf.mxu0
      %v1132 = vadd.f32 %v483, %v1131
      %1133 = vdwg.mxu0
      %1134 = vmatpush.bf16.msra.mxu0 0
      %1135 = vmatpush.bf16.msra.mxu0 0
      %1136 = vmatpush.bf16.msra.mxu0 0
      %1137 = vmatpush.bf16.msra.mxu0 0
      %1138 = vmatpush.bf16.msra.mxu0 0
      %1139 = vmatpush.bf16.msra.mxu0 0
      %1140 = vmatpush.bf16.msra.mxu0 %v850
      %1141 = vmatpush.bf16.msra.mxu0 %v800
      %1142 = vmatmul.bf16.gmra.mxu0 %v992
      %v1143 = vpop.f32.mrf.mxu0
      %v1144 = vadd.f32 %v478, %v1143
      %v1145 = vpop.f32.mrf.mxu0
      %v1146 = vadd.f32 %v483, %v1145
      %1147 = vdwg.mxu0
      %1148 = vmatpush.bf16.msra.mxu0 0
      %1149 = vmatpush.bf16.msra.mxu0 0
      %1150 = vmatpush.bf16.msra.mxu0 0
      %1151 = vmatpush.bf16.msra.mxu0 0
      %1152 = vmatpush.bf16.msra.mxu0 0
      %1153 = vmatpush.bf16.msra.mxu0 0
      %1154 = vmatpush.bf16.msra.mxu0 %v851
      %1155 = vmatpush.bf16.msra.mxu0 %v801
      %1156 = vmatmul.bf16.gmra.mxu0 %v992
      %v1157 = vpop.f32.mrf.mxu0
      %v1158 = vadd.f32 %v478, %v1157
      %v1159 = vpop.f32.mrf.mxu0
      %v1160 = vadd.f32 %v483, %v1159
      %1161 = vdwg.mxu0
      %1162 = vmatpush.bf16.msra.mxu0 0
      %1163 = vmatpush.bf16.msra.mxu0 0
      %1164 = vmatpush.bf16.msra.mxu0 0
      %1165 = vmatpush.bf16.msra.mxu0 0
      %1166 = vmatpush.bf16.msra.mxu0 0
      %1167 = vmatpush.bf16.msra.mxu0 0
      %1168 = vmatpush.bf16.msra.mxu0 %v852
      %1169 = vmatpush.bf16.msra.mxu0 %v802
      %1170 = vmatmul.bf16.gmra.mxu0 %v992
      %v1171 = vpop.f32.mrf.mxu0
      %v1172 = vadd.f32 %v478, %v1171
      %v1173 = vpop.f32.mrf.mxu0
      %v1174 = vadd.f32 %v483, %v1173
      %1175 = vdwg.mxu0
      %1176 = vmatpush.bf16.msra.mxu0 0
      %1177 = vmatpush.bf16.msra.mxu0 0
      %1178 = vmatpush.bf16.msra.mxu0 0
      %1179 = vmatpush.bf16.msra.mxu0 0
      %1180 = vmatpush.bf16.msra.mxu0 0
      %1181 = vmatpush.bf16.msra.mxu0 0
      %1182 = vmatpush.bf16.msra.mxu0 %v853
      %1183 = vmatpush.bf16.msra.mxu0 %v803
      %1184 = vmatmul.bf16.gmra.mxu0 %v992
      %v1185 = vpop.f32.mrf.mxu0
      %v1186 = vadd.f32 %v478, %v1185
      %v1187 = vpop.f32.mrf.mxu0
      %v1188 = vadd.f32 %v483, %v1187
      %1189 = vdwg.mxu0
      %1190 = vmatpush.bf16.msra.mxu0 0
      %1191 = vmatpush.bf16.msra.mxu0 0
      %1192 = vmatpush.bf16.msra.mxu0 0
      %1193 = vmatpush.bf16.msra.mxu0 0
      %1194 = vmatpush.bf16.msra.mxu0 0
      %1195 = vmatpush.bf16.msra.mxu0 0
      %1196 = vmatpush.bf16.msra.mxu0 %v854
      %1197 = vmatpush.bf16.msra.mxu0 %v804
      %1198 = vmatmul.bf16.gmra.mxu0 %v992
      %v1199 = vpop.f32.mrf.mxu0
      %v1200 = vadd.f32 %v478, %v1199
      %v1201 = vpop.f32.mrf.mxu0
      %v1202 = vadd.f32 %v483, %v1201
      %1203 = vdwg.mxu0
      %1204 = vmatpush.bf16.msra.mxu0 0
      %1205 = vmatpush.bf16.msra.mxu0 0
      %1206 = vmatpush.bf16.msra.mxu0 0
      %1207 = vmatpush.bf16.msra.mxu0 0
      %1208 = vmatpush.bf16.msra.mxu0 0
      %1209 = vmatpush.bf16.msra.mxu0 0
      %1210 = vmatpush.bf16.msra.mxu0 %v855
      %1211 = vmatpush.bf16.msra.mxu0 %v805
      %1212 = vmatmul.bf16.gmra.mxu0 %v992
      %v1213 = vpop.f32.mrf.mxu0
      %v1214 = vadd.f32 %v478, %v1213
      %v1215 = vpop.f32.mrf.mxu0
      %v1216 = vadd.f32 %v483, %v1215
      %1217 = vdwg.mxu0
      %1218 = vmatpush.bf16.msra.mxu0 0
      %1219 = vmatpush.bf16.msra.mxu0 0
      %1220 = vmatpush.bf16.msra.mxu0 0
      %1221 = vmatpush.bf16.msra.mxu0 0
      %1222 = vmatpush.bf16.msra.mxu0 0
      %1223 = vmatpush.bf16.msra.mxu0 0
      %1224 = vmatpush.bf16.msra.mxu0 %v856
      %1225 = vmatpush.bf16.msra.mxu0 %v806
      %1226 = vmatmul.bf16.gmra.mxu0 %v992
      %v1227 = vpop.f32.mrf.mxu0
      %v1228 = vadd.f32 %v478, %v1227
      %v1229 = vpop.f32.mrf.mxu0
      %v1230 = vadd.f32 %v483, %v1229
      %1231 = vdwg.mxu0
      %1232 = vmatpush.bf16.msra.mxu0 0
      %1233 = vmatpush.bf16.msra.mxu0 0
      %1234 = vmatpush.bf16.msra.mxu0 0
      %1235 = vmatpush.bf16.msra.mxu0 0
      %1236 = vmatpush.bf16.msra.mxu0 0
      %1237 = vmatpush.bf16.msra.mxu0 0
      %1238 = vmatpush.bf16.msra.mxu0 %v857
      %1239 = vmatpush.bf16.msra.mxu0 %v807
      %1240 = vmatmul.bf16.gmra.mxu0 %v992
      %v1241 = vpop.f32.mrf.mxu0
      %v1242 = vadd.f32 %v478, %v1241
      %v1243 = vpop.f32.mrf.mxu0
      %v1244 = vadd.f32 %v483, %v1243
      %1245 = vdwg.mxu0
      %1246 = vmatpush.bf16.msra.mxu0 0
      %1247 = vmatpush.bf16.msra.mxu0 0
      %1248 = vmatpush.bf16.msra.mxu0 0
      %1249 = vmatpush.bf16.msra.mxu0 0
      %1250 = vmatpush.bf16.msra.mxu0 0
      %1251 = vmatpush.bf16.msra.mxu0 0
      %1252 = vmatpush.bf16.msra.mxu0 %v858
      %1253 = vmatpush.bf16.msra.mxu0 %v808
      %1254 = vmatmul.bf16.gmra.mxu0 %v992
      %v1255 = vpop.f32.mrf.mxu0
      %v1256 = vadd.f32 %v478, %v1255
      %v1257 = vpop.f32.mrf.mxu0
      %v1258 = vadd.f32 %v483, %v1257
      %1259 = vdwg.mxu0
      %1260 = vmatpush.bf16.msra.mxu0 0
      %1261 = vmatpush.bf16.msra.mxu0 0
      %1262 = vmatpush.bf16.msra.mxu0 0
      %1263 = vmatpush.bf16.msra.mxu0 0
      %1264 = vmatpush.bf16.msra.mxu0 0
      %1265 = vmatpush.bf16.msra.mxu0 0
      %1266 = vmatpush.bf16.msra.mxu0 %v859
      %1267 = vmatpush.bf16.msra.mxu0 %v809
      %1268 = vmatmul.bf16.gmra.mxu0 %v992
      %v1269 = vpop.f32.mrf.mxu0
      %v1270 = vadd.f32 %v478, %v1269
      %v1271 = vpop.f32.mrf.mxu0
      %v1272 = vadd.f32 %v483, %v1271
      %1273 = vdwg.mxu0
      %1274 = vmatpush.bf16.msra.mxu0 0
      %1275 = vmatpush.bf16.msra.mxu0 0
      %1276 = vmatpush.bf16.msra.mxu0 0
      %1277 = vmatpush.bf16.msra.mxu0 0
      %1278 = vmatpush.bf16.msra.mxu0 0
      %1279 = vmatpush.bf16.msra.mxu0 0
      %1280 = vmatpush.bf16.msra.mxu0 %v860
      %1281 = vmatpush.bf16.msra.mxu0 %v810
      %1282 = vmatmul.bf16.gmra.mxu0 %v992
      %v1283 = vpop.f32.mrf.mxu0
      %v1284 = vadd.f32 %v478, %v1283
      %v1285 = vpop.f32.mrf.mxu0
      %v1286 = vadd.f32 %v483, %v1285
      %1287 = vdwg.mxu0
      %1288 = vmatpush.bf16.msra.mxu0 0
      %1289 = vmatpush.bf16.msra.mxu0 0
      %1290 = vmatpush.bf16.msra.mxu0 0
      %1291 = vmatpush.bf16.msra.mxu0 0
      %1292 = vmatpush.bf16.msra.mxu0 0
      %1293 = vmatpush.bf16.msra.mxu0 0
      %1294 = vmatpush.bf16.msra.mxu0 %v861
      %1295 = vmatpush.bf16.msra.mxu0 %v811
      %1296 = vmatmul.bf16.gmra.mxu0 %v992
      %v1297 = vpop.f32.mrf.mxu0
      %v1298 = vadd.f32 %v478, %v1297
      %v1299 = vpop.f32.mrf.mxu0
      %v1300 = vadd.f32 %v483, %v1299
      %1301 = vdwg.mxu0
      %1302 = vmatpush.bf16.msra.mxu0 0
      %1303 = vmatpush.bf16.msra.mxu0 0
      %1304 = vmatpush.bf16.msra.mxu0 0
      %1305 = vmatpush.bf16.msra.mxu0 0
      %1306 = vmatpush.bf16.msra.mxu0 0
      %1307 = vmatpush.bf16.msra.mxu0 0
      %1308 = vmatpush.bf16.msra.mxu0 %v862
      %1309 = vmatpush.bf16.msra.mxu0 %v812
      %1310 = vmatmul.bf16.gmra.mxu0 %v992
      %v1311 = vpop.f32.mrf.mxu0
      %v1312 = vadd.f32 %v478, %v1311
      %v1313 = vpop.f32.mrf.mxu0
      %v1314 = vadd.f32 %v483, %v1313
      %1315 = vdwg.mxu0
      %1316 = vmatpush.bf16.msra.mxu0 0
      %1317 = vmatpush.bf16.msra.mxu0 0
      %1318 = vmatpush.bf16.msra.mxu0 0
      %1319 = vmatpush.bf16.msra.mxu0 0
      %1320 = vmatpush.bf16.msra.mxu0 0
      %1321 = vmatpush.bf16.msra.mxu0 0
      %1322 = vmatpush.bf16.msra.mxu0 %v863
      %1323 = vmatpush.bf16.msra.mxu0 %v813
      %1324 = vmatmul.bf16.gmra.mxu0 %v992
      %v1325 = vpop.f32.mrf.mxu0
      %v1326 = vadd.f32 %v478, %v1325
      %v1327 = vpop.f32.mrf.mxu0
      %v1328 = vadd.f32 %v483, %v1327
      %1329 = vdwg.mxu0
      %1330 = vmatpush.bf16.msra.mxu0 0
      %1331 = vmatpush.bf16.msra.mxu0 0
      %1332 = vmatpush.bf16.msra.mxu0 0
      %1333 = vmatpush.bf16.msra.mxu0 0
      %1334 = vmatpush.bf16.msra.mxu0 0
      %1335 = vmatpush.bf16.msra.mxu0 0
      %1336 = vmatpush.bf16.msra.mxu0 %v864
      %1337 = vmatpush.bf16.msra.mxu0 %v814
      %1338 = vmatmul.bf16.gmra.mxu0 %v992
      %v1339 = vpop.f32.mrf.mxu0
      %v1340 = vadd.f32 %v478, %v1339
      %v1341 = vpop.f32.mrf.mxu0
      %v1342 = vadd.f32 %v483, %v1341
      %1343 = vdwg.mxu0
      %1344 = vmatpush.bf16.msra.mxu0 0
      %1345 = vmatpush.bf16.msra.mxu0 0
      %1346 = vmatpush.bf16.msra.mxu0 0
      %1347 = vmatpush.bf16.msra.mxu0 0
      %1348 = vmatpush.bf16.msra.mxu0 0
      %1349 = vmatpush.bf16.msra.mxu0 0
      %1350 = vmatpush.bf16.msra.mxu0 %v865
      %1351 = vmatpush.bf16.msra.mxu0 %v815
      %1352 = vmatmul.bf16.gmra.mxu0 %v992
      %v1353 = vpop.f32.mrf.mxu0
      %v1354 = vadd.f32 %v478, %v1353
      %v1355 = vpop.f32.mrf.mxu0
      %v1356 = vadd.f32 %v483, %v1355
      %1357 = vdwg.mxu0
      %1358 = vmatpush.bf16.msra.mxu0 0
      %1359 = vmatpush.bf16.msra.mxu0 0
      %1360 = vmatpush.bf16.msra.mxu0 0
      %1361 = vmatpush.bf16.msra.mxu0 0
      %1362 = vmatpush.bf16.msra.mxu0 0
      %1363 = vmatpush.bf16.msra.mxu0 0
      %1364 = vmatpush.bf16.msra.mxu0 %v866
      %1365 = vmatpush.bf16.msra.mxu0 %v816
      %1366 = vmatmul.bf16.gmra.mxu0 %v992
      %v1367 = vpop.f32.mrf.mxu0
      %v1368 = vadd.f32 %v478, %v1367
      %v1369 = vpop.f32.mrf.mxu0
      %v1370 = vadd.f32 %v483, %v1369
      %1371 = vdwg.mxu0
      %1372 = vmatpush.bf16.msra.mxu0 0
      %1373 = vmatpush.bf16.msra.mxu0 0
      %1374 = vmatpush.bf16.msra.mxu0 0
      %1375 = vmatpush.bf16.msra.mxu0 0
      %1376 = vmatpush.bf16.msra.mxu0 0
      %1377 = vmatpush.bf16.msra.mxu0 0
      %1378 = vmatpush.bf16.msra.mxu0 %v867
      %1379 = vmatpush.bf16.msra.mxu0 %v817
      %1380 = vmatmul.bf16.gmra.mxu0 %v992
      %v1381 = vpop.f32.mrf.mxu0
      %v1382 = vadd.f32 %v478, %v1381
      %v1383 = vpop.f32.mrf.mxu0
      %v1384 = vadd.f32 %v483, %v1383
      %1385 = vdwg.mxu0
      %1386 = vmatpush.bf16.msra.mxu0 0
      %1387 = vmatpush.bf16.msra.mxu0 0
      %1388 = vmatpush.bf16.msra.mxu0 0
      %1389 = vmatpush.bf16.msra.mxu0 0
      %1390 = vmatpush.bf16.msra.mxu0 0
      %1391 = vmatpush.bf16.msra.mxu0 0
      %1392 = vmatpush.bf16.msra.mxu0 %v868
      %1393 = vmatpush.bf16.msra.mxu0 %v818
      %1394 = vmatmul.bf16.gmra.mxu0 %v992
      %v1395 = vpop.f32.mrf.mxu0
      %v1396 = vadd.f32 %v478, %v1395
      %v1397 = vpop.f32.mrf.mxu0
      %v1398 = vadd.f32 %v483, %v1397
      %1399 = vdwg.mxu0
      %1400 = vmatpush.bf16.msra.mxu0 0
      %1401 = vmatpush.bf16.msra.mxu0 0
      %1402 = vmatpush.bf16.msra.mxu0 0
      %1403 = vmatpush.bf16.msra.mxu0 0
      %1404 = vmatpush.bf16.msra.mxu0 0
      %1405 = vmatpush.bf16.msra.mxu0 0
      %1406 = vmatpush.bf16.msra.mxu0 %v869
      %1407 = vmatpush.bf16.msra.mxu0 %v819
      %1408 = vmatmul.bf16.gmra.mxu0 %v992
      %v1409 = vpop.f32.mrf.mxu0
      %v1410 = vadd.f32 %v478, %v1409
      %v1411 = vpop.f32.mrf.mxu0
      %v1412 = vadd.f32 %v483, %v1411
      %1413 = vdwg.mxu0
      %1414 = vmatpush.bf16.msra.mxu0 0
      %1415 = vmatpush.bf16.msra.mxu0 0
      %1416 = vmatpush.bf16.msra.mxu0 0
      %1417 = vmatpush.bf16.msra.mxu0 0
      %1418 = vmatpush.bf16.msra.mxu0 0
      %1419 = vmatpush.bf16.msra.mxu0 0
      %1420 = vmatpush.bf16.msra.mxu0 %v870
      %1421 = vmatpush.bf16.msra.mxu0 %v820
      %1422 = vmatmul.bf16.gmra.mxu0 %v992
      %v1423 = vpop.f32.mrf.mxu0
      %v1424 = vadd.f32 %v478, %v1423
      %v1425 = vpop.f32.mrf.mxu0
      %v1426 = vadd.f32 %v483, %v1425
      %1427 = vdwg.mxu0
      %1428 = vmatpush.bf16.msra.mxu0 0
      %1429 = vmatpush.bf16.msra.mxu0 0
      %1430 = vmatpush.bf16.msra.mxu0 0
      %1431 = vmatpush.bf16.msra.mxu0 0
      %1432 = vmatpush.bf16.msra.mxu0 0
      %1433 = vmatpush.bf16.msra.mxu0 0
      %1434 = vmatpush.bf16.msra.mxu0 %v871
      %1435 = vmatpush.bf16.msra.mxu0 %v821
      %1436 = vmatmul.bf16.gmra.mxu0 %v992
      %v1437 = vpop.f32.mrf.mxu0
      %v1438 = vadd.f32 %v478, %v1437
      %v1439 = vpop.f32.mrf.mxu0
      %v1440 = vadd.f32 %v483, %v1439
      %1441 = vdwg.mxu0
      %1442 = vmatpush.bf16.msra.mxu0 0
      %1443 = vmatpush.bf16.msra.mxu0 0
      %1444 = vmatpush.bf16.msra.mxu0 0
      %1445 = vmatpush.bf16.msra.mxu0 0
      %1446 = vmatpush.bf16.msra.mxu0 0
      %1447 = vmatpush.bf16.msra.mxu0 0
      %1448 = vmatpush.bf16.msra.mxu0 %v872
      %1449 = vmatpush.bf16.msra.mxu0 %v822
      %1450 = vmatmul.bf16.gmra.mxu0 %v992
      %v1451 = vpop.f32.mrf.mxu0
      %v1452 = vadd.f32 %v478, %v1451
      %v1453 = vpop.f32.mrf.mxu0
      %v1454 = vadd.f32 %v483, %v1453
      %1455 = vdwg.mxu0
      %1456 = vmatpush.bf16.msra.mxu0 0
      %1457 = vmatpush.bf16.msra.mxu0 0
      %1458 = vmatpush.bf16.msra.mxu0 0
      %1459 = vmatpush.bf16.msra.mxu0 0
      %1460 = vmatpush.bf16.msra.mxu0 0
      %1461 = vmatpush.bf16.msra.mxu0 0
      %1462 = vmatpush.bf16.msra.mxu0 %v873
      %1463 = vmatpush.bf16.msra.mxu0 %v823
      %1464 = vmatmul.bf16.gmra.mxu0 %v992
      %v1465 = vpop.f32.mrf.mxu0
      %v1466 = vadd.f32 %v478, %v1465
      %v1467 = vpop.f32.mrf.mxu0
      %v1468 = vadd.f32 %v483, %v1467
      %1469 = vdwg.mxu0
      %1470 = vmatpush.bf16.msra.mxu0 0
      %1471 = vmatpush.bf16.msra.mxu0 0
      %1472 = vmatpush.bf16.msra.mxu0 0
      %1473 = vmatpush.bf16.msra.mxu0 0
      %1474 = vmatpush.bf16.msra.mxu0 0
      %1475 = vmatpush.bf16.msra.mxu0 0
      %1476 = vmatpush.bf16.msra.mxu0 %v874
      %1477 = vmatpush.bf16.msra.mxu0 %v824
      %1478 = vmatmul.bf16.gmra.mxu0 %v992
      %v1479 = vpop.f32.mrf.mxu0
      %v1480 = vadd.f32 %v478, %v1479
      %v1481 = vpop.f32.mrf.mxu0
      %v1482 = vadd.f32 %v483, %v1481
      %1483 = vdwg.mxu0
      %1484 = vmatpush.bf16.msra.mxu0 0
      %1485 = vmatpush.bf16.msra.mxu0 0
      %1486 = vmatpush.bf16.msra.mxu0 0
      %1487 = vmatpush.bf16.msra.mxu0 0
      %1488 = vmatpush.bf16.msra.mxu0 0
      %1489 = vmatpush.bf16.msra.mxu0 0
      %1490 = vmatpush.bf16.msra.mxu0 %v875
      %1491 = vmatpush.bf16.msra.mxu0 %v825
      %1492 = vmatmul.bf16.gmra.mxu0 %v992
      %v1493 = vpop.f32.mrf.mxu0
      %v1494 = vadd.f32 %v478, %v1493
      %v1495 = vpop.f32.mrf.mxu0
      %v1496 = vadd.f32 %v483, %v1495
      %1497 = vdwg.mxu0
      %1498 = vmatpush.bf16.msra.mxu0 0
      %1499 = vmatpush.bf16.msra.mxu0 0
      %1500 = vmatpush.bf16.msra.mxu0 0
      %1501 = vmatpush.bf16.msra.mxu0 0
      %1502 = vmatpush.bf16.msra.mxu0 0
      %1503 = vmatpush.bf16.msra.mxu0 0
      %1504 = vmatpush.bf16.msra.mxu0 %v876
      %1505 = vmatpush.bf16.msra.mxu0 %v826
      %1506 = vmatmul.bf16.gmra.mxu0 %v992
      %v1507 = vpop.f32.mrf.mxu0
      %v1508 = vadd.f32 %v478, %v1507
      %v1509 = vpop.f32.mrf.mxu0
      %v1510 = vadd.f32 %v483, %v1509
      %1511 = vdwg.mxu0
      %1512 = vmatpush.bf16.msra.mxu0 0
      %1513 = vmatpush.bf16.msra.mxu0 0
      %1514 = vmatpush.bf16.msra.mxu0 0
      %1515 = vmatpush.bf16.msra.mxu0 0
      %1516 = vmatpush.bf16.msra.mxu0 0
      %1517 = vmatpush.bf16.msra.mxu0 0
      %1518 = vmatpush.bf16.msra.mxu0 %v877
      %1519 = vmatpush.bf16.msra.mxu0 %v827
      %1520 = vmatmul.bf16.gmra.mxu0 %v992
      %v1521 = vpop.f32.mrf.mxu0
      %v1522 = vadd.f32 %v478, %v1521
      %v1523 = vpop.f32.mrf.mxu0
      %v1524 = vadd.f32 %v483, %v1523
      %1525 = vdwg.mxu0
      %1526 = vmatpush.bf16.msra.mxu0 0
      %1527 = vmatpush.bf16.msra.mxu0 0
      %1528 = vmatpush.bf16.msra.mxu0 0
      %1529 = vmatpush.bf16.msra.mxu0 0
      %1530 = vmatpush.bf16.msra.mxu0 0
      %1531 = vmatpush.bf16.msra.mxu0 0
      %1532 = vmatpush.bf16.msra.mxu0 %v878
      %1533 = vmatpush.bf16.msra.mxu0 %v828
      %1534 = vmatmul.bf16.gmra.mxu0 %v992
      %v1535 = vpop.f32.mrf.mxu0
      %v1536 = vadd.f32 %v478, %v1535
      %v1537 = vpop.f32.mrf.mxu0
      %v1538 = vadd.f32 %v483, %v1537
      %1539 = vdwg.mxu0
      %1540 = vmatpush.bf16.msra.mxu0 0
      %1541 = vmatpush.bf16.msra.mxu0 0
      %1542 = vmatpush.bf16.msra.mxu0 0
      %1543 = vmatpush.bf16.msra.mxu0 0
      %1544 = vmatpush.bf16.msra.mxu0 0
      %1545 = vmatpush.bf16.msra.mxu0 0
      %1546 = vmatpush.bf16.msra.mxu0 %v879
      %1547 = vmatpush.bf16.msra.mxu0 %v829
      %1548 = vmatmul.bf16.gmra.mxu0 %v992
      %v1549 = vpop.f32.mrf.mxu0
      %v1550 = vadd.f32 %v478, %v1549
      %v1551 = vpop.f32.mrf.mxu0
      %v1552 = vadd.f32 %v483, %v1551
      %1553 = vdwg.mxu0
      %1554 = vmatpush.bf16.msra.mxu0 0
      %1555 = vmatpush.bf16.msra.mxu0 0
      %1556 = vmatpush.bf16.msra.mxu0 0
      %1557 = vmatpush.bf16.msra.mxu0 0
      %1558 = vmatpush.bf16.msra.mxu0 0
      %1559 = vmatpush.bf16.msra.mxu0 0
      %1560 = vmatpush.bf16.msra.mxu0 %v880
      %1561 = vmatpush.bf16.msra.mxu0 %v830
      %1562 = vmatmul.bf16.gmra.mxu0 %v992
      %v1563 = vpop.f32.mrf.mxu0
      %v1564 = vadd.f32 %v478, %v1563
      %v1565 = vpop.f32.mrf.mxu0
      %v1566 = vadd.f32 %v483, %v1565
      %1567 = vdwg.mxu0
      %1568 = vmatpush.bf16.msra.mxu0 0
      %1569 = vmatpush.bf16.msra.mxu0 0
      %1570 = vmatpush.bf16.msra.mxu0 0
      %1571 = vmatpush.bf16.msra.mxu0 0
      %1572 = vmatpush.bf16.msra.mxu0 0
      %1573 = vmatpush.bf16.msra.mxu0 0
      %1574 = vmatpush.bf16.msra.mxu0 %v881
      %1575 = vmatpush.bf16.msra.mxu0 %v831
      %1576 = vmatmul.bf16.gmra.mxu0 %v992
      %v1577 = vpop.f32.mrf.mxu0
      %v1578 = vadd.f32 %v478, %v1577
      %v1579 = vpop.f32.mrf.mxu0
      %v1580 = vadd.f32 %v483, %v1579
      %1581 = vdwg.mxu0
      %1582 = vmatpush.bf16.msra.mxu0 0
      %1583 = vmatpush.bf16.msra.mxu0 0
      %1584 = vmatpush.bf16.msra.mxu0 0
      %1585 = vmatpush.bf16.msra.mxu0 0
      %1586 = vmatpush.bf16.msra.mxu0 0
      %1587 = vmatpush.bf16.msra.mxu0 0
      %1588 = vmatpush.bf16.msra.mxu0 %v882
      %1589 = vmatpush.bf16.msra.mxu0 %v832
      %1590 = vmatmul.bf16.gmra.mxu0 %v992
      %v1591 = vpop.f32.mrf.mxu0
      %v1592 = vadd.f32 %v478, %v1591
      %v1593 = vpop.f32.mrf.mxu0
      %v1594 = vadd.f32 %v483, %v1593
      %1595 = vdwg.mxu0
      %1596 = vmatpush.bf16.msra.mxu0 0
      %1597 = vmatpush.bf16.msra.mxu0 0
      %1598 = vmatpush.bf16.msra.mxu0 0
      %1599 = vmatpush.bf16.msra.mxu0 0
      %1600 = vmatpush.bf16.msra.mxu0 0
      %1601 = vmatpush.bf16.msra.mxu0 0
      %1602 = vmatpush.bf16.msra.mxu0 %v883
      %1603 = vmatpush.bf16.msra.mxu0 %v833
      %1604 = vmatmul.bf16.gmra.mxu0 %v992
      %v1605 = vpop.f32.mrf.mxu0
      %v1606 = vadd.f32 %v478, %v1605
      %v1607 = vpop.f32.mrf.mxu0
      %v1608 = vadd.f32 %v483, %v1607
      %1609 = vdwg.mxu0
      %1610 = vmatpush.bf16.msra.mxu0 0
      %1611 = vmatpush.bf16.msra.mxu0 0
      %1612 = vmatpush.bf16.msra.mxu0 0
      %1613 = vmatpush.bf16.msra.mxu0 0
      %1614 = vmatpush.bf16.msra.mxu0 0
      %1615 = vmatpush.bf16.msra.mxu0 0
      %1616 = vmatpush.bf16.msra.mxu0 %v884
      %1617 = vmatpush.bf16.msra.mxu0 %v834
      %1618 = vmatmul.bf16.gmra.mxu0 %v992
      %v1619 = vpop.f32.mrf.mxu0
      %v1620 = vadd.f32 %v478, %v1619
      %v1621 = vpop.f32.mrf.mxu0
      %v1622 = vadd.f32 %v483, %v1621
      %1623 = vdwg.mxu0
      %1624 = vmatpush.bf16.msra.mxu0 0
      %1625 = vmatpush.bf16.msra.mxu0 0
      %1626 = vmatpush.bf16.msra.mxu0 0
      %1627 = vmatpush.bf16.msra.mxu0 0
      %1628 = vmatpush.bf16.msra.mxu0 0
      %1629 = vmatpush.bf16.msra.mxu0 0
      %1630 = vmatpush.bf16.msra.mxu0 %v885
      %1631 = vmatpush.bf16.msra.mxu0 %v835
      %1632 = vmatmul.bf16.gmra.mxu0 %v992
      %v1633 = vpop.f32.mrf.mxu0
      %v1634 = vadd.f32 %v478, %v1633
      %v1635 = vpop.f32.mrf.mxu0
      %v1636 = vadd.f32 %v483, %v1635
      %1637 = vdwg.mxu0
      %1638 = vmatpush.bf16.msra.mxu0 0
      %1639 = vmatpush.bf16.msra.mxu0 0
      %1640 = vmatpush.bf16.msra.mxu0 0
      %1641 = vmatpush.bf16.msra.mxu0 0
      %1642 = vmatpush.bf16.msra.mxu0 0
      %1643 = vmatpush.bf16.msra.mxu0 0
      %1644 = vmatpush.bf16.msra.mxu0 %v886
      %1645 = vmatpush.bf16.msra.mxu0 %v836
      %1646 = vmatmul.bf16.gmra.mxu0 %v992
      %v1647 = vpop.f32.mrf.mxu0
      %v1648 = vadd.f32 %v478, %v1647
      %v1649 = vpop.f32.mrf.mxu0
      %v1650 = vadd.f32 %v483, %v1649
      %1651 = vdwg.mxu0
      %1652 = vmatpush.bf16.msra.mxu0 0
      %1653 = vmatpush.bf16.msra.mxu0 0
      %1654 = vmatpush.bf16.msra.mxu0 0
      %1655 = vmatpush.bf16.msra.mxu0 0
      %1656 = vmatpush.bf16.msra.mxu0 0
      %1657 = vmatpush.bf16.msra.mxu0 0
      %1658 = vmatpush.bf16.msra.mxu0 %v887
      %1659 = vmatpush.bf16.msra.mxu0 %v837
      %1660 = vmatmul.bf16.gmra.mxu0 %v992
      %v1661 = vpop.f32.mrf.mxu0
      %v1662 = vadd.f32 %v478, %v1661
      %v1663 = vpop.f32.mrf.mxu0
      %v1664 = vadd.f32 %v483, %v1663
      %1665 = vdwg.mxu0
      %1666 = vmatpush.bf16.msra.mxu0 0
      %1667 = vmatpush.bf16.msra.mxu0 0
      %1668 = vmatpush.bf16.msra.mxu0 0
      %1669 = vmatpush.bf16.msra.mxu0 0
      %1670 = vmatpush.bf16.msra.mxu0 0
      %1671 = vmatpush.bf16.msra.mxu0 0
      %1672 = vmatpush.bf16.msra.mxu0 %v888
      %1673 = vmatpush.bf16.msra.mxu0 %v838
      %1674 = vmatmul.bf16.gmra.mxu0 %v992
      %v1675 = vpop.f32.mrf.mxu0
      %v1676 = vadd.f32 %v478, %v1675
      %v1677 = vpop.f32.mrf.mxu0
      %v1678 = vadd.f32 %v483, %v1677
      %1679 = vdwg.mxu0
      %1680 = vmatpush.bf16.msra.mxu0 0
      %1681 = vmatpush.bf16.msra.mxu0 0
      %1682 = vmatpush.bf16.msra.mxu0 0
      %1683 = vmatpush.bf16.msra.mxu0 0
      %1684 = vmatpush.bf16.msra.mxu0 0
      %1685 = vmatpush.bf16.msra.mxu0 0
      %1686 = vmatpush.bf16.msra.mxu0 %v889
      %1687 = vmatpush.bf16.msra.mxu0 %v839
      %1688 = vmatmul.bf16.gmra.mxu0 %v992
      %v1689 = vpop.f32.mrf.mxu0
      %v1690 = vadd.f32 %v478, %v1689
      %v1691 = vpop.f32.mrf.mxu0
      %v1692 = vadd.f32 %v483, %v1691
      %1693 = vdwg.mxu0
      %v1694 = vmax.f32 %v1004, 0.0
      %v1695 = vmax.f32 %v1018, 0.0
      %v1696 = vmax.f32 %v1032, 0.0
      %v1697 = vmax.f32 %v1046, 0.0
      %v1698 = vmax.f32 %v1060, 0.0
      %v1699 = vmax.f32 %v1074, 0.0
      %v1700 = vmax.f32 %v1088, 0.0
      %v1701 = vmax.f32 %v1102, 0.0
      %v1702 = vmax.f32 %v1116, 0.0
      %v1703 = vmax.f32 %v1130, 0.0
      %v1704 = vmax.f32 %v1144, 0.0
      %v1705 = vmax.f32 %v1158, 0.0
      %v1706 = vmax.f32 %v1172, 0.0
      %v1707 = vmax.f32 %v1186, 0.0
      %v1708 = vmax.f32 %v1200, 0.0
      %v1709 = vmax.f32 %v1214, 0.0
      %v1710 = vmax.f32 %v1228, 0.0
      %v1711 = vmax.f32 %v1242, 0.0
      %v1712 = vmax.f32 %v1256, 0.0
      %v1713 = vmax.f32 %v1270, 0.0
      %v1714 = vmax.f32 %v1284, 0.0
      %v1715 = vmax.f32 %v1298, 0.0
      %v1716 = vmax.f32 %v1312, 0.0
      %v1717 = vmax.f32 %v1326, 0.0
      %v1718 = vmax.f32 %v1340, 0.0
      %v1719 = vmax.f32 %v1354, 0.0
      %v1720 = vmax.f32 %v1368, 0.0
      %v1721 = vmax.f32 %v1382, 0.0
      %v1722 = vmax.f32 %v1396, 0.0
      %v1723 = vmax.f32 %v1410, 0.0
      %v1724 = vmax.f32 %v1424, 0.0
      %v1725 = vmax.f32 %v1438, 0.0
      %v1726 = vmax.f32 %v1452, 0.0
      %v1727 = vmax.f32 %v1466, 0.0
      %v1728 = vmax.f32 %v1480, 0.0
      %v1729 = vmax.f32 %v1494, 0.0
      %v1730 = vmax.f32 %v1508, 0.0
      %v1731 = vmax.f32 %v1522, 0.0
      %v1732 = vmax.f32 %v1536, 0.0
      %v1733 = vmax.f32 %v1550, 0.0
      %v1734 = vmax.f32 %v1564, 0.0
      %v1735 = vmax.f32 %v1578, 0.0
      %v1736 = vmax.f32 %v1592, 0.0
      %v1737 = vmax.f32 %v1606, 0.0
      %v1738 = vmax.f32 %v1620, 0.0
      %v1739 = vmax.f32 %v1634, 0.0
      %v1740 = vmax.f32 %v1648, 0.0
      %v1741 = vmax.f32 %v1662, 0.0
      %v1742 = vmax.f32 %v1676, 0.0
      %v1743 = vmax.f32 %v1690, 0.0
      %v1744 = vmax.f32 %v1006, 0.0
      %v1745 = vmax.f32 %v1020, 0.0
      %v1746 = vmax.f32 %v1034, 0.0
      %v1747 = vmax.f32 %v1048, 0.0
      %v1748 = vmax.f32 %v1062, 0.0
      %v1749 = vmax.f32 %v1076, 0.0
      %v1750 = vmax.f32 %v1090, 0.0
      %v1751 = vmax.f32 %v1104, 0.0
      %v1752 = vmax.f32 %v1118, 0.0
      %v1753 = vmax.f32 %v1132, 0.0
      %v1754 = vmax.f32 %v1146, 0.0
      %v1755 = vmax.f32 %v1160, 0.0
      %v1756 = vmax.f32 %v1174, 0.0
      %v1757 = vmax.f32 %v1188, 0.0
      %v1758 = vmax.f32 %v1202, 0.0
      %v1759 = vmax.f32 %v1216, 0.0
      %v1760 = vmax.f32 %v1230, 0.0
      %v1761 = vmax.f32 %v1244, 0.0
      %v1762 = vmax.f32 %v1258, 0.0
      %v1763 = vmax.f32 %v1272, 0.0
      %v1764 = vmax.f32 %v1286, 0.0
      %v1765 = vmax.f32 %v1300, 0.0
      %v1766 = vmax.f32 %v1314, 0.0
      %v1767 = vmax.f32 %v1328, 0.0
      %v1768 = vmax.f32 %v1342, 0.0
      %v1769 = vmax.f32 %v1356, 0.0
      %v1770 = vmax.f32 %v1370, 0.0
      %v1771 = vmax.f32 %v1384, 0.0
      %v1772 = vmax.f32 %v1398, 0.0
      %v1773 = vmax.f32 %v1412, 0.0
      %v1774 = vmax.f32 %v1426, 0.0
      %v1775 = vmax.f32 %v1440, 0.0
      %v1776 = vmax.f32 %v1454, 0.0
      %v1777 = vmax.f32 %v1468, 0.0
      %v1778 = vmax.f32 %v1482, 0.0
      %v1779 = vmax.f32 %v1496, 0.0
      %v1780 = vmax.f32 %v1510, 0.0
      %v1781 = vmax.f32 %v1524, 0.0
      %v1782 = vmax.f32 %v1538, 0.0
      %v1783 = vmax.f32 %v1552, 0.0
      %v1784 = vmax.f32 %v1566, 0.0
      %v1785 = vmax.f32 %v1580, 0.0
      %v1786 = vmax.f32 %v1594, 0.0
      %v1787 = vmax.f32 %v1608, 0.0
      %v1788 = vmax.f32 %v1622, 0.0
      %v1789 = vmax.f32 %v1636, 0.0
      %v1790 = vmax.f32 %v1650, 0.0
      %v1791 = vmax.f32 %v1664, 0.0
      %v1792 = vmax.f32 %v1678, 0.0
      %v1793 = vmax.f32 %v1692, 0.0
      %v1794 = vpack.c.bf16 %v1695, %v1694
      %v1795 = vpack.c.bf16 %v1697, %v1696
      %v1796 = vpack.c.bf16 %v1699, %v1698
      %v1797 = vpack.c.bf16 %v1701, %v1700
      %v1798 = vpack.c.bf16 %v1703, %v1702
      %v1799 = vpack.c.bf16 %v1705, %v1704
      %v1800 = vpack.c.bf16 %v1707, %v1706
      %v1801 = vpack.c.bf16 %v1709, %v1708
      %v1802 = vpack.c.bf16 %v1711, %v1710
      %v1803 = vpack.c.bf16 %v1713, %v1712
      %v1804 = vpack.c.bf16 %v1715, %v1714
      %v1805 = vpack.c.bf16 %v1717, %v1716
      %v1806 = vpack.c.bf16 %v1719, %v1718
      %v1807 = vpack.c.bf16 %v1721, %v1720
      %v1808 = vpack.c.bf16 %v1723, %v1722
      %v1809 = vpack.c.bf16 %v1725, %v1724
      %v1810 = vpack.c.bf16 %v1727, %v1726
      %v1811 = vpack.c.bf16 %v1729, %v1728
      %v1812 = vpack.c.bf16 %v1731, %v1730
      %v1813 = vpack.c.bf16 %v1733, %v1732
      %v1814 = vpack.c.bf16 %v1735, %v1734
      %v1815 = vpack.c.bf16 %v1737, %v1736
      %v1816 = vpack.c.bf16 %v1739, %v1738
      %v1817 = vpack.c.bf16 %v1741, %v1740
      %v1818 = vpack.c.bf16 %v1743, %v1742
      %v1819 = vpack.c.bf16 %v1745, %v1744
      %v1820 = vpack.c.bf16 %v1747, %v1746
      %v1821 = vpack.c.bf16 %v1749, %v1748
      %v1822 = vpack.c.bf16 %v1751, %v1750
      %v1823 = vpack.c.bf16 %v1753, %v1752
      %v1824 = vpack.c.bf16 %v1755, %v1754
      %v1825 = vpack.c.bf16 %v1757, %v1756
      %v1826 = vpack.c.bf16 %v1759, %v1758
      %v1827 = vpack.c.bf16 %v1761, %v1760
      %v1828 = vpack.c.bf16 %v1763, %v1762
      %v1829 = vpack.c.bf16 %v1765, %v1764
      %v1830 = vpack.c.bf16 %v1767, %v1766
      %v1831 = vpack.c.bf16 %v1769, %v1768
      %v1832 = vpack.c.bf16 %v1771, %v1770
      %v1833 = vpack.c.bf16 %v1773, %v1772
      %v1834 = vpack.c.bf16 %v1775, %v1774
      %v1835 = vpack.c.bf16 %v1777, %v1776
      %v1836 = vpack.c.bf16 %v1779, %v1778
      %v1837 = vpack.c.bf16 %v1781, %v1780
      %v1838 = vpack.c.bf16 %v1783, %v1782
      %v1839 = vpack.c.bf16 %v1785, %v1784
      %v1840 = vpack.c.bf16 %v1787, %v1786
      %v1841 = vpack.c.bf16 %v1789, %v1788
      %v1842 = vpack.c.bf16 %v1791, %v1790
      %v1843 = vpack.c.bf16 %v1793, %v1792
      %1844 = vst [vmem:[#allocation2] sm:$0xff] %v1794
      %1845 = vst [vmem:[#allocation2 + $0x8] sm:$0xff] %v1795
      %1846 = vst [vmem:[#allocation2 + $0x10] sm:$0xff] %v1796
      %1847 = vst [vmem:[#allocation2 + $0x18] sm:$0xff] %v1797
      %1848 = vst [vmem:[#allocation2 + $0x20] sm:$0xff] %v1798
      %1849 = vst [vmem:[#allocation2 + $0x28] sm:$0xff] %v1799
      %1850 = vst [vmem:[#allocation2 + $0x30] sm:$0xff] %v1800
      %1851 = vst [vmem:[#allocation2 + $0x38] sm:$0xff] %v1801
      %1852 = vst [vmem:[#allocation2 + $0x40] sm:$0xff] %v1802
      %1853 = vst [vmem:[#allocation2 + $0x48] sm:$0xff] %v1803
      %1854 = vst [vmem:[#allocation2 + $0x50] sm:$0xff] %v1804
      %1855 = vst [vmem:[#allocation2 + $0x58] sm:$0xff] %v1805
      %1856 = vst [vmem:[#allocation2 + $0x60] sm:$0xff] %v1806
      %1857 = vst [vmem:[#allocation2 + $0x68] sm:$0xff] %v1807
      %1858 = vst [vmem:[#allocation2 + $0x70] sm:$0xff] %v1808
      %1859 = vst [vmem:[#allocation2 + $0x78] sm:$0xff] %v1809
      %1860 = vst [vmem:[#allocation2 + $0x80] sm:$0xff] %v1810
      %1861 = vst [vmem:[#allocation2 + $0x88] sm:$0xff] %v1811
      %1862 = vst [vmem:[#allocation2 + $0x90] sm:$0xff] %v1812
      %1863 = vst [vmem:[#allocation2 + $0x98] sm:$0xff] %v1813
      %1864 = vst [vmem:[#allocation2 + $0xa0] sm:$0xff] %v1814
      %1865 = vst [vmem:[#allocation2 + $0xa8] sm:$0xff] %v1815
      %1866 = vst [vmem:[#allocation2 + $0xb0] sm:$0xff] %v1816
      %1867 = vst [vmem:[#allocation2 + $0xb8] sm:$0xff] %v1817
      %1868 = vst [vmem:[#allocation2 + $0xc0] sm:$0xff] %v1818
      %1869 = vst [vmem:[#allocation2 + $0xc8] sm:$0xff] %v1819
      %1870 = vst [vmem:[#allocation2 + $0xd0] sm:$0xff] %v1820
      %1871 = vst [vmem:[#allocation2 + $0xd8] sm:$0xff] %v1821
      %1872 = vst [vmem:[#allocation2 + $0xe0] sm:$0xff] %v1822
      %1873 = vst [vmem:[#allocation2 + $0xe8] sm:$0xff] %v1823
      %1874 = vst [vmem:[#allocation2 + $0xf0] sm:$0xff] %v1824
      %1875 = vst [vmem:[#allocation2 + $0xf8] sm:$0xff] %v1825
      %1876 = vst [vmem:[#allocation2 + $0x100] sm:$0xff] %v1826
      %1877 = vst [vmem:[#allocation2 + $0x108] sm:$0xff] %v1827
      %1878 = vst [vmem:[#allocation2 + $0x110] sm:$0xff] %v1828
      %1879 = vst [vmem:[#allocation2 + $0x118] sm:$0xff] %v1829
      %1880 = vst [vmem:[#allocation2 + $0x120] sm:$0xff] %v1830
      %1881 = vst [vmem:[#allocation2 + $0x128] sm:$0xff] %v1831
      %1882 = vst [vmem:[#allocation2 + $0x130] sm:$0xff] %v1832
      %1883 = vst [vmem:[#allocation2 + $0x138] sm:$0xff] %v1833
      %1884 = vst [vmem:[#allocation2 + $0x140] sm:$0xff] %v1834
      %1885 = vst [vmem:[#allocation2 + $0x148] sm:$0xff] %v1835
      %1886 = vst [vmem:[#allocation2 + $0x150] sm:$0xff] %v1836
      %1887 = vst [vmem:[#allocation2 + $0x158] sm:$0xff] %v1837
      %1888 = vst [vmem:[#allocation2 + $0x160] sm:$0xff] %v1838
      %1889 = vst [vmem:[#allocation2 + $0x168] sm:$0xff] %v1839
      %1890 = vst [vmem:[#allocation2 + $0x170] sm:$0xff] %v1840
      %1891 = vst [vmem:[#allocation2 + $0x178] sm:$0xff] %v1841
      %1892 = vst [vmem:[#allocation2 + $0x180] sm:$0xff] %v1842
      %1893 = vst [vmem:[#allocation2 + $0x188] sm:$0xff] %v1843
      %v1894 = vld [vmem:[#allocation2] sm:$0xff]
      %v1895 = vld [vmem:[#allocation2 + $0x8] sm:$0xff]
      %v1896 = vld [vmem:[#allocation2 + $0x10] sm:$0xff]
      %v1897 = vld [vmem:[#allocation2 + $0xc8] sm:$0xff]
      %v1898 = vld [vmem:[#allocation2 + $0xd0] sm:$0xff]
      %v1899 = vld [vmem:[#allocation2 + $0xd8] sm:$0xff]
      %1900 = vst [vmem:[#allocation3] sm:$0xff] %v1894
      %1901 = vst [vmem:[#allocation3 + $0x8] sm:$0xff] %v1895
      %1902 = vst [vmem:[#allocation3 + $0x10] sm:$0xff] %v1896
      %1903 = vst [vmem:[#allocation3 + $0x48] sm:$0xff] %v1897
      %1904 = vst [vmem:[#allocation3 + $0x50] sm:$0xff] %v1898
      %1905 = vst [vmem:[#allocation3 + $0x58] sm:$0xff] %v1899
      %v1906 = vld [vmem:[#allocation2 + $0x28] sm:$0xff]
      %v1907 = vld [vmem:[#allocation2 + $0x30] sm:$0xff]
      %v1908 = vld [vmem:[#allocation2 + $0x38] sm:$0xff]
      %v1909 = vld [vmem:[#allocation2 + $0xf0] sm:$0xff]
      %v1910 = vld [vmem:[#allocation2 + $0xf8] sm:$0xff]
      %v1911 = vld [vmem:[#allocation2 + $0x100] sm:$0xff]
      %1912 = vst [vmem:[#allocation3 + $0x18] sm:$0xff] %v1906
      %1913 = vst [vmem:[#allocation3 + $0x20] sm:$0xff] %v1907
      %1914 = vst [vmem:[#allocation3 + $0x28] sm:$0xff] %v1908
      %1915 = vst [vmem:[#allocation3 + $0x60] sm:$0xff] %v1909
      %1916 = vst [vmem:[#allocation3 + $0x68] sm:$0xff] %v1910
      %1917 = vst [vmem:[#allocation3 + $0x70] sm:$0xff] %v1911
      %v1918 = vld [vmem:[#allocation2 + $0x50] sm:$0xff]
      %v1919 = vld [vmem:[#allocation2 + $0x58] sm:$0xff]
      %v1920 = vld [vmem:[#allocation2 + $0x60] sm:$0xff]
      %v1921 = vld [vmem:[#allocation2 + $0x118] sm:$0xff]
      %v1922 = vld [vmem:[#allocation2 + $0x120] sm:$0xff]
      %v1923 = vld [vmem:[#allocation2 + $0x128] sm:$0xff]
      %1924 = vst [vmem:[#allocation3 + $0x30] sm:$0xff] %v1918
      %1925 = vst [vmem:[#allocation3 + $0x38] sm:$0xff] %v1919
      %1926 = vst [vmem:[#allocation3 + $0x40] sm:$0xff] %v1920
      %1927 = vst [vmem:[#allocation3 + $0x78] sm:$0xff] %v1921
      %1928 = vst [vmem:[#allocation3 + $0x80] sm:$0xff] %v1922
      %1929 = vst [vmem:[#allocation3 + $0x88] sm:$0xff] %v1923
      %v1930 = vld [vmem:[#allocation2 + $0x8] sm:$0xff]
      %v1931 = vld [vmem:[#allocation2 + $0x10] sm:$0xff]
      %v1932 = vld [vmem:[#allocation2 + $0x18] sm:$0xff]
      %v1933 = vld [vmem:[#allocation2 + $0xd0] sm:$0xff]
      %v1934 = vld [vmem:[#allocation2 + $0xd8] sm:$0xff]
      %v1935 = vld [vmem:[#allocation2 + $0xe0] sm:$0xff]
      %1936 = vst [vmem:[#allocation3 + $0x90] sm:$0xff] %v1930
      %1937 = vst [vmem:[#allocation3 + $0x98] sm:$0xff] %v1931
      %1938 = vst [vmem:[#allocation3 + $0xa0] sm:$0xff] %v1932
      %1939 = vst [vmem:[#allocation3 + $0xd8] sm:$0xff] %v1933
      %1940 = vst [vmem:[#allocation3 + $0xe0] sm:$0xff] %v1934
      %1941 = vst [vmem:[#allocation3 + $0xe8] sm:$0xff] %v1935
      %v1942 = vld [vmem:[#allocation2 + $0x30] sm:$0xff]
      %v1943 = vld [vmem:[#allocation2 + $0x38] sm:$0xff]
      %v1944 = vld [vmem:[#allocation2 + $0x40] sm:$0xff]
      %v1945 = vld [vmem:[#allocation2 + $0xf8] sm:$0xff]
      %v1946 = vld [vmem:[#allocation2 + $0x100] sm:$0xff]
      %v1947 = vld [vmem:[#allocation2 + $0x108] sm:$0xff]
      %1948 = vst [vmem:[#allocation3 + $0xa8] sm:$0xff] %v1942
      %1949 = vst [vmem:[#allocation3 + $0xb0] sm:$0xff] %v1943
      %1950 = vst [vmem:[#allocation3 + $0xb8] sm:$0xff] %v1944
      %1951 = vst [vmem:[#allocation3 + $0xf0] sm:$0xff] %v1945
      %1952 = vst [vmem:[#allocation3 + $0xf8] sm:$0xff] %v1946
      %1953 = vst [vmem:[#allocation3 + $0x100] sm:$0xff] %v1947
      %v1954 = vld [vmem:[#allocation2 + $0x58] sm:$0xff]
      %v1955 = vld [vmem:[#allocation2 + $0x60] sm:$0xff]
      %v1956 = vld [vmem:[#allocation2 + $0x68] sm:$0xff]
      %v1957 = vld [vmem:[#allocation2 + $0x120] sm:$0xff]
      %v1958 = vld [vmem:[#allocation2 + $0x128] sm:$0xff]
      %v1959 = vld [vmem:[#allocation2 + $0x130] sm:$0xff]
      %1960 = vst [vmem:[#allocation3 + $0xc0] sm:$0xff] %v1954
      %1961 = vst [vmem:[#allocation3 + $0xc8] sm:$0xff] %v1955
      %1962 = vst [vmem:[#allocation3 + $0xd0] sm:$0xff] %v1956
      %1963 = vst [vmem:[#allocation3 + $0x108] sm:$0xff] %v1957
      %1964 = vst [vmem:[#allocation3 + $0x110] sm:$0xff] %v1958
      %1965 = vst [vmem:[#allocation3 + $0x118] sm:$0xff] %v1959
      %v1966 = vld [vmem:[#allocation2 + $0x10] sm:$0xff]
      %v1967 = vld [vmem:[#allocation2 + $0x18] sm:$0xff]
      %v1968 = vld [vmem:[#allocation2 + $0x20] sm:$0xff]
      %v1969 = vld [vmem:[#allocation2 + $0xd8] sm:$0xff]
      %v1970 = vld [vmem:[#allocation2 + $0xe0] sm:$0xff]
      %v1971 = vld [vmem:[#allocation2 + $0xe8] sm:$0xff]
      %1972 = vst [vmem:[#allocation3 + $0x120] sm:$0xff] %v1966
      %1973 = vst [vmem:[#allocation3 + $0x128] sm:$0xff] %v1967
      %1974 = vst [vmem:[#allocation3 + $0x130] sm:$0xff] %v1968
      %1975 = vst [vmem:[#allocation3 + $0x168] sm:$0xff] %v1969
      %1976 = vst [vmem:[#allocation3 + $0x170] sm:$0xff] %v1970
      %1977 = vst [vmem:[#allocation3 + $0x178] sm:$0xff] %v1971
      %v1978 = vld [vmem:[#allocation2 + $0x38] sm:$0xff]
      %v1979 = vld [vmem:[#allocation2 + $0x40] sm:$0xff]
      %v1980 = vld [vmem:[#allocation2 + $0x48] sm:$0xff]
      %v1981 = vld [vmem:[#allocation2 + $0x100] sm:$0xff]
      %v1982 = vld [vmem:[#allocation2 + $0x108] sm:$0xff]
      %v1983 = vld [vmem:[#allocation2 + $0x110] sm:$0xff]
      %1984 = vst [vmem:[#allocation3 + $0x138] sm:$0xff] %v1978
      %1985 = vst [vmem:[#allocation3 + $0x140] sm:$0xff] %v1979
      %1986 = vst [vmem:[#allocation3 + $0x148] sm:$0xff] %v1980
      %1987 = vst [vmem:[#allocation3 + $0x180] sm:$0xff] %v1981
      %1988 = vst [vmem:[#allocation3 + $0x188] sm:$0xff] %v1982
      %1989 = vst [vmem:[#allocation3 + $0x190] sm:$0xff] %v1983
      %v1990 = vld [vmem:[#allocation2 + $0x60] sm:$0xff]
      %v1991 = vld [vmem:[#allocation2 + $0x68] sm:$0xff]
      %v1992 = vld [vmem:[#allocation2 + $0x70] sm:$0xff]
      %v1993 = vld [vmem:[#allocation2 + $0x128] sm:$0xff]
      %v1994 = vld [vmem:[#allocation2 + $0x130] sm:$0xff]
      %v1995 = vld [vmem:[#allocation2 + $0x138] sm:$0xff]
      %1996 = vst [vmem:[#allocation3 + $0x150] sm:$0xff] %v1990
      %1997 = vst [vmem:[#allocation3 + $0x158] sm:$0xff] %v1991
      %1998 = vst [vmem:[#allocation3 + $0x160] sm:$0xff] %v1992
      %1999 = vst [vmem:[#allocation3 + $0x198] sm:$0xff] %v1993
      %2000 = vst [vmem:[#allocation3 + $0x1a0] sm:$0xff] %v1994
      %2001 = vst [vmem:[#allocation3 + $0x1a8] sm:$0xff] %v1995
      %v2002 = vld [vmem:[#allocation2 + $0x28] sm:$0xff]
      %v2003 = vld [vmem:[#allocation2 + $0x30] sm:$0xff]
      %v2004 = vld [vmem:[#allocation2 + $0x38] sm:$0xff]
      %v2005 = vld [vmem:[#allocation2 + $0xf0] sm:$0xff]
      %v2006 = vld [vmem:[#allocation2 + $0xf8] sm:$0xff]
      %v2007 = vld [vmem:[#allocation2 + $0x100] sm:$0xff]
      %2008 = vst [vmem:[#allocation3 + $0x1b0] sm:$0xff] %v2002
      %2009 = vst [vmem:[#allocation3 + $0x1b8] sm:$0xff] %v2003
      %2010 = vst [vmem:[#allocation3 + $0x1c0] sm:$0xff] %v2004
      %2011 = vst [vmem:[#allocation3 + $0x1f8] sm:$0xff] %v2005
      %2012 = vst [vmem:[#allocation3 + $0x200] sm:$0xff] %v2006
      %2013 = vst [vmem:[#allocation3 + $0x208] sm:$0xff] %v2007
      %v2014 = vld [vmem:[#allocation2 + $0x50] sm:$0xff]
      %v2015 = vld [vmem:[#allocation2 + $0x58] sm:$0xff]
      %v2016 = vld [vmem:[#allocation2 + $0x60] sm:$0xff]
      %v2017 = vld [vmem:[#allocation2 + $0x118] sm:$0xff]
      %v2018 = vld [vmem:[#allocation2 + $0x120] sm:$0xff]
      %v2019 = vld [vmem:[#allocation2 + $0x128] sm:$0xff]
      %2020 = vst [vmem:[#allocation3 + $0x1c8] sm:$0xff] %v2014
      %2021 = vst [vmem:[#allocation3 + $0x1d0] sm:$0xff] %v2015
      %2022 = vst [vmem:[#allocation3 + $0x1d8] sm:$0xff] %v2016
      %2023 = vst [vmem:[#allocation3 + $0x210] sm:$0xff] %v2017
      %2024 = vst [vmem:[#allocation3 + $0x218] sm:$0xff] %v2018
      %2025 = vst [vmem:[#allocation3 + $0x220] sm:$0xff] %v2019
      %v2026 = vld [vmem:[#allocation2 + $0x78] sm:$0xff]
      %v2027 = vld [vmem:[#allocation2 + $0x80] sm:$0xff]
      %v2028 = vld [vmem:[#allocation2 + $0x88] sm:$0xff]
      %v2029 = vld [vmem:[#allocation2 + $0x140] sm:$0xff]
      %v2030 = vld [vmem:[#allocation2 + $0x148] sm:$0xff]
      %v2031 = vld [vmem:[#allocation2 + $0x150] sm:$0xff]
      %2032 = vst [vmem:[#allocation3 + $0x1e0] sm:$0xff] %v2026
      %2033 = vst [vmem:[#allocation3 + $0x1e8] sm:$0xff] %v2027
      %2034 = vst [vmem:[#allocation3 + $0x1f0] sm:$0xff] %v2028
      %2035 = vst [vmem:[#allocation3 + $0x228] sm:$0xff] %v2029
      %2036 = vst [vmem:[#allocation3 + $0x230] sm:$0xff] %v2030
      %2037 = vst [vmem:[#allocation3 + $0x238] sm:$0xff] %v2031
      %v2038 = vld [vmem:[#allocation2 + $0x30] sm:$0xff]
      %v2039 = vld [vmem:[#allocation2 + $0x38] sm:$0xff]
      %v2040 = vld [vmem:[#allocation2 + $0x40] sm:$0xff]
      %v2041 = vld [vmem:[#allocation2 + $0xf8] sm:$0xff]
      %v2042 = vld [vmem:[#allocation2 + $0x100] sm:$0xff]
      %v2043 = vld [vmem:[#allocation2 + $0x108] sm:$0xff]
      %2044 = vst [vmem:[#allocation3 + $0x240] sm:$0xff] %v2038
      %2045 = vst [vmem:[#allocation3 + $0x248] sm:$0xff] %v2039
      %2046 = vst [vmem:[#allocation3 + $0x250] sm:$0xff] %v2040
      %2047 = vst [vmem:[#allocation3 + $0x288] sm:$0xff] %v2041
      %2048 = vst [vmem:[#allocation3 + $0x290] sm:$0xff] %v2042
      %2049 = vst [vmem:[#allocation3 + $0x298] sm:$0xff] %v2043
      %v2050 = vld [vmem:[#allocation2 + $0x58] sm:$0xff]
      %v2051 = vld [vmem:[#allocation2 + $0x60] sm:$0xff]
      %v2052 = vld [vmem:[#allocation2 + $0x68] sm:$0xff]
      %v2053 = vld [vmem:[#allocation2 + $0x120] sm:$0xff]
      %v2054 = vld [vmem:[#allocation2 + $0x128] sm:$0xff]
      %v2055 = vld [vmem:[#allocation2 + $0x130] sm:$0xff]
      %2056 = vst [vmem:[#allocation3 + $0x258] sm:$0xff] %v2050
      %2057 = vst [vmem:[#allocation3 + $0x260] sm:$0xff] %v2051
      %2058 = vst [vmem:[#allocation3 + $0x268] sm:$0xff] %v2052
      %2059 = vst [vmem:[#allocation3 + $0x2a0] sm:$0xff] %v2053
      %2060 = vst [vmem:[#allocation3 + $0x2a8] sm:$0xff] %v2054
      %2061 = vst [vmem:[#allocation3 + $0x2b0] sm:$0xff] %v2055
      %v2062 = vld [vmem:[#allocation2 + $0x80] sm:$0xff]
      %v2063 = vld [vmem:[#allocation2 + $0x88] sm:$0xff]
      %v2064 = vld [vmem:[#allocation2 + $0x90] sm:$0xff]
      %v2065 = vld [vmem:[#allocation2 + $0x148] sm:$0xff]
      %v2066 = vld [vmem:[#allocation2 + $0x150] sm:$0xff]
      %v2067 = vld [vmem:[#allocation2 + $0x158] sm:$0xff]
      %2068 = vst [vmem:[#allocation3 + $0x270] sm:$0xff] %v2062
      %2069 = vst [vmem:[#allocation3 + $0x278] sm:$0xff] %v2063
      %2070 = vst [vmem:[#allocation3 + $0x280] sm:$0xff] %v2064
      %2071 = vst [vmem:[#allocation3 + $0x2b8] sm:$0xff] %v2065
      %2072 = vst [vmem:[#allocation3 + $0x2c0] sm:$0xff] %v2066
      %2073 = vst [vmem:[#allocation3 + $0x2c8] sm:$0xff] %v2067
      %v2074 = vld [vmem:[#allocation2 + $0x38] sm:$0xff]
      %v2075 = vld [vmem:[#allocation2 + $0x40] sm:$0xff]
      %v2076 = vld [vmem:[#allocation2 + $0x48] sm:$0xff]
      %v2077 = vld [vmem:[#allocation2 + $0x100] sm:$0xff]
      %v2078 = vld [vmem:[#allocation2 + $0x108] sm:$0xff]
      %v2079 = vld [vmem:[#allocation2 + $0x110] sm:$0xff]
      %2080 = vst [vmem:[#allocation3 + $0x2d0] sm:$0xff] %v2074
      %2081 = vst [vmem:[#allocation3 + $0x2d8] sm:$0xff] %v2075
      %2082 = vst [vmem:[#allocation3 + $0x2e0] sm:$0xff] %v2076
      %2083 = vst [vmem:[#allocation3 + $0x318] sm:$0xff] %v2077
      %2084 = vst [vmem:[#allocation3 + $0x320] sm:$0xff] %v2078
      %2085 = vst [vmem:[#allocation3 + $0x328] sm:$0xff] %v2079
      %v2086 = vld [vmem:[#allocation2 + $0x60] sm:$0xff]
      %v2087 = vld [vmem:[#allocation2 + $0x68] sm:$0xff]
      %v2088 = vld [vmem:[#allocation2 + $0x70] sm:$0xff]
      %v2089 = vld [vmem:[#allocation2 + $0x128] sm:$0xff]
      %v2090 = vld [vmem:[#allocation2 + $0x130] sm:$0xff]
      %v2091 = vld [vmem:[#allocation2 + $0x138] sm:$0xff]
      %2092 = vst [vmem:[#allocation3 + $0x2e8] sm:$0xff] %v2086
      %2093 = vst [vmem:[#allocation3 + $0x2f0] sm:$0xff] %v2087
      %2094 = vst [vmem:[#allocation3 + $0x2f8] sm:$0xff] %v2088
      %2095 = vst [vmem:[#allocation3 + $0x330] sm:$0xff] %v2089
      %2096 = vst [vmem:[#allocation3 + $0x338] sm:$0xff] %v2090
      %2097 = vst [vmem:[#allocation3 + $0x340] sm:$0xff] %v2091
      %v2098 = vld [vmem:[#allocation2 + $0x88] sm:$0xff]
      %v2099 = vld [vmem:[#allocation2 + $0x90] sm:$0xff]
      %v2100 = vld [vmem:[#allocation2 + $0x98] sm:$0xff]
      %v2101 = vld [vmem:[#allocation2 + $0x150] sm:$0xff]
      %v2102 = vld [vmem:[#allocation2 + $0x158] sm:$0xff]
      %v2103 = vld [vmem:[#allocation2 + $0x160] sm:$0xff]
      %2104 = vst [vmem:[#allocation3 + $0x300] sm:$0xff] %v2098
      %2105 = vst [vmem:[#allocation3 + $0x308] sm:$0xff] %v2099
      %2106 = vst [vmem:[#allocation3 + $0x310] sm:$0xff] %v2100
      %2107 = vst [vmem:[#allocation3 + $0x348] sm:$0xff] %v2101
      %2108 = vst [vmem:[#allocation3 + $0x350] sm:$0xff] %v2102
      %2109 = vst [vmem:[#allocation3 + $0x358] sm:$0xff] %v2103
      %v2110 = vld [vmem:[#allocation2 + $0x50] sm:$0xff]
      %v2111 = vld [vmem:[#allocation2 + $0x58] sm:$0xff]
      %v2112 = vld [vmem:[#allocation2 + $0x60] sm:$0xff]
      %v2113 = vld [vmem:[#allocation2 + $0x118] sm:$0xff]
      %v2114 = vld [vmem:[#allocation2 + $0x120] sm:$0xff]
      %v2115 = vld [vmem:[#allocation2 + $0x128] sm:$0xff]
      %2116 = vst [vmem:[#allocation3 + $0x360] sm:$0xff] %v2110
      %2117 = vst [vmem:[#allocation3 + $0x368] sm:$0xff] %v2111
      %2118 = vst [vmem:[#allocation3 + $0x370] sm:$0xff] %v2112
      %2119 = vst [vmem:[#allocation3 + $0x3a8] sm:$0xff] %v2113
      %2120 = vst [vmem:[#allocation3 + $0x3b0] sm:$0xff] %v2114
      %2121 = vst [vmem:[#allocation3 + $0x3b8] sm:$0xff] %v2115
      %v2122 = vld [vmem:[#allocation2 + $0x78] sm:$0xff]
      %v2123 = vld [vmem:[#allocation2 + $0x80] sm:$0xff]
      %v2124 = vld [vmem:[#allocation2 + $0x88] sm:$0xff]
      %v2125 = vld [vmem:[#allocation2 + $0x140] sm:$0xff]
      %v2126 = vld [vmem:[#allocation2 + $0x148] sm:$0xff]
      %v2127 = vld [vmem:[#allocation2 + $0x150] sm:$0xff]
      %2128 = vst [vmem:[#allocation3 + $0x378] sm:$0xff] %v2122
      %2129 = vst [vmem:[#allocation3 + $0x380] sm:$0xff] %v2123
      %2130 = vst [vmem:[#allocation3 + $0x388] sm:$0xff] %v2124
      %2131 = vst [vmem:[#allocation3 + $0x3c0] sm:$0xff] %v2125
      %2132 = vst [vmem:[#allocation3 + $0x3c8] sm:$0xff] %v2126
      %2133 = vst [vmem:[#allocation3 + $0x3d0] sm:$0xff] %v2127
      %v2134 = vld [vmem:[#allocation2 + $0xa0] sm:$0xff]
      %v2135 = vld [vmem:[#allocation2 + $0xa8] sm:$0xff]
      %v2136 = vld [vmem:[#allocation2 + $0xb0] sm:$0xff]
      %v2137 = vld [vmem:[#allocation2 + $0x168] sm:$0xff]
      %v2138 = vld [vmem:[#allocation2 + $0x170] sm:$0xff]
      %v2139 = vld [vmem:[#allocation2 + $0x178] sm:$0xff]
      %2140 = vst [vmem:[#allocation3 + $0x390] sm:$0xff] %v2134
      %2141 = vst [vmem:[#allocation3 + $0x398] sm:$0xff] %v2135
      %2142 = vst [vmem:[#allocation3 + $0x3a0] sm:$0xff] %v2136
      %2143 = vst [vmem:[#allocation3 + $0x3d8] sm:$0xff] %v2137
      %2144 = vst [vmem:[#allocation3 + $0x3e0] sm:$0xff] %v2138
      %2145 = vst [vmem:[#allocation3 + $0x3e8] sm:$0xff] %v2139
      %v2146 = vld [vmem:[#allocation2 + $0x58] sm:$0xff]
      %v2147 = vld [vmem:[#allocation2 + $0x60] sm:$0xff]
      %v2148 = vld [vmem:[#allocation2 + $0x68] sm:$0xff]
      %v2149 = vld [vmem:[#allocation2 + $0x120] sm:$0xff]
      %v2150 = vld [vmem:[#allocation2 + $0x128] sm:$0xff]
      %v2151 = vld [vmem:[#allocation2 + $0x130] sm:$0xff]
      %2152 = vst [vmem:[#allocation3 + $0x3f0] sm:$0xff] %v2146
      %2153 = vst [vmem:[#allocation3 + $0x3f8] sm:$0xff] %v2147
      %2154 = vst [vmem:[#allocation3 + $0x400] sm:$0xff] %v2148
      %2155 = vst [vmem:[#allocation3 + $0x438] sm:$0xff] %v2149
      %2156 = vst [vmem:[#allocation3 + $0x440] sm:$0xff] %v2150
      %2157 = vst [vmem:[#allocation3 + $0x448] sm:$0xff] %v2151
      %v2158 = vld [vmem:[#allocation2 + $0x80] sm:$0xff]
      %v2159 = vld [vmem:[#allocation2 + $0x88] sm:$0xff]
      %v2160 = vld [vmem:[#allocation2 + $0x90] sm:$0xff]
      %v2161 = vld [vmem:[#allocation2 + $0x148] sm:$0xff]
      %v2162 = vld [vmem:[#allocation2 + $0x150] sm:$0xff]
      %v2163 = vld [vmem:[#allocation2 + $0x158] sm:$0xff]
      %2164 = vst [vmem:[#allocation3 + $0x408] sm:$0xff] %v2158
      %2165 = vst [vmem:[#allocation3 + $0x410] sm:$0xff] %v2159
      %2166 = vst [vmem:[#allocation3 + $0x418] sm:$0xff] %v2160
      %2167 = vst [vmem:[#allocation3 + $0x450] sm:$0xff] %v2161
      %2168 = vst [vmem:[#allocation3 + $0x458] sm:$0xff] %v2162
      %2169 = vst [vmem:[#allocation3 + $0x460] sm:$0xff] %v2163
      %v2170 = vld [vmem:[#allocation2 + $0xa8] sm:$0xff]
      %v2171 = vld [vmem:[#allocation2 + $0xb0] sm:$0xff]
      %v2172 = vld [vmem:[#allocation2 + $0xb8] sm:$0xff]
      %v2173 = vld [vmem:[#allocation2 + $0x170] sm:$0xff]
      %v2174 = vld [vmem:[#allocation2 + $0x178] sm:$0xff]
      %v2175 = vld [vmem:[#allocation2 + $0x180] sm:$0xff]
      %2176 = vst [vmem:[#allocation3 + $0x420] sm:$0xff] %v2170
      %2177 = vst [vmem:[#allocation3 + $0x428] sm:$0xff] %v2171
      %2178 = vst [vmem:[#allocation3 + $0x430] sm:$0xff] %v2172
      %2179 = vst [vmem:[#allocation3 + $0x468] sm:$0xff] %v2173
      %2180 = vst [vmem:[#allocation3 + $0x470] sm:$0xff] %v2174
      %2181 = vst [vmem:[#allocation3 + $0x478] sm:$0xff] %v2175
      %v2182 = vld [vmem:[#allocation2 + $0x60] sm:$0xff]
      %v2183 = vld [vmem:[#allocation2 + $0x68] sm:$0xff]
      %v2184 = vld [vmem:[#allocation2 + $0x70] sm:$0xff]
      %v2185 = vld [vmem:[#allocation2 + $0x128] sm:$0xff]
      %v2186 = vld [vmem:[#allocation2 + $0x130] sm:$0xff]
      %v2187 = vld [vmem:[#allocation2 + $0x138] sm:$0xff]
      %2188 = vst [vmem:[#allocation3 + $0x480] sm:$0xff] %v2182
      %2189 = vst [vmem:[#allocation3 + $0x488] sm:$0xff] %v2183
      %2190 = vst [vmem:[#allocation3 + $0x490] sm:$0xff] %v2184
      %2191 = vst [vmem:[#allocation3 + $0x4c8] sm:$0xff] %v2185
      %2192 = vst [vmem:[#allocation3 + $0x4d0] sm:$0xff] %v2186
      %2193 = vst [vmem:[#allocation3 + $0x4d8] sm:$0xff] %v2187
      %v2194 = vld [vmem:[#allocation2 + $0x88] sm:$0xff]
      %v2195 = vld [vmem:[#allocation2 + $0x90] sm:$0xff]
      %v2196 = vld [vmem:[#allocation2 + $0x98] sm:$0xff]
      %v2197 = vld [vmem:[#allocation2 + $0x150] sm:$0xff]
      %v2198 = vld [vmem:[#allocation2 + $0x158] sm:$0xff]
      %v2199 = vld [vmem:[#allocation2 + $0x160] sm:$0xff]
      %2200 = vst [vmem:[#allocation3 + $0x498] sm:$0xff] %v2194
      %2201 = vst [vmem:[#allocation3 + $0x4a0] sm:$0xff] %v2195
      %2202 = vst [vmem:[#allocation3 + $0x4a8] sm:$0xff] %v2196
      %2203 = vst [vmem:[#allocation3 + $0x4e0] sm:$0xff] %v2197
      %2204 = vst [vmem:[#allocation3 + $0x4e8] sm:$0xff] %v2198
      %2205 = vst [vmem:[#allocation3 + $0x4f0] sm:$0xff] %v2199
      %v2206 = vld [vmem:[#allocation2 + $0xb0] sm:$0xff]
      %v2207 = vld [vmem:[#allocation2 + $0xb8] sm:$0xff]
      %v2208 = vld [vmem:[#allocation2 + $0xc0] sm:$0xff]
      %v2209 = vld [vmem:[#allocation2 + $0x178] sm:$0xff]
      %v2210 = vld [vmem:[#allocation2 + $0x180] sm:$0xff]
      %v2211 = vld [vmem:[#allocation2 + $0x188] sm:$0xff]
      %2212 = vst [vmem:[#allocation3 + $0x4b0] sm:$0xff] %v2206
      %2213 = vst [vmem:[#allocation3 + $0x4b8] sm:$0xff] %v2207
      %2214 = vst [vmem:[#allocation3 + $0x4c0] sm:$0xff] %v2208
      %2215 = vst [vmem:[#allocation3 + $0x4f8] sm:$0xff] %v2209
      %2216 = vst [vmem:[#allocation3 + $0x500] sm:$0xff] %v2210
      %2217 = vst [vmem:[#allocation3 + $0x508] sm:$0xff] %v2211
      %v2218 = vld [vmem:[%s3] sm:$0xff]
      %v2219 = vld [vmem:[%s3 + $0x8] sm:$0xff]
      %v2220 = vld [vmem:[#allocation3] sm:$0xff]
      %v2221 = vld [vmem:[#allocation3 + $0x8] sm:$0xff]
      %v2222 = vld [vmem:[#allocation3 + $0x10] sm:$0xff]
      %v2223 = vld [vmem:[#allocation3 + $0x18] sm:$0xff]
      %v2224 = vld [vmem:[#allocation3 + $0x20] sm:$0xff]
      %v2225 = vld [vmem:[#allocation3 + $0x28] sm:$0xff]
      %v2226 = vld [vmem:[#allocation3 + $0x30] sm:$0xff]
      %v2227 = vld [vmem:[#allocation3 + $0x38] sm:$0xff]
      %v2228 = vld [vmem:[#allocation3 + $0x40] sm:$0xff]
      %v2229 = vld [vmem:[#allocation3 + $0x48] sm:$0xff]
      %v2230 = vld [vmem:[#allocation3 + $0x50] sm:$0xff]
      %v2231 = vld [vmem:[#allocation3 + $0x58] sm:$0xff]
      %v2232 = vld [vmem:[#allocation3 + $0x60] sm:$0xff]
      %v2233 = vld [vmem:[#allocation3 + $0x68] sm:$0xff]
      %v2234 = vld [vmem:[#allocation3 + $0x70] sm:$0xff]
      %v2235 = vld [vmem:[#allocation3 + $0x78] sm:$0xff]
      %v2236 = vld [vmem:[#allocation3 + $0x80] sm:$0xff]
      %v2237 = vld [vmem:[#allocation3 + $0x88] sm:$0xff]
      %v2238 = vld [vmem:[#allocation3 + $0x90] sm:$0xff]
      %v2239 = vld [vmem:[#allocation3 + $0x98] sm:$0xff]
      %v2240 = vld [vmem:[#allocation3 + $0xa0] sm:$0xff]
      %v2241 = vld [vmem:[#allocation3 + $0xa8] sm:$0xff]
      %v2242 = vld [vmem:[#allocation3 + $0xb0] sm:$0xff]
      %v2243 = vld [vmem:[#allocation3 + $0xb8] sm:$0xff]
      %v2244 = vld [vmem:[#allocation3 + $0xc0] sm:$0xff]
      %v2245 = vld [vmem:[#allocation3 + $0xc8] sm:$0xff]
      %v2246 = vld [vmem:[#allocation3 + $0xd0] sm:$0xff]
      %v2247 = vld [vmem:[#allocation3 + $0xd8] sm:$0xff]
      %v2248 = vld [vmem:[#allocation3 + $0xe0] sm:$0xff]
      %v2249 = vld [vmem:[#allocation3 + $0xe8] sm:$0xff]
      %v2250 = vld [vmem:[#allocation3 + $0xf0] sm:$0xff]
      %v2251 = vld [vmem:[#allocation3 + $0xf8] sm:$0xff]
      %v2252 = vld [vmem:[#allocation3 + $0x100] sm:$0xff]
      %v2253 = vld [vmem:[#allocation3 + $0x108] sm:$0xff]
      %v2254 = vld [vmem:[#allocation3 + $0x110] sm:$0xff]
      %v2255 = vld [vmem:[#allocation3 + $0x118] sm:$0xff]
      %v2256 = vld [vmem:[#allocation3 + $0x120] sm:$0xff]
      %v2257 = vld [vmem:[#allocation3 + $0x128] sm:$0xff]
      %v2258 = vld [vmem:[#allocation3 + $0x130] sm:$0xff]
      %v2259 = vld [vmem:[#allocation3 + $0x138] sm:$0xff]
      %v2260 = vld [vmem:[#allocation3 + $0x140] sm:$0xff]
      %v2261 = vld [vmem:[#allocation3 + $0x148] sm:$0xff]
      %v2262 = vld [vmem:[#allocation3 + $0x150] sm:$0xff]
      %v2263 = vld [vmem:[#allocation3 + $0x158] sm:$0xff]
      %v2264 = vld [vmem:[#allocation3 + $0x160] sm:$0xff]
      %v2265 = vld [vmem:[#allocation3 + $0x168] sm:$0xff]
      %v2266 = vld [vmem:[#allocation3 + $0x170] sm:$0xff]
      %v2267 = vld [vmem:[#allocation3 + $0x178] sm:$0xff]
      %v2268 = vld [vmem:[#allocation3 + $0x180] sm:$0xff]
      %v2269 = vld [vmem:[#allocation3 + $0x188] sm:$0xff]
      %v2270 = vld [vmem:[#allocation3 + $0x190] sm:$0xff]
      %v2271 = vld [vmem:[#allocation3 + $0x198] sm:$0xff]
      %v2272 = vld [vmem:[#allocation3 + $0x1a0] sm:$0xff]
      %v2273 = vld [vmem:[#allocation3 + $0x1a8] sm:$0xff]
      %v2274 = vld [vmem:[#allocation3 + $0x1b0] sm:$0xff]
      %v2275 = vld [vmem:[#allocation3 + $0x1b8] sm:$0xff]
      %v2276 = vld [vmem:[#allocation3 + $0x1c0] sm:$0xff]
      %v2277 = vld [vmem:[#allocation3 + $0x1c8] sm:$0xff]
      %v2278 = vld [vmem:[#allocation3 + $0x1d0] sm:$0xff]
      %v2279 = vld [vmem:[#allocation3 + $0x1d8] sm:$0xff]
      %v2280 = vld [vmem:[#allocation3 + $0x1e0] sm:$0xff]
      %v2281 = vld [vmem:[#allocation3 + $0x1e8] sm:$0xff]
      %v2282 = vld [vmem:[#allocation3 + $0x1f0] sm:$0xff]
      %v2283 = vld [vmem:[#allocation3 + $0x1f8] sm:$0xff]
      %v2284 = vld [vmem:[#allocation3 + $0x200] sm:$0xff]
      %v2285 = vld [vmem:[#allocation3 + $0x208] sm:$0xff]
      %v2286 = vld [vmem:[#allocation3 + $0x210] sm:$0xff]
      %v2287 = vld [vmem:[#allocation3 + $0x218] sm:$0xff]
      %v2288 = vld [vmem:[#allocation3 + $0x220] sm:$0xff]
      %v2289 = vld [vmem:[#allocation3 + $0x228] sm:$0xff]
      %v2290 = vld [vmem:[#allocation3 + $0x230] sm:$0xff]
      %v2291 = vld [vmem:[#allocation3 + $0x238] sm:$0xff]
      %v2292 = vld [vmem:[#allocation3 + $0x240] sm:$0xff]
      %v2293 = vld [vmem:[#allocation3 + $0x248] sm:$0xff]
      %v2294 = vld [vmem:[#allocation3 + $0x250] sm:$0xff]
      %v2295 = vld [vmem:[#allocation3 + $0x258] sm:$0xff]
      %v2296 = vld [vmem:[#allocation3 + $0x260] sm:$0xff]
      %v2297 = vld [vmem:[#allocation3 + $0x268] sm:$0xff]
      %v2298 = vld [vmem:[#allocation3 + $0x270] sm:$0xff]
      %v2299 = vld [vmem:[#allocation3 + $0x278] sm:$0xff]
      %v2300 = vld [vmem:[#allocation3 + $0x280] sm:$0xff]
      %v2301 = vld [vmem:[#allocation3 + $0x288] sm:$0xff]
      %v2302 = vld [vmem:[#allocation3 + $0x290] sm:$0xff]
      %v2303 = vld [vmem:[#allocation3 + $0x298] sm:$0xff]
      %v2304 = vld [vmem:[#allocation3 + $0x2a0] sm:$0xff]
      %v2305 = vld [vmem:[#allocation3 + $0x2a8] sm:$0xff]
      %v2306 = vld [vmem:[#allocation3 + $0x2b0] sm:$0xff]
      %v2307 = vld [vmem:[#allocation3 + $0x2b8] sm:$0xff]
      %v2308 = vld [vmem:[#allocation3 + $0x2c0] sm:$0xff]
      %v2309 = vld [vmem:[#allocation3 + $0x2c8] sm:$0xff]
      %v2310 = vld [vmem:[#allocation3 + $0x2d0] sm:$0xff]
      %v2311 = vld [vmem:[#allocation3 + $0x2d8] sm:$0xff]
      %v2312 = vld [vmem:[#allocation3 + $0x2e0] sm:$0xff]
      %v2313 = vld [vmem:[#allocation3 + $0x2e8] sm:$0xff]
      %v2314 = vld [vmem:[#allocation3 + $0x2f0] sm:$0xff]
      %v2315 = vld [vmem:[#allocation3 + $0x2f8] sm:$0xff]
      %v2316 = vld [vmem:[#allocation3 + $0x300] sm:$0xff]
      %v2317 = vld [vmem:[#allocation3 + $0x308] sm:$0xff]
      %v2318 = vld [vmem:[#allocation3 + $0x310] sm:$0xff]
      %v2319 = vld [vmem:[#allocation3 + $0x318] sm:$0xff]
      %v2320 = vld [vmem:[#allocation3 + $0x320] sm:$0xff]
      %v2321 = vld [vmem:[#allocation3 + $0x328] sm:$0xff]
      %v2322 = vld [vmem:[#allocation3 + $0x330] sm:$0xff]
      %v2323 = vld [vmem:[#allocation3 + $0x338] sm:$0xff]
      %v2324 = vld [vmem:[#allocation3 + $0x340] sm:$0xff]
      %v2325 = vld [vmem:[#allocation3 + $0x348] sm:$0xff]
      %v2326 = vld [vmem:[#allocation3 + $0x350] sm:$0xff]
      %v2327 = vld [vmem:[#allocation3 + $0x358] sm:$0xff]
      %v2328 = vld [vmem:[#allocation3 + $0x360] sm:$0xff]
      %v2329 = vld [vmem:[#allocation3 + $0x368] sm:$0xff]
      %v2330 = vld [vmem:[#allocation3 + $0x370] sm:$0xff]
      %v2331 = vld [vmem:[#allocation3 + $0x378] sm:$0xff]
      %v2332 = vld [vmem:[#allocation3 + $0x380] sm:$0xff]
      %v2333 = vld [vmem:[#allocation3 + $0x388] sm:$0xff]
      %v2334 = vld [vmem:[#allocation3 + $0x390] sm:$0xff]
      %v2335 = vld [vmem:[#allocation3 + $0x398] sm:$0xff]
      %v2336 = vld [vmem:[#allocation3 + $0x3a0] sm:$0xff]
      %v2337 = vld [vmem:[#allocation3 + $0x3a8] sm:$0xff]
      %v2338 = vld [vmem:[#allocation3 + $0x3b0] sm:$0xff]
      %v2339 = vld [vmem:[#allocation3 + $0x3b8] sm:$0xff]
      %v2340 = vld [vmem:[#allocation3 + $0x3c0] sm:$0xff]
      %v2341 = vld [vmem:[#allocation3 + $0x3c8] sm:$0xff]
      %v2342 = vld [vmem:[#allocation3 + $0x3d0] sm:$0xff]
      %v2343 = vld [vmem:[#allocation3 + $0x3d8] sm:$0xff]
      %v2344 = vld [vmem:[#allocation3 + $0x3e0] sm:$0xff]
      %v2345 = vld [vmem:[#allocation3 + $0x3e8] sm:$0xff]
      %v2346 = vld [vmem:[#allocation3 + $0x3f0] sm:$0xff]
      %v2347 = vld [vmem:[#allocation3 + $0x3f8] sm:$0xff]
      %v2348 = vld [vmem:[#allocation3 + $0x400] sm:$0xff]
      %v2349 = vld [vmem:[#allocation3 + $0x408] sm:$0xff]
      %v2350 = vld [vmem:[#allocation3 + $0x410] sm:$0xff]
      %v2351 = vld [vmem:[#allocation3 + $0x418] sm:$0xff]
      %v2352 = vld [vmem:[#allocation3 + $0x420] sm:$0xff]
      %v2353 = vld [vmem:[#allocation3 + $0x428] sm:$0xff]
      %v2354 = vld [vmem:[#allocation3 + $0x430] sm:$0xff]
      %v2355 = vld [vmem:[#allocation3 + $0x438] sm:$0xff]
      %v2356 = vld [vmem:[#allocation3 + $0x440] sm:$0xff]
      %v2357 = vld [vmem:[#allocation3 + $0x448] sm:$0xff]
      %v2358 = vld [vmem:[#allocation3 + $0x450] sm:$0xff]
      %v2359 = vld [vmem:[#allocation3 + $0x458] sm:$0xff]
      %v2360 = vld [vmem:[#allocation3 + $0x460] sm:$0xff]
      %v2361 = vld [vmem:[#allocation3 + $0x468] sm:$0xff]
      %v2362 = vld [vmem:[#allocation3 + $0x470] sm:$0xff]
      %v2363 = vld [vmem:[#allocation3 + $0x478] sm:$0xff]
      %v2364 = vld [vmem:[#allocation3 + $0x480] sm:$0xff]
      %v2365 = vld [vmem:[#allocation3 + $0x488] sm:$0xff]
      %v2366 = vld [vmem:[#allocation3 + $0x490] sm:$0xff]
      %v2367 = vld [vmem:[#allocation3 + $0x498] sm:$0xff]
      %v2368 = vld [vmem:[#allocation3 + $0x4a0] sm:$0xff]
      %v2369 = vld [vmem:[#allocation3 + $0x4a8] sm:$0xff]
      %v2370 = vld [vmem:[#allocation3 + $0x4b0] sm:$0xff]
      %v2371 = vld [vmem:[#allocation3 + $0x4b8] sm:$0xff]
      %v2372 = vld [vmem:[#allocation3 + $0x4c0] sm:$0xff]
      %v2373 = vld [vmem:[#allocation3 + $0x4c8] sm:$0xff]
      %v2374 = vld [vmem:[#allocation3 + $0x4d0] sm:$0xff]
      %v2375 = vld [vmem:[#allocation3 + $0x4d8] sm:$0xff]
      %v2376 = vld [vmem:[#allocation3 + $0x4e0] sm:$0xff]
      %v2377 = vld [vmem:[#allocation3 + $0x4e8] sm:$0xff]
      %v2378 = vld [vmem:[#allocation3 + $0x4f0] sm:$0xff]
      %v2379 = vld [vmem:[#allocation3 + $0x4f8] sm:$0xff]
      %v2380 = vld [vmem:[#allocation3 + $0x500] sm:$0xff]
      %v2381 = vld [vmem:[#allocation3 + $0x508] sm:$0xff]
      %v2382 = vld [vmem:[%s4] sm:$0xff]
      %v2383 = vld [vmem:[%s4 + $0x8] sm:$0xff]
      %2385 = vset.pattern.permute.xlu0 0
      %2386 = vperm.xlu0 %2385, %v2382
      %v2387 = vpop.permute.xlu0 %2386
      %2390 = vset.pattern.permute.xlu0 0
      %2391 = vperm.xlu0 %2390, %v2383
      %v2392 = vpop.permute.xlu0 %2391
      %v2396 = vunpack.c.l.b16 %v2218
      %v2397 = vunpack.c.h.b16 %v2218
      %v2398 = vunpack.c.l.b16 %v2219
      %v2399 = vunpack.c.h.b16 %v2219
      %v2400 = vpack.c.b16 %v2398, %v2396
      %v2401 = vpack.c.b16 %v2399, %v2397
      %v2565 = vunpack.c.l.b16 %v2220
      %v2566 = vunpack.c.h.b16 %v2220
      %v2567 = vunpack.c.l.b16 %v2221
      %v2568 = vunpack.c.h.b16 %v2221
      %v2569 = vunpack.c.l.b16 %v2222
      %v2570 = vunpack.c.h.b16 %v2222
      %v2571 = vunpack.c.l.b16 %v2223
      %v2572 = vunpack.c.h.b16 %v2223
      %v2573 = vunpack.c.l.b16 %v2224
      %v2574 = vunpack.c.h.b16 %v2224
      %v2575 = vunpack.c.l.b16 %v2225
      %v2576 = vunpack.c.h.b16 %v2225
      %v2577 = vunpack.c.l.b16 %v2226
      %v2578 = vunpack.c.h.b16 %v2226
      %v2579 = vunpack.c.l.b16 %v2227
      %v2580 = vunpack.c.h.b16 %v2227
      %v2581 = vunpack.c.l.b16 %v2228
      %v2582 = vunpack.c.h.b16 %v2228
      %v2583 = vunpack.c.l.b16 %v2229
      %v2584 = vunpack.c.h.b16 %v2229
      %v2585 = vunpack.c.l.b16 %v2230
      %v2586 = vunpack.c.h.b16 %v2230
      %v2587 = vunpack.c.l.b16 %v2231
      %v2588 = vunpack.c.h.b16 %v2231
      %v2589 = vunpack.c.l.b16 %v2232
      %v2590 = vunpack.c.h.b16 %v2232
      %v2591 = vunpack.c.l.b16 %v2233
      %v2592 = vunpack.c.h.b16 %v2233
      %v2593 = vunpack.c.l.b16 %v2234
      %v2594 = vunpack.c.h.b16 %v2234
      %v2595 = vunpack.c.l.b16 %v2235
      %v2596 = vunpack.c.h.b16 %v2235
      %v2597 = vunpack.c.l.b16 %v2236
      %v2598 = vunpack.c.h.b16 %v2236
      %v2599 = vunpack.c.l.b16 %v2237
      %v2600 = vunpack.c.h.b16 %v2237
      %v2601 = vunpack.c.l.b16 %v2238
      %v2602 = vunpack.c.h.b16 %v2238
      %v2603 = vunpack.c.l.b16 %v2239
      %v2604 = vunpack.c.h.b16 %v2239
      %v2605 = vunpack.c.l.b16 %v2240
      %v2606 = vunpack.c.h.b16 %v2240
      %v2607 = vunpack.c.l.b16 %v2241
      %v2608 = vunpack.c.h.b16 %v2241
      %v2609 = vunpack.c.l.b16 %v2242
      %v2610 = vunpack.c.h.b16 %v2242
      %v2611 = vunpack.c.l.b16 %v2243
      %v2612 = vunpack.c.h.b16 %v2243
      %v2613 = vunpack.c.l.b16 %v2244
      %v2614 = vunpack.c.h.b16 %v2244
      %v2615 = vunpack.c.l.b16 %v2245
      %v2616 = vunpack.c.h.b16 %v2245
      %v2617 = vunpack.c.l.b16 %v2246
      %v2618 = vunpack.c.h.b16 %v2246
      %v2619 = vunpack.c.l.b16 %v2247
      %v2620 = vunpack.c.h.b16 %v2247
      %v2621 = vunpack.c.l.b16 %v2248
      %v2622 = vunpack.c.h.b16 %v2248
      %v2623 = vunpack.c.l.b16 %v2249
      %v2624 = vunpack.c.h.b16 %v2249
      %v2625 = vunpack.c.l.b16 %v2250
      %v2626 = vunpack.c.h.b16 %v2250
      %v2627 = vunpack.c.l.b16 %v2251
      %v2628 = vunpack.c.h.b16 %v2251
      %v2629 = vunpack.c.l.b16 %v2252
      %v2630 = vunpack.c.h.b16 %v2252
      %v2631 = vunpack.c.l.b16 %v2253
      %v2632 = vunpack.c.h.b16 %v2253
      %v2633 = vunpack.c.l.b16 %v2254
      %v2634 = vunpack.c.h.b16 %v2254
      %v2635 = vunpack.c.l.b16 %v2255
      %v2636 = vunpack.c.h.b16 %v2255
      %v2637 = vunpack.c.l.b16 %v2256
      %v2638 = vunpack.c.h.b16 %v2256
      %v2639 = vunpack.c.l.b16 %v2257
      %v2640 = vunpack.c.h.b16 %v2257
      %v2641 = vunpack.c.l.b16 %v2258
      %v2642 = vunpack.c.h.b16 %v2258
      %v2643 = vunpack.c.l.b16 %v2259
      %v2644 = vunpack.c.h.b16 %v2259
      %v2645 = vunpack.c.l.b16 %v2260
      %v2646 = vunpack.c.h.b16 %v2260
      %v2647 = vunpack.c.l.b16 %v2261
      %v2648 = vunpack.c.h.b16 %v2261
      %v2649 = vunpack.c.l.b16 %v2262
      %v2650 = vunpack.c.h.b16 %v2262
      %v2651 = vunpack.c.l.b16 %v2263
      %v2652 = vunpack.c.h.b16 %v2263
      %v2653 = vunpack.c.l.b16 %v2264
      %v2654 = vunpack.c.h.b16 %v2264
      %v2655 = vunpack.c.l.b16 %v2265
      %v2656 = vunpack.c.h.b16 %v2265
      %v2657 = vunpack.c.l.b16 %v2266
      %v2658 = vunpack.c.h.b16 %v2266
      %v2659 = vunpack.c.l.b16 %v2267
      %v2660 = vunpack.c.h.b16 %v2267
      %v2661 = vunpack.c.l.b16 %v2268
      %v2662 = vunpack.c.h.b16 %v2268
      %v2663 = vunpack.c.l.b16 %v2269
      %v2664 = vunpack.c.h.b16 %v2269
      %v2665 = vunpack.c.l.b16 %v2270
      %v2666 = vunpack.c.h.b16 %v2270
      %v2667 = vunpack.c.l.b16 %v2271
      %v2668 = vunpack.c.h.b16 %v2271
      %v2669 = vunpack.c.l.b16 %v2272
      %v2670 = vunpack.c.h.b16 %v2272
      %v2671 = vunpack.c.l.b16 %v2273
      %v2672 = vunpack.c.h.b16 %v2273
      %v2673 = vunpack.c.l.b16 %v2274
      %v2674 = vunpack.c.h.b16 %v2274
      %v2675 = vunpack.c.l.b16 %v2275
      %v2676 = vunpack.c.h.b16 %v2275
      %v2677 = vunpack.c.l.b16 %v2276
      %v2678 = vunpack.c.h.b16 %v2276
      %v2679 = vunpack.c.l.b16 %v2277
      %v2680 = vunpack.c.h.b16 %v2277
      %v2681 = vunpack.c.l.b16 %v2278
      %v2682 = vunpack.c.h.b16 %v2278
      %v2683 = vunpack.c.l.b16 %v2279
      %v2684 = vunpack.c.h.b16 %v2279
      %v2685 = vunpack.c.l.b16 %v2280
      %v2686 = vunpack.c.h.b16 %v2280
      %v2687 = vunpack.c.l.b16 %v2281
      %v2688 = vunpack.c.h.b16 %v2281
      %v2689 = vunpack.c.l.b16 %v2282
      %v2690 = vunpack.c.h.b16 %v2282
      %v2691 = vunpack.c.l.b16 %v2283
      %v2692 = vunpack.c.h.b16 %v2283
      %v2693 = vunpack.c.l.b16 %v2284
      %v2694 = vunpack.c.h.b16 %v2284
      %v2695 = vunpack.c.l.b16 %v2285
      %v2696 = vunpack.c.h.b16 %v2285
      %v2697 = vunpack.c.l.b16 %v2286
      %v2698 = vunpack.c.h.b16 %v2286
      %v2699 = vunpack.c.l.b16 %v2287
      %v2700 = vunpack.c.h.b16 %v2287
      %v2701 = vunpack.c.l.b16 %v2288
      %v2702 = vunpack.c.h.b16 %v2288
      %v2703 = vunpack.c.l.b16 %v2289
      %v2704 = vunpack.c.h.b16 %v2289
      %v2705 = vunpack.c.l.b16 %v2290
      %v2706 = vunpack.c.h.b16 %v2290
      %v2707 = vunpack.c.l.b16 %v2291
      %v2708 = vunpack.c.h.b16 %v2291
      %v2709 = vunpack.c.l.b16 %v2292
      %v2710 = vunpack.c.h.b16 %v2292
      %v2711 = vunpack.c.l.b16 %v2293
      %v2712 = vunpack.c.h.b16 %v2293
      %v2713 = vunpack.c.l.b16 %v2294
      %v2714 = vunpack.c.h.b16 %v2294
      %v2715 = vunpack.c.l.b16 %v2295
      %v2716 = vunpack.c.h.b16 %v2295
      %v2717 = vunpack.c.l.b16 %v2296
      %v2718 = vunpack.c.h.b16 %v2296
      %v2719 = vunpack.c.l.b16 %v2297
      %v2720 = vunpack.c.h.b16 %v2297
      %v2721 = vunpack.c.l.b16 %v2298
      %v2722 = vunpack.c.h.b16 %v2298
      %v2723 = vunpack.c.l.b16 %v2299
      %v2724 = vunpack.c.h.b16 %v2299
      %v2725 = vunpack.c.l.b16 %v2300
      %v2726 = vunpack.c.h.b16 %v2300
      %v2727 = vunpack.c.l.b16 %v2301
      %v2728 = vunpack.c.h.b16 %v2301
      %v2729 = vunpack.c.l.b16 %v2302
      %v2730 = vunpack.c.h.b16 %v2302
      %v2731 = vunpack.c.l.b16 %v2303
      %v2732 = vunpack.c.h.b16 %v2303
      %v2733 = vunpack.c.l.b16 %v2304
      %v2734 = vunpack.c.h.b16 %v2304
      %v2735 = vunpack.c.l.b16 %v2305
      %v2736 = vunpack.c.h.b16 %v2305
      %v2737 = vunpack.c.l.b16 %v2306
      %v2738 = vunpack.c.h.b16 %v2306
      %v2739 = vunpack.c.l.b16 %v2307
      %v2740 = vunpack.c.h.b16 %v2307
      %v2741 = vunpack.c.l.b16 %v2308
      %v2742 = vunpack.c.h.b16 %v2308
      %v2743 = vunpack.c.l.b16 %v2309
      %v2744 = vunpack.c.h.b16 %v2309
      %v2745 = vunpack.c.l.b16 %v2310
      %v2746 = vunpack.c.h.b16 %v2310
      %v2747 = vunpack.c.l.b16 %v2311
      %v2748 = vunpack.c.h.b16 %v2311
      %v2749 = vunpack.c.l.b16 %v2312
      %v2750 = vunpack.c.h.b16 %v2312
      %v2751 = vunpack.c.l.b16 %v2313
      %v2752 = vunpack.c.h.b16 %v2313
      %v2753 = vunpack.c.l.b16 %v2314
      %v2754 = vunpack.c.h.b16 %v2314
      %v2755 = vunpack.c.l.b16 %v2315
      %v2756 = vunpack.c.h.b16 %v2315
      %v2757 = vunpack.c.l.b16 %v2316
      %v2758 = vunpack.c.h.b16 %v2316
      %v2759 = vunpack.c.l.b16 %v2317
      %v2760 = vunpack.c.h.b16 %v2317
      %v2761 = vunpack.c.l.b16 %v2318
      %v2762 = vunpack.c.h.b16 %v2318
      %v2763 = vunpack.c.l.b16 %v2319
      %v2764 = vunpack.c.h.b16 %v2319
      %v2765 = vunpack.c.l.b16 %v2320
      %v2766 = vunpack.c.h.b16 %v2320
      %v2767 = vunpack.c.l.b16 %v2321
      %v2768 = vunpack.c.h.b16 %v2321
      %v2769 = vunpack.c.l.b16 %v2322
      %v2770 = vunpack.c.h.b16 %v2322
      %v2771 = vunpack.c.l.b16 %v2323
      %v2772 = vunpack.c.h.b16 %v2323
      %v2773 = vunpack.c.l.b16 %v2324
      %v2774 = vunpack.c.h.b16 %v2324
      %v2775 = vunpack.c.l.b16 %v2325
      %v2776 = vunpack.c.h.b16 %v2325
      %v2777 = vunpack.c.l.b16 %v2326
      %v2778 = vunpack.c.h.b16 %v2326
      %v2779 = vunpack.c.l.b16 %v2327
      %v2780 = vunpack.c.h.b16 %v2327
      %v2781 = vunpack.c.l.b16 %v2328
      %v2782 = vunpack.c.h.b16 %v2328
      %v2783 = vunpack.c.l.b16 %v2329
      %v2784 = vunpack.c.h.b16 %v2329
      %v2785 = vunpack.c.l.b16 %v2330
      %v2786 = vunpack.c.h.b16 %v2330
      %v2787 = vunpack.c.l.b16 %v2331
      %v2788 = vunpack.c.h.b16 %v2331
      %v2789 = vunpack.c.l.b16 %v2332
      %v2790 = vunpack.c.h.b16 %v2332
      %v2791 = vunpack.c.l.b16 %v2333
      %v2792 = vunpack.c.h.b16 %v2333
      %v2793 = vunpack.c.l.b16 %v2334
      %v2794 = vunpack.c.h.b16 %v2334
      %v2795 = vunpack.c.l.b16 %v2335
      %v2796 = vunpack.c.h.b16 %v2335
      %v2797 = vunpack.c.l.b16 %v2336
      %v2798 = vunpack.c.h.b16 %v2336
      %v2799 = vunpack.c.l.b16 %v2337
      %v2800 = vunpack.c.h.b16 %v2337
      %v2801 = vunpack.c.l.b16 %v2338
      %v2802 = vunpack.c.h.b16 %v2338
      %v2803 = vunpack.c.l.b16 %v2339
      %v2804 = vunpack.c.h.b16 %v2339
      %v2805 = vunpack.c.l.b16 %v2340
      %v2806 = vunpack.c.h.b16 %v2340
      %v2807 = vunpack.c.l.b16 %v2341
      %v2808 = vunpack.c.h.b16 %v2341
      %v2809 = vunpack.c.l.b16 %v2342
      %v2810 = vunpack.c.h.b16 %v2342
      %v2811 = vunpack.c.l.b16 %v2343
      %v2812 = vunpack.c.h.b16 %v2343
      %v2813 = vunpack.c.l.b16 %v2344
      %v2814 = vunpack.c.h.b16 %v2344
      %v2815 = vunpack.c.l.b16 %v2345
      %v2816 = vunpack.c.h.b16 %v2345
      %v2817 = vunpack.c.l.b16 %v2346
      %v2818 = vunpack.c.h.b16 %v2346
      %v2819 = vunpack.c.l.b16 %v2347
      %v2820 = vunpack.c.h.b16 %v2347
      %v2821 = vunpack.c.l.b16 %v2348
      %v2822 = vunpack.c.h.b16 %v2348
      %v2823 = vunpack.c.l.b16 %v2349
      %v2824 = vunpack.c.h.b16 %v2349
      %v2825 = vunpack.c.l.b16 %v2350
      %v2826 = vunpack.c.h.b16 %v2350
      %v2827 = vunpack.c.l.b16 %v2351
      %v2828 = vunpack.c.h.b16 %v2351
      %v2829 = vunpack.c.l.b16 %v2352
      %v2830 = vunpack.c.h.b16 %v2352
      %v2831 = vunpack.c.l.b16 %v2353
      %v2832 = vunpack.c.h.b16 %v2353
      %v2833 = vunpack.c.l.b16 %v2354
      %v2834 = vunpack.c.h.b16 %v2354
      %v2835 = vunpack.c.l.b16 %v2355
      %v2836 = vunpack.c.h.b16 %v2355
      %v2837 = vunpack.c.l.b16 %v2356
      %v2838 = vunpack.c.h.b16 %v2356
      %v2839 = vunpack.c.l.b16 %v2357
      %v2840 = vunpack.c.h.b16 %v2357
      %v2841 = vunpack.c.l.b16 %v2358
      %v2842 = vunpack.c.h.b16 %v2358
      %v2843 = vunpack.c.l.b16 %v2359
      %v2844 = vunpack.c.h.b16 %v2359
      %v2845 = vunpack.c.l.b16 %v2360
      %v2846 = vunpack.c.h.b16 %v2360
      %v2847 = vunpack.c.l.b16 %v2361
      %v2848 = vunpack.c.h.b16 %v2361
      %v2849 = vunpack.c.l.b16 %v2362
      %v2850 = vunpack.c.h.b16 %v2362
      %v2851 = vunpack.c.l.b16 %v2363
      %v2852 = vunpack.c.h.b16 %v2363
      %v2853 = vunpack.c.l.b16 %v2364
      %v2854 = vunpack.c.h.b16 %v2364
      %v2855 = vunpack.c.l.b16 %v2365
      %v2856 = vunpack.c.h.b16 %v2365
      %v2857 = vunpack.c.l.b16 %v2366
      %v2858 = vunpack.c.h.b16 %v2366
      %v2859 = vunpack.c.l.b16 %v2367
      %v2860 = vunpack.c.h.b16 %v2367
      %v2861 = vunpack.c.l.b16 %v2368
      %v2862 = vunpack.c.h.b16 %v2368
      %v2863 = vunpack.c.l.b16 %v2369
      %v2864 = vunpack.c.h.b16 %v2369
      %v2865 = vunpack.c.l.b16 %v2370
      %v2866 = vunpack.c.h.b16 %v2370
      %v2867 = vunpack.c.l.b16 %v2371
      %v2868 = vunpack.c.h.b16 %v2371
      %v2869 = vunpack.c.l.b16 %v2372
      %v2870 = vunpack.c.h.b16 %v2372
      %v2871 = vunpack.c.l.b16 %v2373
      %v2872 = vunpack.c.h.b16 %v2373
      %v2873 = vunpack.c.l.b16 %v2374
      %v2874 = vunpack.c.h.b16 %v2374
      %v2875 = vunpack.c.l.b16 %v2375
      %v2876 = vunpack.c.h.b16 %v2375
      %v2877 = vunpack.c.l.b16 %v2376
      %v2878 = vunpack.c.h.b16 %v2376
      %v2879 = vunpack.c.l.b16 %v2377
      %v2880 = vunpack.c.h.b16 %v2377
      %v2881 = vunpack.c.l.b16 %v2378
      %v2882 = vunpack.c.h.b16 %v2378
      %v2883 = vunpack.c.l.b16 %v2379
      %v2884 = vunpack.c.h.b16 %v2379
      %v2885 = vunpack.c.l.b16 %v2380
      %v2886 = vunpack.c.h.b16 %v2380
      %v2887 = vunpack.c.l.b16 %v2381
      %v2888 = vunpack.c.h.b16 %v2381
      %v2889 = vpack.c.b16 %v2583, %v2565
      %v2890 = vpack.c.b16 %v2584, %v2566
      %v2891 = vpack.c.b16 %v2585, %v2567
      %v2892 = vpack.c.b16 %v2586, %v2568
      %v2893 = vpack.c.b16 %v2587, %v2569
      %v2894 = vpack.c.b16 %v2588, %v2570
      %v2895 = vpack.c.b16 %v2589, %v2571
      %v2896 = vpack.c.b16 %v2590, %v2572
      %v2897 = vpack.c.b16 %v2591, %v2573
      %v2898 = vpack.c.b16 %v2592, %v2574
      %v2899 = vpack.c.b16 %v2593, %v2575
      %v2900 = vpack.c.b16 %v2594, %v2576
      %v2901 = vpack.c.b16 %v2595, %v2577
      %v2902 = vpack.c.b16 %v2596, %v2578
      %v2903 = vpack.c.b16 %v2597, %v2579
      %v2904 = vpack.c.b16 %v2598, %v2580
      %v2905 = vpack.c.b16 %v2599, %v2581
      %v2906 = vpack.c.b16 %v2600, %v2582
      %v2907 = vpack.c.b16 %v2619, %v2601
      %v2908 = vpack.c.b16 %v2620, %v2602
      %v2909 = vpack.c.b16 %v2621, %v2603
      %v2910 = vpack.c.b16 %v2622, %v2604
      %v2911 = vpack.c.b16 %v2623, %v2605
      %v2912 = vpack.c.b16 %v2624, %v2606
      %v2913 = vpack.c.b16 %v2625, %v2607
      %v2914 = vpack.c.b16 %v2626, %v2608
      %v2915 = vpack.c.b16 %v2627, %v2609
      %v2916 = vpack.c.b16 %v2628, %v2610
      %v2917 = vpack.c.b16 %v2629, %v2611
      %v2918 = vpack.c.b16 %v2630, %v2612
      %v2919 = vpack.c.b16 %v2631, %v2613
      %v2920 = vpack.c.b16 %v2632, %v2614
      %v2921 = vpack.c.b16 %v2633, %v2615
      %v2922 = vpack.c.b16 %v2634, %v2616
      %v2923 = vpack.c.b16 %v2635, %v2617
      %v2924 = vpack.c.b16 %v2636, %v2618
      %v2925 = vpack.c.b16 %v2655, %v2637
      %v2926 = vpack.c.b16 %v2656, %v2638
      %v2927 = vpack.c.b16 %v2657, %v2639
      %v2928 = vpack.c.b16 %v2658, %v2640
      %v2929 = vpack.c.b16 %v2659, %v2641
      %v2930 = vpack.c.b16 %v2660, %v2642
      %v2931 = vpack.c.b16 %v2661, %v2643
      %v2932 = vpack.c.b16 %v2662, %v2644
      %v2933 = vpack.c.b16 %v2663, %v2645
      %v2934 = vpack.c.b16 %v2664, %v2646
      %v2935 = vpack.c.b16 %v2665, %v2647
      %v2936 = vpack.c.b16 %v2666, %v2648
      %v2937 = vpack.c.b16 %v2667, %v2649
      %v2938 = vpack.c.b16 %v2668, %v2650
      %v2939 = vpack.c.b16 %v2669, %v2651
      %v2940 = vpack.c.b16 %v2670, %v2652
      %v2941 = vpack.c.b16 %v2671, %v2653
      %v2942 = vpack.c.b16 %v2672, %v2654
      %v2943 = vpack.c.b16 %v2691, %v2673
      %v2944 = vpack.c.b16 %v2692, %v2674
      %v2945 = vpack.c.b16 %v2693, %v2675
      %v2946 = vpack.c.b16 %v2694, %v2676
      %v2947 = vpack.c.b16 %v2695, %v2677
      %v2948 = vpack.c.b16 %v2696, %v2678
      %v2949 = vpack.c.b16 %v2697, %v2679
      %v2950 = vpack.c.b16 %v2698, %v2680
      %v2951 = vpack.c.b16 %v2699, %v2681
      %v2952 = vpack.c.b16 %v2700, %v2682
      %v2953 = vpack.c.b16 %v2701, %v2683
      %v2954 = vpack.c.b16 %v2702, %v2684
      %v2955 = vpack.c.b16 %v2703, %v2685
      %v2956 = vpack.c.b16 %v2704, %v2686
      %v2957 = vpack.c.b16 %v2705, %v2687
      %v2958 = vpack.c.b16 %v2706, %v2688
      %v2959 = vpack.c.b16 %v2707, %v2689
      %v2960 = vpack.c.b16 %v2708, %v2690
      %v2961 = vpack.c.b16 %v2727, %v2709
      %v2962 = vpack.c.b16 %v2728, %v2710
      %v2963 = vpack.c.b16 %v2729, %v2711
      %v2964 = vpack.c.b16 %v2730, %v2712
      %v2965 = vpack.c.b16 %v2731, %v2713
      %v2966 = vpack.c.b16 %v2732, %v2714
      %v2967 = vpack.c.b16 %v2733, %v2715
      %v2968 = vpack.c.b16 %v2734, %v2716
      %v2969 = vpack.c.b16 %v2735, %v2717
      %v2970 = vpack.c.b16 %v2736, %v2718
      %v2971 = vpack.c.b16 %v2737, %v2719
      %v2972 = vpack.c.b16 %v2738, %v2720
      %v2973 = vpack.c.b16 %v2739, %v2721
      %v2974 = vpack.c.b16 %v2740, %v2722
      %v2975 = vpack.c.b16 %v2741, %v2723
      %v2976 = vpack.c.b16 %v2742, %v2724
      %v2977 = vpack.c.b16 %v2743, %v2725
      %v2978 = vpack.c.b16 %v2744, %v2726
      %v2979 = vpack.c.b16 %v2763, %v2745
      %v2980 = vpack.c.b16 %v2764, %v2746
      %v2981 = vpack.c.b16 %v2765, %v2747
      %v2982 = vpack.c.b16 %v2766, %v2748
      %v2983 = vpack.c.b16 %v2767, %v2749
      %v2984 = vpack.c.b16 %v2768, %v2750
      %v2985 = vpack.c.b16 %v2769, %v2751
      %v2986 = vpack.c.b16 %v2770, %v2752
      %v2987 = vpack.c.b16 %v2771, %v2753
      %v2988 = vpack.c.b16 %v2772, %v2754
      %v2989 = vpack.c.b16 %v2773, %v2755
      %v2990 = vpack.c.b16 %v2774, %v2756
      %v2991 = vpack.c.b16 %v2775, %v2757
      %v2992 = vpack.c.b16 %v2776, %v2758
      %v2993 = vpack.c.b16 %v2777, %v2759
      %v2994 = vpack.c.b16 %v2778, %v2760
      %v2995 = vpack.c.b16 %v2779, %v2761
      %v2996 = vpack.c.b16 %v2780, %v2762
      %v2997 = vpack.c.b16 %v2799, %v2781
      %v2998 = vpack.c.b16 %v2800, %v2782
      %v2999 = vpack.c.b16 %v2801, %v2783
      %v3000 = vpack.c.b16 %v2802, %v2784
      %v3001 = vpack.c.b16 %v2803, %v2785
      %v3002 = vpack.c.b16 %v2804, %v2786
      %v3003 = vpack.c.b16 %v2805, %v2787
      %v3004 = vpack.c.b16 %v2806, %v2788
      %v3005 = vpack.c.b16 %v2807, %v2789
      %v3006 = vpack.c.b16 %v2808, %v2790
      %v3007 = vpack.c.b16 %v2809, %v2791
      %v3008 = vpack.c.b16 %v2810, %v2792
      %v3009 = vpack.c.b16 %v2811, %v2793
      %v3010 = vpack.c.b16 %v2812, %v2794
      %v3011 = vpack.c.b16 %v2813, %v2795
      %v3012 = vpack.c.b16 %v2814, %v2796
      %v3013 = vpack.c.b16 %v2815, %v2797
      %v3014 = vpack.c.b16 %v2816, %v2798
      %v3015 = vpack.c.b16 %v2835, %v2817
      %v3016 = vpack.c.b16 %v2836, %v2818
      %v3017 = vpack.c.b16 %v2837, %v2819
      %v3018 = vpack.c.b16 %v2838, %v2820
      %v3019 = vpack.c.b16 %v2839, %v2821
      %v3020 = vpack.c.b16 %v2840, %v2822
      %v3021 = vpack.c.b16 %v2841, %v2823
      %v3022 = vpack.c.b16 %v2842, %v2824
      %v3023 = vpack.c.b16 %v2843, %v2825
      %v3024 = vpack.c.b16 %v2844, %v2826
      %v3025 = vpack.c.b16 %v2845, %v2827
      %v3026 = vpack.c.b16 %v2846, %v2828
      %v3027 = vpack.c.b16 %v2847, %v2829
      %v3028 = vpack.c.b16 %v2848, %v2830
      %v3029 = vpack.c.b16 %v2849, %v2831
      %v3030 = vpack.c.b16 %v2850, %v2832
      %v3031 = vpack.c.b16 %v2851, %v2833
      %v3032 = vpack.c.b16 %v2852, %v2834
      %v3033 = vpack.c.b16 %v2871, %v2853
      %v3034 = vpack.c.b16 %v2872, %v2854
      %v3035 = vpack.c.b16 %v2873, %v2855
      %v3036 = vpack.c.b16 %v2874, %v2856
      %v3037 = vpack.c.b16 %v2875, %v2857
      %v3038 = vpack.c.b16 %v2876, %v2858
      %v3039 = vpack.c.b16 %v2877, %v2859
      %v3040 = vpack.c.b16 %v2878, %v2860
      %v3041 = vpack.c.b16 %v2879, %v2861
      %v3042 = vpack.c.b16 %v2880, %v2862
      %v3043 = vpack.c.b16 %v2881, %v2863
      %v3044 = vpack.c.b16 %v2882, %v2864
      %v3045 = vpack.c.b16 %v2883, %v2865
      %v3046 = vpack.c.b16 %v2884, %v2866
      %v3047 = vpack.c.b16 %v2885, %v2867
      %v3048 = vpack.c.b16 %v2886, %v2868
      %v3049 = vpack.c.b16 %v2887, %v2869
      %v3050 = vpack.c.b16 %v2888, %v2870
      %vm3213 = vcmask 130048
      %v3215 = vsel %vm3213, %v2401, 0
      %3217 = vmatpush.bf16.msra.mxu0 %v3015
      %3218 = vmatpush.bf16.msra.mxu0 %v2997
      %3219 = vmatpush.bf16.msra.mxu0 %v2979
      %3220 = vmatpush.bf16.msra.mxu0 %v2961
      %3221 = vmatpush.bf16.msra.mxu0 %v2943
      %3222 = vmatpush.bf16.msra.mxu0 %v2925
      %3223 = vmatpush.bf16.msra.mxu0 %v2907
      %3224 = vmatpush.bf16.msra.mxu0 %v2889
      %3225 = vmatmul.bf16.gmra.mxu0 %v2400
      %v3226 = vpop.f32.mrf.mxu0
      %v3227 = vadd.f32 %v2387, %v3226
      %v3228 = vpop.f32.mrf.mxu0
      %v3229 = vadd.f32 %v2392, %v3228
      %3230 = vdwg.mxu0
      %3231 = vmatpush.bf16.msra.mxu0 0
      %3232 = vmatpush.bf16.msra.mxu0 0
      %3233 = vmatpush.bf16.msra.mxu0 0
      %3234 = vmatpush.bf16.msra.mxu0 0
      %3235 = vmatpush.bf16.msra.mxu0 0
      %3236 = vmatpush.bf16.msra.mxu0 0
      %3237 = vmatpush.bf16.msra.mxu0 0
      %3238 = vmatpush.bf16.msra.mxu0 %v3033
      %3239 = vmatmul.bf16.gmra.mxu0 %v3215
      %v3240 = vpop.f32.mrf.mxu0
      %v3241 = vadd.f32 %v3227, %v3240
      %v3242 = vpop.f32.mrf.mxu0
      %v3243 = vadd.f32 %v3229, %v3242
      %3244 = vdwg.mxu0
      %3245 = vmatpush.bf16.msra.mxu0 %v3016
      %3246 = vmatpush.bf16.msra.mxu0 %v2998
      %3247 = vmatpush.bf16.msra.mxu0 %v2980
      %3248 = vmatpush.bf16.msra.mxu0 %v2962
      %3249 = vmatpush.bf16.msra.mxu0 %v2944
      %3250 = vmatpush.bf16.msra.mxu0 %v2926
      %3251 = vmatpush.bf16.msra.mxu0 %v2908
      %3252 = vmatpush.bf16.msra.mxu0 %v2890
      %3253 = vmatmul.bf16.gmra.mxu0 %v2400
      %v3254 = vpop.f32.mrf.mxu0
      %v3255 = vadd.f32 %v2387, %v3254
      %v3256 = vpop.f32.mrf.mxu0
      %v3257 = vadd.f32 %v2392, %v3256
      %3258 = vdwg.mxu0
      %3259 = vmatpush.bf16.msra.mxu0 0
      %3260 = vmatpush.bf16.msra.mxu0 0
      %3261 = vmatpush.bf16.msra.mxu0 0
      %3262 = vmatpush.bf16.msra.mxu0 0
      %3263 = vmatpush.bf16.msra.mxu0 0
      %3264 = vmatpush.bf16.msra.mxu0 0
      %3265 = vmatpush.bf16.msra.mxu0 0
      %3266 = vmatpush.bf16.msra.mxu0 %v3034
      %3267 = vmatmul.bf16.gmra.mxu0 %v3215
      %v3268 = vpop.f32.mrf.mxu0
      %v3269 = vadd.f32 %v3255, %v3268
      %v3270 = vpop.f32.mrf.mxu0
      %v3271 = vadd.f32 %v3257, %v3270
      %3272 = vdwg.mxu0
      %3273 = vmatpush.bf16.msra.mxu0 %v3017
      %3274 = vmatpush.bf16.msra.mxu0 %v2999
      %3275 = vmatpush.bf16.msra.mxu0 %v2981
      %3276 = vmatpush.bf16.msra.mxu0 %v2963
      %3277 = vmatpush.bf16.msra.mxu0 %v2945
      %3278 = vmatpush.bf16.msra.mxu0 %v2927
      %3279 = vmatpush.bf16.msra.mxu0 %v2909
      %3280 = vmatpush.bf16.msra.mxu0 %v2891
      %3281 = vmatmul.bf16.gmra.mxu0 %v2400
      %v3282 = vpop.f32.mrf.mxu0
      %v3283 = vadd.f32 %v2387, %v3282
      %v3284 = vpop.f32.mrf.mxu0
      %v3285 = vadd.f32 %v2392, %v3284
      %3286 = vdwg.mxu0
      %3287 = vmatpush.bf16.msra.mxu0 0
      %3288 = vmatpush.bf16.msra.mxu0 0
      %3289 = vmatpush.bf16.msra.mxu0 0
      %3290 = vmatpush.bf16.msra.mxu0 0
      %3291 = vmatpush.bf16.msra.mxu0 0
      %3292 = vmatpush.bf16.msra.mxu0 0
      %3293 = vmatpush.bf16.msra.mxu0 0
      %3294 = vmatpush.bf16.msra.mxu0 %v3035
      %3295 = vmatmul.bf16.gmra.mxu0 %v3215
      %v3296 = vpop.f32.mrf.mxu0
      %v3297 = vadd.f32 %v3283, %v3296
      %v3298 = vpop.f32.mrf.mxu0
      %v3299 = vadd.f32 %v3285, %v3298
      %3300 = vdwg.mxu0
      %3301 = vmatpush.bf16.msra.mxu0 %v3018
      %3302 = vmatpush.bf16.msra.mxu0 %v3000
      %3303 = vmatpush.bf16.msra.mxu0 %v2982
      %3304 = vmatpush.bf16.msra.mxu0 %v2964
      %3305 = vmatpush.bf16.msra.mxu0 %v2946
      %3306 = vmatpush.bf16.msra.mxu0 %v2928
      %3307 = vmatpush.bf16.msra.mxu0 %v2910
      %3308 = vmatpush.bf16.msra.mxu0 %v2892
      %3309 = vmatmul.bf16.gmra.mxu0 %v2400
      %v3310 = vpop.f32.mrf.mxu0
      %v3311 = vadd.f32 %v2387, %v3310
      %v3312 = vpop.f32.mrf.mxu0
      %v3313 = vadd.f32 %v2392, %v3312
      %3314 = vdwg.mxu0
      %3315 = vmatpush.bf16.msra.mxu0 0
      %3316 = vmatpush.bf16.msra.mxu0 0
      %3317 = vmatpush.bf16.msra.mxu0 0
      %3318 = vmatpush.bf16.msra.mxu0 0
      %3319 = vmatpush.bf16.msra.mxu0 0
      %3320 = vmatpush.bf16.msra.mxu0 0
      %3321 = vmatpush.bf16.msra.mxu0 0
      %3322 = vmatpush.bf16.msra.mxu0 %v3036
      %3323 = vmatmul.bf16.gmra.mxu0 %v3215
      %v3324 = vpop.f32.mrf.mxu0
      %v3325 = vadd.f32 %v3311, %v3324
      %v3326 = vpop.f32.mrf.mxu0
      %v3327 = vadd.f32 %v3313, %v3326
      %3328 = vdwg.mxu0
      %3329 = vmatpush.bf16.msra.mxu0 %v3019
      %3330 = vmatpush.bf16.msra.mxu0 %v3001
      %3331 = vmatpush.bf16.msra.mxu0 %v2983
      %3332 = vmatpush.bf16.msra.mxu0 %v2965
      %3333 = vmatpush.bf16.msra.mxu0 %v2947
      %3334 = vmatpush.bf16.msra.mxu0 %v2929
      %3335 = vmatpush.bf16.msra.mxu0 %v2911
      %3336 = vmatpush.bf16.msra.mxu0 %v2893
      %3337 = vmatmul.bf16.gmra.mxu0 %v2400
      %v3338 = vpop.f32.mrf.mxu0
      %v3339 = vadd.f32 %v2387, %v3338
      %v3340 = vpop.f32.mrf.mxu0
      %v3341 = vadd.f32 %v2392, %v3340
      %3342 = vdwg.mxu0
      %3343 = vmatpush.bf16.msra.mxu0 0
      %3344 = vmatpush.bf16.msra.mxu0 0
      %3345 = vmatpush.bf16.msra.mxu0 0
      %3346 = vmatpush.bf16.msra.mxu0 0
      %3347 = vmatpush.bf16.msra.mxu0 0
      %3348 = vmatpush.bf16.msra.mxu0 0
      %3349 = vmatpush.bf16.msra.mxu0 0
      %3350 = vmatpush.bf16.msra.mxu0 %v3037
      %3351 = vmatmul.bf16.gmra.mxu0 %v3215
      %v3352 = vpop.f32.mrf.mxu0
      %v3353 = vadd.f32 %v3339, %v3352
      %v3354 = vpop.f32.mrf.mxu0
      %v3355 = vadd.f32 %v3341, %v3354
      %3356 = vdwg.mxu0
      %3357 = vmatpush.bf16.msra.mxu0 %v3020
      %3358 = vmatpush.bf16.msra.mxu0 %v3002
      %3359 = vmatpush.bf16.msra.mxu0 %v2984
      %3360 = vmatpush.bf16.msra.mxu0 %v2966
      %3361 = vmatpush.bf16.msra.mxu0 %v2948
      %3362 = vmatpush.bf16.msra.mxu0 %v2930
      %3363 = vmatpush.bf16.msra.mxu0 %v2912
      %3364 = vmatpush.bf16.msra.mxu0 %v2894
      %3365 = vmatmul.bf16.gmra.mxu0 %v2400
      %v3366 = vpop.f32.mrf.mxu0
      %v3367 = vadd.f32 %v2387, %v3366
      %v3368 = vpop.f32.mrf.mxu0
      %v3369 = vadd.f32 %v2392, %v3368
      %3370 = vdwg.mxu0
      %3371 = vmatpush.bf16.msra.mxu0 0
      %3372 = vmatpush.bf16.msra.mxu0 0
      %3373 = vmatpush.bf16.msra.mxu0 0
      %3374 = vmatpush.bf16.msra.mxu0 0
      %3375 = vmatpush.bf16.msra.mxu0 0
      %3376 = vmatpush.bf16.msra.mxu0 0
      %3377 = vmatpush.bf16.msra.mxu0 0
      %3378 = vmatpush.bf16.msra.mxu0 %v3038
      %3379 = vmatmul.bf16.gmra.mxu0 %v3215
      %v3380 = vpop.f32.mrf.mxu0
      %v3381 = vadd.f32 %v3367, %v3380
      %v3382 = vpop.f32.mrf.mxu0
      %v3383 = vadd.f32 %v3369, %v3382
      %3384 = vdwg.mxu0
      %3385 = vmatpush.bf16.msra.mxu0 %v3021
      %3386 = vmatpush.bf16.msra.mxu0 %v3003
      %3387 = vmatpush.bf16.msra.mxu0 %v2985
      %3388 = vmatpush.bf16.msra.mxu0 %v2967
      %3389 = vmatpush.bf16.msra.mxu0 %v2949
      %3390 = vmatpush.bf16.msra.mxu0 %v2931
      %3391 = vmatpush.bf16.msra.mxu0 %v2913
      %3392 = vmatpush.bf16.msra.mxu0 %v2895
      %3393 = vmatmul.bf16.gmra.mxu0 %v2400
      %v3394 = vpop.f32.mrf.mxu0
      %v3395 = vadd.f32 %v2387, %v3394
      %v3396 = vpop.f32.mrf.mxu0
      %v3397 = vadd.f32 %v2392, %v3396
      %3398 = vdwg.mxu0
      %3399 = vmatpush.bf16.msra.mxu0 0
      %3400 = vmatpush.bf16.msra.mxu0 0
      %3401 = vmatpush.bf16.msra.mxu0 0
      %3402 = vmatpush.bf16.msra.mxu0 0
      %3403 = vmatpush.bf16.msra.mxu0 0
      %3404 = vmatpush.bf16.msra.mxu0 0
      %3405 = vmatpush.bf16.msra.mxu0 0
      %3406 = vmatpush.bf16.msra.mxu0 %v3039
      %3407 = vmatmul.bf16.gmra.mxu0 %v3215
      %v3408 = vpop.f32.mrf.mxu0
      %v3409 = vadd.f32 %v3395, %v3408
      %v3410 = vpop.f32.mrf.mxu0
      %v3411 = vadd.f32 %v3397, %v3410
      %3412 = vdwg.mxu0
      %3413 = vmatpush.bf16.msra.mxu0 %v3022
      %3414 = vmatpush.bf16.msra.mxu0 %v3004
      %3415 = vmatpush.bf16.msra.mxu0 %v2986
      %3416 = vmatpush.bf16.msra.mxu0 %v2968
      %3417 = vmatpush.bf16.msra.mxu0 %v2950
      %3418 = vmatpush.bf16.msra.mxu0 %v2932
      %3419 = vmatpush.bf16.msra.mxu0 %v2914
      %3420 = vmatpush.bf16.msra.mxu0 %v2896
      %3421 = vmatmul.bf16.gmra.mxu0 %v2400
      %v3422 = vpop.f32.mrf.mxu0
      %v3423 = vadd.f32 %v2387, %v3422
      %v3424 = vpop.f32.mrf.mxu0
      %v3425 = vadd.f32 %v2392, %v3424
      %3426 = vdwg.mxu0
      %3427 = vmatpush.bf16.msra.mxu0 0
      %3428 = vmatpush.bf16.msra.mxu0 0
      %3429 = vmatpush.bf16.msra.mxu0 0
      %3430 = vmatpush.bf16.msra.mxu0 0
      %3431 = vmatpush.bf16.msra.mxu0 0
      %3432 = vmatpush.bf16.msra.mxu0 0
      %3433 = vmatpush.bf16.msra.mxu0 0
      %3434 = vmatpush.bf16.msra.mxu0 %v3040
      %3435 = vmatmul.bf16.gmra.mxu0 %v3215
      %v3436 = vpop.f32.mrf.mxu0
      %v3437 = vadd.f32 %v3423, %v3436
      %v3438 = vpop.f32.mrf.mxu0
      %v3439 = vadd.f32 %v3425, %v3438
      %3440 = vdwg.mxu0
      %3441 = vmatpush.bf16.msra.mxu0 %v3023
      %3442 = vmatpush.bf16.msra.mxu0 %v3005
      %3443 = vmatpush.bf16.msra.mxu0 %v2987
      %3444 = vmatpush.bf16.msra.mxu0 %v2969
      %3445 = vmatpush.bf16.msra.mxu0 %v2951
      %3446 = vmatpush.bf16.msra.mxu0 %v2933
      %3447 = vmatpush.bf16.msra.mxu0 %v2915
      %3448 = vmatpush.bf16.msra.mxu0 %v2897
      %3449 = vmatmul.bf16.gmra.mxu0 %v2400
      %v3450 = vpop.f32.mrf.mxu0
      %v3451 = vadd.f32 %v2387, %v3450
      %v3452 = vpop.f32.mrf.mxu0
      %v3453 = vadd.f32 %v2392, %v3452
      %3454 = vdwg.mxu0
      %3455 = vmatpush.bf16.msra.mxu0 0
      %3456 = vmatpush.bf16.msra.mxu0 0
      %3457 = vmatpush.bf16.msra.mxu0 0
      %3458 = vmatpush.bf16.msra.mxu0 0
      %3459 = vmatpush.bf16.msra.mxu0 0
      %3460 = vmatpush.bf16.msra.mxu0 0
      %3461 = vmatpush.bf16.msra.mxu0 0
      %3462 = vmatpush.bf16.msra.mxu0 %v3041
      %3463 = vmatmul.bf16.gmra.mxu0 %v3215
      %v3464 = vpop.f32.mrf.mxu0
      %v3465 = vadd.f32 %v3451, %v3464
      %v3466 = vpop.f32.mrf.mxu0
      %v3467 = vadd.f32 %v3453, %v3466
      %3468 = vdwg.mxu0
      %3469 = vmatpush.bf16.msra.mxu0 %v3024
      %3470 = vmatpush.bf16.msra.mxu0 %v3006
      %3471 = vmatpush.bf16.msra.mxu0 %v2988
      %3472 = vmatpush.bf16.msra.mxu0 %v2970
      %3473 = vmatpush.bf16.msra.mxu0 %v2952
      %3474 = vmatpush.bf16.msra.mxu0 %v2934
      %3475 = vmatpush.bf16.msra.mxu0 %v2916
      %3476 = vmatpush.bf16.msra.mxu0 %v2898
      %3477 = vmatmul.bf16.gmra.mxu0 %v2400
      %v3478 = vpop.f32.mrf.mxu0
      %v3479 = vadd.f32 %v2387, %v3478
      %v3480 = vpop.f32.mrf.mxu0
      %v3481 = vadd.f32 %v2392, %v3480
      %3482 = vdwg.mxu0
      %3483 = vmatpush.bf16.msra.mxu0 0
      %3484 = vmatpush.bf16.msra.mxu0 0
      %3485 = vmatpush.bf16.msra.mxu0 0
      %3486 = vmatpush.bf16.msra.mxu0 0
      %3487 = vmatpush.bf16.msra.mxu0 0
      %3488 = vmatpush.bf16.msra.mxu0 0
      %3489 = vmatpush.bf16.msra.mxu0 0
      %3490 = vmatpush.bf16.msra.mxu0 %v3042
      %3491 = vmatmul.bf16.gmra.mxu0 %v3215
      %v3492 = vpop.f32.mrf.mxu0
      %v3493 = vadd.f32 %v3479, %v3492
      %v3494 = vpop.f32.mrf.mxu0
      %v3495 = vadd.f32 %v3481, %v3494
      %3496 = vdwg.mxu0
      %3497 = vmatpush.bf16.msra.mxu0 %v3025
      %3498 = vmatpush.bf16.msra.mxu0 %v3007
      %3499 = vmatpush.bf16.msra.mxu0 %v2989
      %3500 = vmatpush.bf16.msra.mxu0 %v2971
      %3501 = vmatpush.bf16.msra.mxu0 %v2953
      %3502 = vmatpush.bf16.msra.mxu0 %v2935
      %3503 = vmatpush.bf16.msra.mxu0 %v2917
      %3504 = vmatpush.bf16.msra.mxu0 %v2899
      %3505 = vmatmul.bf16.gmra.mxu0 %v2400
      %v3506 = vpop.f32.mrf.mxu0
      %v3507 = vadd.f32 %v2387, %v3506
      %v3508 = vpop.f32.mrf.mxu0
      %v3509 = vadd.f32 %v2392, %v3508
      %3510 = vdwg.mxu0
      %3511 = vmatpush.bf16.msra.mxu0 0
      %3512 = vmatpush.bf16.msra.mxu0 0
      %3513 = vmatpush.bf16.msra.mxu0 0
      %3514 = vmatpush.bf16.msra.mxu0 0
      %3515 = vmatpush.bf16.msra.mxu0 0
      %3516 = vmatpush.bf16.msra.mxu0 0
      %3517 = vmatpush.bf16.msra.mxu0 0
      %3518 = vmatpush.bf16.msra.mxu0 %v3043
      %3519 = vmatmul.bf16.gmra.mxu0 %v3215
      %v3520 = vpop.f32.mrf.mxu0
      %v3521 = vadd.f32 %v3507, %v3520
      %v3522 = vpop.f32.mrf.mxu0
      %v3523 = vadd.f32 %v3509, %v3522
      %3524 = vdwg.mxu0
      %3525 = vmatpush.bf16.msra.mxu0 %v3026
      %3526 = vmatpush.bf16.msra.mxu0 %v3008
      %3527 = vmatpush.bf16.msra.mxu0 %v2990
      %3528 = vmatpush.bf16.msra.mxu0 %v2972
      %3529 = vmatpush.bf16.msra.mxu0 %v2954
      %3530 = vmatpush.bf16.msra.mxu0 %v2936
      %3531 = vmatpush.bf16.msra.mxu0 %v2918
      %3532 = vmatpush.bf16.msra.mxu0 %v2900
      %3533 = vmatmul.bf16.gmra.mxu0 %v2400
      %v3534 = vpop.f32.mrf.mxu0
      %v3535 = vadd.f32 %v2387, %v3534
      %v3536 = vpop.f32.mrf.mxu0
      %v3537 = vadd.f32 %v2392, %v3536
      %3538 = vdwg.mxu0
      %3539 = vmatpush.bf16.msra.mxu0 0
      %3540 = vmatpush.bf16.msra.mxu0 0
      %3541 = vmatpush.bf16.msra.mxu0 0
      %3542 = vmatpush.bf16.msra.mxu0 0
      %3543 = vmatpush.bf16.msra.mxu0 0
      %3544 = vmatpush.bf16.msra.mxu0 0
      %3545 = vmatpush.bf16.msra.mxu0 0
      %3546 = vmatpush.bf16.msra.mxu0 %v3044
      %3547 = vmatmul.bf16.gmra.mxu0 %v3215
      %v3548 = vpop.f32.mrf.mxu0
      %v3549 = vadd.f32 %v3535, %v3548
      %v3550 = vpop.f32.mrf.mxu0
      %v3551 = vadd.f32 %v3537, %v3550
      %3552 = vdwg.mxu0
      %3553 = vmatpush.bf16.msra.mxu0 %v3027
      %3554 = vmatpush.bf16.msra.mxu0 %v3009
      %3555 = vmatpush.bf16.msra.mxu0 %v2991
      %3556 = vmatpush.bf16.msra.mxu0 %v2973
      %3557 = vmatpush.bf16.msra.mxu0 %v2955
      %3558 = vmatpush.bf16.msra.mxu0 %v2937
      %3559 = vmatpush.bf16.msra.mxu0 %v2919
      %3560 = vmatpush.bf16.msra.mxu0 %v2901
      %3561 = vmatmul.bf16.gmra.mxu0 %v2400
      %v3562 = vpop.f32.mrf.mxu0
      %v3563 = vadd.f32 %v2387, %v3562
      %v3564 = vpop.f32.mrf.mxu0
      %v3565 = vadd.f32 %v2392, %v3564
      %3566 = vdwg.mxu0
      %3567 = vmatpush.bf16.msra.mxu0 0
      %3568 = vmatpush.bf16.msra.mxu0 0
      %3569 = vmatpush.bf16.msra.mxu0 0
      %3570 = vmatpush.bf16.msra.mxu0 0
      %3571 = vmatpush.bf16.msra.mxu0 0
      %3572 = vmatpush.bf16.msra.mxu0 0
      %3573 = vmatpush.bf16.msra.mxu0 0
      %3574 = vmatpush.bf16.msra.mxu0 %v3045
      %3575 = vmatmul.bf16.gmra.mxu0 %v3215
      %v3576 = vpop.f32.mrf.mxu0
      %v3577 = vadd.f32 %v3563, %v3576
      %v3578 = vpop.f32.mrf.mxu0
      %v3579 = vadd.f32 %v3565, %v3578
      %3580 = vdwg.mxu0
      %3581 = vmatpush.bf16.msra.mxu0 %v3028
      %3582 = vmatpush.bf16.msra.mxu0 %v3010
      %3583 = vmatpush.bf16.msra.mxu0 %v2992
      %3584 = vmatpush.bf16.msra.mxu0 %v2974
      %3585 = vmatpush.bf16.msra.mxu0 %v2956
      %3586 = vmatpush.bf16.msra.mxu0 %v2938
      %3587 = vmatpush.bf16.msra.mxu0 %v2920
      %3588 = vmatpush.bf16.msra.mxu0 %v2902
      %3589 = vmatmul.bf16.gmra.mxu0 %v2400
      %v3590 = vpop.f32.mrf.mxu0
      %v3591 = vadd.f32 %v2387, %v3590
      %v3592 = vpop.f32.mrf.mxu0
      %v3593 = vadd.f32 %v2392, %v3592
      %3594 = vdwg.mxu0
      %3595 = vmatpush.bf16.msra.mxu0 0
      %3596 = vmatpush.bf16.msra.mxu0 0
      %3597 = vmatpush.bf16.msra.mxu0 0
      %3598 = vmatpush.bf16.msra.mxu0 0
      %3599 = vmatpush.bf16.msra.mxu0 0
      %3600 = vmatpush.bf16.msra.mxu0 0
      %3601 = vmatpush.bf16.msra.mxu0 0
      %3602 = vmatpush.bf16.msra.mxu0 %v3046
      %3603 = vmatmul.bf16.gmra.mxu0 %v3215
      %v3604 = vpop.f32.mrf.mxu0
      %v3605 = vadd.f32 %v3591, %v3604
      %v3606 = vpop.f32.mrf.mxu0
      %v3607 = vadd.f32 %v3593, %v3606
      %3608 = vdwg.mxu0
      %3609 = vmatpush.bf16.msra.mxu0 %v3029
      %3610 = vmatpush.bf16.msra.mxu0 %v3011
      %3611 = vmatpush.bf16.msra.mxu0 %v2993
      %3612 = vmatpush.bf16.msra.mxu0 %v2975
      %3613 = vmatpush.bf16.msra.mxu0 %v2957
      %3614 = vmatpush.bf16.msra.mxu0 %v2939
      %3615 = vmatpush.bf16.msra.mxu0 %v2921
      %3616 = vmatpush.bf16.msra.mxu0 %v2903
      %3617 = vmatmul.bf16.gmra.mxu0 %v2400
      %v3618 = vpop.f32.mrf.mxu0
      %v3619 = vadd.f32 %v2387, %v3618
      %v3620 = vpop.f32.mrf.mxu0
      %v3621 = vadd.f32 %v2392, %v3620
      %3622 = vdwg.mxu0
      %3623 = vmatpush.bf16.msra.mxu0 0
      %3624 = vmatpush.bf16.msra.mxu0 0
      %3625 = vmatpush.bf16.msra.mxu0 0
      %3626 = vmatpush.bf16.msra.mxu0 0
      %3627 = vmatpush.bf16.msra.mxu0 0
      %3628 = vmatpush.bf16.msra.mxu0 0
      %3629 = vmatpush.bf16.msra.mxu0 0
      %3630 = vmatpush.bf16.msra.mxu0 %v3047
      %3631 = vmatmul.bf16.gmra.mxu0 %v3215
      %v3632 = vpop.f32.mrf.mxu0
      %v3633 = vadd.f32 %v3619, %v3632
      %v3634 = vpop.f32.mrf.mxu0
      %v3635 = vadd.f32 %v3621, %v3634
      %3636 = vdwg.mxu0
      %3637 = vmatpush.bf16.msra.mxu0 %v3030
      %3638 = vmatpush.bf16.msra.mxu0 %v3012
      %3639 = vmatpush.bf16.msra.mxu0 %v2994
      %3640 = vmatpush.bf16.msra.mxu0 %v2976
      %3641 = vmatpush.bf16.msra.mxu0 %v2958
      %3642 = vmatpush.bf16.msra.mxu0 %v2940
      %3643 = vmatpush.bf16.msra.mxu0 %v2922
      %3644 = vmatpush.bf16.msra.mxu0 %v2904
      %3645 = vmatmul.bf16.gmra.mxu0 %v2400
      %v3646 = vpop.f32.mrf.mxu0
      %v3647 = vadd.f32 %v2387, %v3646
      %v3648 = vpop.f32.mrf.mxu0
      %v3649 = vadd.f32 %v2392, %v3648
      %3650 = vdwg.mxu0
      %3651 = vmatpush.bf16.msra.mxu0 0
      %3652 = vmatpush.bf16.msra.mxu0 0
      %3653 = vmatpush.bf16.msra.mxu0 0
      %3654 = vmatpush.bf16.msra.mxu0 0
      %3655 = vmatpush.bf16.msra.mxu0 0
      %3656 = vmatpush.bf16.msra.mxu0 0
      %3657 = vmatpush.bf16.msra.mxu0 0
      %3658 = vmatpush.bf16.msra.mxu0 %v3048
      %3659 = vmatmul.bf16.gmra.mxu0 %v3215
      %v3660 = vpop.f32.mrf.mxu0
      %v3661 = vadd.f32 %v3647, %v3660
      %v3662 = vpop.f32.mrf.mxu0
      %v3663 = vadd.f32 %v3649, %v3662
      %3664 = vdwg.mxu0
      %3665 = vmatpush.bf16.msra.mxu0 %v3031
      %3666 = vmatpush.bf16.msra.mxu0 %v3013
      %3667 = vmatpush.bf16.msra.mxu0 %v2995
      %3668 = vmatpush.bf16.msra.mxu0 %v2977
      %3669 = vmatpush.bf16.msra.mxu0 %v2959
      %3670 = vmatpush.bf16.msra.mxu0 %v2941
      %3671 = vmatpush.bf16.msra.mxu0 %v2923
      %3672 = vmatpush.bf16.msra.mxu0 %v2905
      %3673 = vmatmul.bf16.gmra.mxu0 %v2400
      %v3674 = vpop.f32.mrf.mxu0
      %v3675 = vadd.f32 %v2387, %v3674
      %v3676 = vpop.f32.mrf.mxu0
      %v3677 = vadd.f32 %v2392, %v3676
      %3678 = vdwg.mxu0
      %3679 = vmatpush.bf16.msra.mxu0 0
      %3680 = vmatpush.bf16.msra.mxu0 0
      %3681 = vmatpush.bf16.msra.mxu0 0
      %3682 = vmatpush.bf16.msra.mxu0 0
      %3683 = vmatpush.bf16.msra.mxu0 0
      %3684 = vmatpush.bf16.msra.mxu0 0
      %3685 = vmatpush.bf16.msra.mxu0 0
      %3686 = vmatpush.bf16.msra.mxu0 %v3049
      %3687 = vmatmul.bf16.gmra.mxu0 %v3215
      %v3688 = vpop.f32.mrf.mxu0
      %v3689 = vadd.f32 %v3675, %v3688
      %v3690 = vpop.f32.mrf.mxu0
      %v3691 = vadd.f32 %v3677, %v3690
      %3692 = vdwg.mxu0
      %3693 = vmatpush.bf16.msra.mxu0 %v3032
      %3694 = vmatpush.bf16.msra.mxu0 %v3014
      %3695 = vmatpush.bf16.msra.mxu0 %v2996
      %3696 = vmatpush.bf16.msra.mxu0 %v2978
      %3697 = vmatpush.bf16.msra.mxu0 %v2960
      %3698 = vmatpush.bf16.msra.mxu0 %v2942
      %3699 = vmatpush.bf16.msra.mxu0 %v2924
      %3700 = vmatpush.bf16.msra.mxu0 %v2906
      %3701 = vmatmul.bf16.gmra.mxu0 %v2400
      %v3702 = vpop.f32.mrf.mxu0
      %v3703 = vadd.f32 %v2387, %v3702
      %v3704 = vpop.f32.mrf.mxu0
      %v3705 = vadd.f32 %v2392, %v3704
      %3706 = vdwg.mxu0
      %3707 = vmatpush.bf16.msra.mxu0 0
      %3708 = vmatpush.bf16.msra.mxu0 0
      %3709 = vmatpush.bf16.msra.mxu0 0
      %3710 = vmatpush.bf16.msra.mxu0 0
      %3711 = vmatpush.bf16.msra.mxu0 0
      %3712 = vmatpush.bf16.msra.mxu0 0
      %3713 = vmatpush.bf16.msra.mxu0 0
      %3714 = vmatpush.bf16.msra.mxu0 %v3050
      %3715 = vmatmul.bf16.gmra.mxu0 %v3215
      %v3716 = vpop.f32.mrf.mxu0
      %v3717 = vadd.f32 %v3703, %v3716
      %v3718 = vpop.f32.mrf.mxu0
      %v3719 = vadd.f32 %v3705, %v3718
      %3720 = vdwg.mxu0
      %v3721 = vmax.f32 %v3241, 0.0
      %v3722 = vmax.f32 %v3269, 0.0
      %v3723 = vmax.f32 %v3297, 0.0
      %v3724 = vmax.f32 %v3325, 0.0
      %v3725 = vmax.f32 %v3353, 0.0
      %v3726 = vmax.f32 %v3381, 0.0
      %v3727 = vmax.f32 %v3409, 0.0
      %v3728 = vmax.f32 %v3437, 0.0
      %v3729 = vmax.f32 %v3465, 0.0
      %v3730 = vmax.f32 %v3493, 0.0
      %v3731 = vmax.f32 %v3521, 0.0
      %v3732 = vmax.f32 %v3549, 0.0
      %v3733 = vmax.f32 %v3577, 0.0
      %v3734 = vmax.f32 %v3605, 0.0
      %v3735 = vmax.f32 %v3633, 0.0
      %v3736 = vmax.f32 %v3661, 0.0
      %v3737 = vmax.f32 %v3689, 0.0
      %v3738 = vmax.f32 %v3717, 0.0
      %v3739 = vmax.f32 %v3243, 0.0
      %v3740 = vmax.f32 %v3271, 0.0
      %v3741 = vmax.f32 %v3299, 0.0
      %v3742 = vmax.f32 %v3327, 0.0
      %v3743 = vmax.f32 %v3355, 0.0
      %v3744 = vmax.f32 %v3383, 0.0
      %v3745 = vmax.f32 %v3411, 0.0
      %v3746 = vmax.f32 %v3439, 0.0
      %v3747 = vmax.f32 %v3467, 0.0
      %v3748 = vmax.f32 %v3495, 0.0
      %v3749 = vmax.f32 %v3523, 0.0
      %v3750 = vmax.f32 %v3551, 0.0
      %v3751 = vmax.f32 %v3579, 0.0
      %v3752 = vmax.f32 %v3607, 0.0
      %v3753 = vmax.f32 %v3635, 0.0
      %v3754 = vmax.f32 %v3663, 0.0
      %v3755 = vmax.f32 %v3691, 0.0
      %v3756 = vmax.f32 %v3719, 0.0
      %v3757 = vpack.c.bf16 %v3722, %v3721
      %v3758 = vpack.c.bf16 %v3724, %v3723
      %v3759 = vpack.c.bf16 %v3726, %v3725
      %v3760 = vpack.c.bf16 %v3728, %v3727
      %v3761 = vpack.c.bf16 %v3730, %v3729
      %v3762 = vpack.c.bf16 %v3732, %v3731
      %v3763 = vpack.c.bf16 %v3734, %v3733
      %v3764 = vpack.c.bf16 %v3736, %v3735
      %v3765 = vpack.c.bf16 %v3738, %v3737
      %v3766 = vpack.c.bf16 %v3740, %v3739
      %v3767 = vpack.c.bf16 %v3742, %v3741
      %v3768 = vpack.c.bf16 %v3744, %v3743
      %v3769 = vpack.c.bf16 %v3746, %v3745
      %v3770 = vpack.c.bf16 %v3748, %v3747
      %v3771 = vpack.c.bf16 %v3750, %v3749
      %v3772 = vpack.c.bf16 %v3752, %v3751
      %v3773 = vpack.c.bf16 %v3754, %v3753
      %v3774 = vpack.c.bf16 %v3756, %v3755
      %v3777 = vunpack.c.l.b16 %v3757
      %v3778 = vunpack.c.h.b16 %v3757
      %v3779 = vunpack.c.l.b16 %v3766
      %v3780 = vunpack.c.h.b16 %v3766
      %v3781 = vpack.c.b16 %v3779, %v3777
      %v3782 = vpack.c.b16 %v3780, %v3778
      %v3787 = vunpack.c.l.b16 %v3758
      %v3788 = vunpack.c.h.b16 %v3758
      %v3789 = vunpack.c.l.b16 %v3767
      %v3790 = vunpack.c.h.b16 %v3767
      %v3791 = vpack.c.b16 %v3789, %v3787
      %v3792 = vpack.c.b16 %v3790, %v3788
      %v3797 = vunpack.c.l.b16 %v3759
      %v3798 = vunpack.c.h.b16 %v3759
      %v3799 = vunpack.c.l.b16 %v3768
      %v3800 = vunpack.c.h.b16 %v3768
      %v3801 = vpack.c.b16 %v3799, %v3797
      %v3802 = vpack.c.b16 %v3800, %v3798
      %v3807 = vunpack.c.l.b16 %v3760
      %v3808 = vunpack.c.h.b16 %v3760
      %v3809 = vunpack.c.l.b16 %v3769
      %v3810 = vunpack.c.h.b16 %v3769
      %v3811 = vpack.c.b16 %v3809, %v3807
      %v3812 = vpack.c.b16 %v3810, %v3808
      %v3817 = vunpack.c.l.b16 %v3761
      %v3818 = vunpack.c.h.b16 %v3761
      %v3819 = vunpack.c.l.b16 %v3770
      %v3820 = vunpack.c.h.b16 %v3770
      %v3821 = vpack.c.b16 %v3819, %v3817
      %v3822 = vpack.c.b16 %v3820, %v3818
      %v3827 = vunpack.c.l.b16 %v3762
      %v3828 = vunpack.c.h.b16 %v3762
      %v3829 = vunpack.c.l.b16 %v3771
      %v3830 = vunpack.c.h.b16 %v3771
      %v3831 = vpack.c.b16 %v3829, %v3827
      %v3832 = vpack.c.b16 %v3830, %v3828
      %v3837 = vunpack.c.l.b16 %v3763
      %v3838 = vunpack.c.h.b16 %v3763
      %v3839 = vunpack.c.l.b16 %v3772
      %v3840 = vunpack.c.h.b16 %v3772
      %v3841 = vpack.c.b16 %v3839, %v3837
      %v3842 = vpack.c.b16 %v3840, %v3838
      %v3847 = vunpack.c.l.b16 %v3764
      %v3848 = vunpack.c.h.b16 %v3764
      %v3849 = vunpack.c.l.b16 %v3773
      %v3850 = vunpack.c.h.b16 %v3773
      %v3851 = vpack.c.b16 %v3849, %v3847
      %v3852 = vpack.c.b16 %v3850, %v3848
      %v3857 = vunpack.c.l.b16 %v3765
      %v3858 = vunpack.c.h.b16 %v3765
      %v3859 = vunpack.c.l.b16 %v3774
      %v3860 = vunpack.c.h.b16 %v3774
      %v3861 = vpack.c.b16 %v3859, %v3857
      %v3862 = vpack.c.b16 %v3860, %v3858
      %v3865 = vld [vmem:[%s5] sm:$0xff]
      %v3866 = vld [vmem:[%s5 + $0x8] sm:$0xff]
      %v3867 = vld [vmem:[%s6] sm:$0xff]
      %v3868 = vld [vmem:[%s6 + $0x8] sm:$0xff]
      %3870 = vset.pattern.permute.xlu0 0
      %3871 = vperm.xlu0 %3870, %v3867
      %v3872 = vpop.permute.xlu0 %3871
      %3875 = vset.pattern.permute.xlu0 0
      %3876 = vperm.xlu0 %3875, %v3868
      %v3877 = vpop.permute.xlu0 %3876
      %v3881 = vunpack.c.l.b16 %v3865
      %v3882 = vunpack.c.h.b16 %v3865
      %v3883 = vunpack.c.l.b16 %v3866
      %v3884 = vunpack.c.h.b16 %v3866
      %v3885 = vpack.c.b16 %v3883, %v3881
      %v3886 = vpack.c.b16 %v3884, %v3882
      %v3889 = vsel %vm3213, %v3886, 0
      %3891 = vmatpush.bf16.msra.mxu0 %v3851
      %3892 = vmatpush.bf16.msra.mxu0 %v3841
      %3893 = vmatpush.bf16.msra.mxu0 %v3831
      %3894 = vmatpush.bf16.msra.mxu0 %v3821
      %3895 = vmatpush.bf16.msra.mxu0 %v3811
      %3896 = vmatpush.bf16.msra.mxu0 %v3801
      %3897 = vmatpush.bf16.msra.mxu0 %v3791
      %3898 = vmatpush.bf16.msra.mxu0 %v3781
      %3899 = vmatmul.bf16.gmra.mxu0 %v3885
      %v3900 = vpop.f32.mrf.mxu0
      %v3901 = vadd.f32 %v3872, %v3900
      %v3902 = vpop.f32.mrf.mxu0
      %v3903 = vadd.f32 %v3877, %v3902
      %3904 = vdwg.mxu0
      %3905 = vmatpush.bf16.msra.mxu0 0
      %3906 = vmatpush.bf16.msra.mxu0 0
      %3907 = vmatpush.bf16.msra.mxu0 0
      %3908 = vmatpush.bf16.msra.mxu0 0
      %3909 = vmatpush.bf16.msra.mxu0 0
      %3910 = vmatpush.bf16.msra.mxu0 0
      %3911 = vmatpush.bf16.msra.mxu0 0
      %3912 = vmatpush.bf16.msra.mxu0 %v3861
      %3913 = vmatmul.bf16.gmra.mxu0 %v3889
      %v3914 = vpop.f32.mrf.mxu0
      %v3915 = vadd.f32 %v3901, %v3914
      %v3916 = vpop.f32.mrf.mxu0
      %v3917 = vadd.f32 %v3903, %v3916
      %3918 = vdwg.mxu0
      %3919 = vmatpush.bf16.msra.mxu0 %v3852
      %3920 = vmatpush.bf16.msra.mxu0 %v3842
      %3921 = vmatpush.bf16.msra.mxu0 %v3832
      %3922 = vmatpush.bf16.msra.mxu0 %v3822
      %3923 = vmatpush.bf16.msra.mxu0 %v3812
      %3924 = vmatpush.bf16.msra.mxu0 %v3802
      %3925 = vmatpush.bf16.msra.mxu0 %v3792
      %3926 = vmatpush.bf16.msra.mxu0 %v3782
      %3927 = vmatmul.bf16.gmra.mxu0 %v3885
      %v3928 = vpop.f32.mrf.mxu0
      %v3929 = vadd.f32 %v3872, %v3928
      %v3930 = vpop.f32.mrf.mxu0
      %v3931 = vadd.f32 %v3877, %v3930
      %3932 = vdwg.mxu0
      %3933 = vmatpush.bf16.msra.mxu0 0
      %3934 = vmatpush.bf16.msra.mxu0 0
      %3935 = vmatpush.bf16.msra.mxu0 0
      %3936 = vmatpush.bf16.msra.mxu0 0
      %3937 = vmatpush.bf16.msra.mxu0 0
      %3938 = vmatpush.bf16.msra.mxu0 0
      %3939 = vmatpush.bf16.msra.mxu0 0
      %3940 = vmatpush.bf16.msra.mxu0 %v3862
      %3941 = vmatmul.bf16.gmra.mxu0 %v3889
      %v3942 = vpop.f32.mrf.mxu0
      %v3943 = vadd.f32 %v3929, %v3942
      %v3944 = vpop.f32.mrf.mxu0
      %v3945 = vadd.f32 %v3931, %v3944
      %3946 = vdwg.mxu0
      %v3947 = vmax.f32 %v3915, 0.0
      %v3948 = vmax.f32 %v3943, 0.0
      %v3949 = vmax.f32 %v3917, 0.0
      %v3950 = vmax.f32 %v3945, 0.0
      %v3951 = vpack.c.bf16 %v3949, %v3947
      %v3952 = vpack.c.bf16 %v3950, %v3948
      %v3953 = vld [vmem:[%s7] sm:$0xf]
      %v3954 = vld [vmem:[%s7 + $0x4] sm:$0xf]
      %v3955 = vld [vmem:[%s7 + $0x8] sm:$0xf]
      %v3956 = vld [vmem:[%s7 + $0xc] sm:$0xf]
      %v3957 = vld [vmem:[%s8] sm:$0xff]
      %v3958 = vld [vmem:[%s8 + $0x8] sm:$0xff]
      %v3959 = vld [vmem:[%s8 + $0x10] sm:$0xff]
      %v3960 = vld [vmem:[%s8 + $0x18] sm:$0xff]
      %3962 = vset.pattern.permute.xlu0 0
      %3963 = vperm.xlu0 %3962, %v3957
      %v3964 = vpop.permute.xlu0 %3963
      %3967 = vset.pattern.permute.xlu0 0
      %3968 = vperm.xlu0 %3967, %v3958
      %v3969 = vpop.permute.xlu0 %3968
      %3972 = vset.pattern.permute.xlu0 0
      %3973 = vperm.xlu0 %3972, %v3959
      %v3974 = vpop.permute.xlu0 %3973
      %3977 = vset.pattern.permute.xlu0 0
      %3978 = vperm.xlu0 %3977, %v3960
      %v3979 = vpop.permute.xlu0 %3978
      %v3985 = vunpack.c.l.b16 %v3953
      %v3986 = vunpack.c.l.b16 %v3954
      %v3987 = vunpack.c.l.b16 %v3955
      %v3988 = vunpack.c.l.b16 %v3956
      %v3989 = vpack.c.b16 %v3986, %v3985
      %v3990 = vpack.c.b16 %v3988, %v3987
      %v3992 = vsel %vm3213, %v3989, 0
      %v3995 = vsel %vm3213, %v3990, 0
      %3997 = vmatpush.bf16.msra.mxu0 0
      %3998 = vmatpush.bf16.msra.mxu0 0
      %3999 = vmatpush.bf16.msra.mxu0 0
      %4000 = vmatpush.bf16.msra.mxu0 0
      %4001 = vmatpush.bf16.msra.mxu0 0
      %4002 = vmatpush.bf16.msra.mxu0 0
      %4003 = vmatpush.bf16.msra.mxu0 0
      %4004 = vmatpush.bf16.msra.mxu0 %v3951
      %4005 = vmatmul.bf16.gmra.mxu0 %v3992
      %v4006 = vpop.f32.mrf.mxu0
      %v4007 = vadd.f32 %v3964, %v4006
      %v4008 = vpop.f32.mrf.mxu0
      %v4009 = vadd.f32 %v3969, %v4008
      %4010 = vmatmul.bf16.gmra.mxu0 %v3995
      %v4011 = vpop.f32.mrf.mxu0
      %v4012 = vadd.f32 %v3974, %v4011
      %v4013 = vpop.f32.mrf.mxu0
      %v4014 = vadd.f32 %v3979, %v4013
      %4015 = vdwg.mxu0
      %4016 = vmatpush.bf16.msra.mxu0 0
      %4017 = vmatpush.bf16.msra.mxu0 0
      %4018 = vmatpush.bf16.msra.mxu0 0
      %4019 = vmatpush.bf16.msra.mxu0 0
      %4020 = vmatpush.bf16.msra.mxu0 0
      %4021 = vmatpush.bf16.msra.mxu0 0
      %4022 = vmatpush.bf16.msra.mxu0 0
      %4023 = vmatpush.bf16.msra.mxu0 %v3952
      %4024 = vmatmul.bf16.gmra.mxu0 %v3992
      %v4025 = vpop.f32.mrf.mxu0
      %v4026 = vadd.f32 %v3964, %v4025
      %v4027 = vpop.f32.mrf.mxu0
      %v4028 = vadd.f32 %v3969, %v4027
      %4029 = vmatmul.bf16.gmra.mxu0 %v3995
      %v4030 = vpop.f32.mrf.mxu0
      %v4031 = vadd.f32 %v3974, %v4030
      %v4032 = vpop.f32.mrf.mxu0
      %v4033 = vadd.f32 %v3979, %v4032
      %4034 = vdwg.mxu0
      %4035 = vst [vmem:[%s368] sm:$0xff] %v4007
      %4036 = vst [vmem:[%s368 + $0x8] sm:$0xff] %v4026
      %4037 = vst [vmem:[%s368 + $0x10] sm:$0xff] %v4009
      %4038 = vst [vmem:[%s368 + $0x18] sm:$0xff] %v4028
      %4039 = vst [vmem:[%s368 + $0x20] sm:$0xff] %v4012
      %4040 = vst [vmem:[%s368 + $0x28] sm:$0xff] %v4031
      %4041 = vst [vmem:[%s368 + $0x30] sm:$0xff] %v4014
      %4042 = vst [vmem:[%s368 + $0x38] sm:$0xff] %v4033
      %s4043 = smul.u32 2, %s25
      %p4044 = scmp.lt.s32.totalorder %s24, 1
      %s4045 = scalar_select %p4044, %s24, 1
      %p4046 = scmp.lt.s32.totalorder %s4043, 1
      %s4047 = scalar_select %p4046, %s4043, 1
      %s4048 = smul.addr %s4045, 8
      %s4049 = sadd.s32 %s4047, %s4048
      %s4050 = smul.addr %s4049, 8
      %s4051 = scalar_lea.vmem %s9, %s4050
      // Predicated region
      $region57: #{scr_forward.1} parent=55 // pred_check
        %p4052 = pneg %p248
      $region58: #{scr_forward.1} parent=55 // pred_check_branch
        %4054 = sbr.rel (%p4052) target = $region60
      $region59: #{scr_forward.1} parent=55 // pred_region
        %s4055 = smul.u32 2, %s25
      $region60: #{scr_forward.1} parent=55 // pred_fallthru
        _
    $region56: #{scr_forward.1} parent=5 // pred_fallthru
      _
    %p4056 = scmp.le.s32.totalorder 2, %s15
    // Predicated region
    $region61: #{scr_forward.1} parent=5 // pred_check
      %p4057 = pneg %p4056
    $region62: #{scr_forward.1} parent=5 // pred_check_branch
      %4059 = sbr.rel (%p4057) target = $region64
    $region63: #{scr_forward.1} parent=5 // pred_region
      %s4060 = ssub.s32 %s15, 2
      // Predicated region
      $region65: #{scr_forward.1} parent=63 // pred_check
        %p4061 = pneg %p254
      $region66: #{scr_forward.1} parent=63 // pred_check_branch
        %4063 = sbr.rel (%p4061) target = $region68
      $region67: #{scr_forward.1} parent=63 // pred_region
        %s4064 = smul.u32 2, %s27
        %p4065 = scmp.lt.s32.totalorder %s26, 1
        %s4066 = scalar_select %p4065, %s26, 1
        %p4067 = scmp.lt.s32.totalorder %s4064, 1
        %s4068 = scalar_select %p4067, %s4064, 1
        %s4069 = smul.addr %s4066, 8
        %s4070 = sadd.s32 %s4068, %s4069
        %s4071 = smul.addr %s4070, 8
        %s4072 = scalar_lea.vmem %s9, %s4071
      $region68: #{scr_forward.1} parent=63 // pred_fallthru
        _
    $region64: #{scr_forward.1} parent=5 // pred_fallthru
      _
  $region6: #{scr_forward.1} parent=0 // loop_footer
    %s19 = sadd.s32 1, %s15
  $region7: #{scr_forward.1} parent=0 // loop_footer_branch
    %14 = sbr.rel target = $region3
  $region8: #{scr_forward.1} parent=0 // loop_exit
    _

</llo_original>
